<compile_context>
chip_gen: v5e
topology: v5e:2x2
jax: 0.10.0
libtpu: 0.0.40
codegen_flags: <defaults>
</compile_context>

<pallas_src>
import functools

import jax
import jax.numpy as jnp
from jax.experimental import pallas as pl
from jax.experimental.pallas import tpu as pltpu

BN_EPS = 1e-5
LANE = 128


def _pick_th(h_out, w_out, target_rows):
    """TH output rows per tile: TH | h_out and TH*w_out is a multiple of 128
    (lane-dense output blocks) or the full spatial extent."""
    valid = [th for th in range(1, h_out + 1)
             if h_out % th == 0 and ((th * w_out) % LANE == 0 or th == h_out)]
    under = [th for th in valid if th * w_out <= target_rows]
    if under:
        return max(under)
    return min(valid, key=lambda th: th * w_out)


def _block_vmem_bytes(shape, itemsize=4):
    """Approx VMEM footprint of one block: minor dim padded to 128 lanes,
    second-minor to 8 sublanes."""
    if len(shape) == 1:
        return (-(-shape[0] // LANE) * LANE) * itemsize
    *lead, s2, s1 = shape
    n = 1
    for d in lead:
        n *= d
    return n * (-(-s2 // 8) * 8) * (-(-s1 // LANE) * LANE) * itemsize


def _vmem_limit_bytes(block_shapes, temp_bytes):
    """Derive vmem_limit_bytes from actual block sizes + chip VMEM capacity."""
    try:
        cap = int(pltpu.get_tpu_info().vmem_capacity_bytes)
    except Exception:
        cap = 64 << 20  # conservative fallback = v7x per-core VMEM
    blocks = sum(_block_vmem_bytes(s) for s in block_shapes)
    want = 2 * blocks + temp_bytes + (4 << 20)  # double-buffering + headroom
    return int(min(max(want, 32 << 20), (cap * 3) // 4))


def _make_kernels(kh, kw, stride, th, w_out, c_in, c_out, c_out_pad):
    span = (th - 1) * stride + kh
    rows = th * w_out

    def conv_tile(x_ref, w_ref):
        """ReLU -> conv for the current (TH x W_out) tile -> (rows, c_out_pad) f32."""
        t = pl.program_id(1)
        base = pl.multiple_of(t * (th * stride), th * stride)
        # ReLU applied once, only over the halo window this tile needs.
        xwin = jnp.maximum(x_ref[pl.ds(base, span), :, :], 0.0)
        acc = jnp.zeros((rows, c_out_pad), dtype=jnp.float32)
        # kh*kw accumulated "tap" matmuls (K = c_in each); see module TODO for
        # the merged single-matmul variant.
        for ki in range(kh):
            for kj in range(kw):
                if stride == 1:
                    win = jax.lax.slice(xwin, (ki, kj, 0),
                                        (ki + th, kj + w_out, c_in))
                else:
                    win = jax.lax.slice(
                        xwin, (ki, kj, 0),
                        (ki + (th - 1) * stride + 1,
                         kj + (w_out - 1) * stride + 1, c_in),
                        (stride, stride, 1))
                acc = acc + jnp.dot(win.reshape(rows, c_in),
                                    w_ref[ki * kw + kj],
                                    preferred_element_type=jnp.float32)
        return acc

    def stats_kernel(x_ref, w_ref, stats_ref):
        # Pass 1: per-tile channel (sum, sum_sq) partials; conv tile never hits HBM.
        acc = conv_tile(x_ref, w_ref)
        s = jnp.sum(acc, axis=0, keepdims=True)            # (1, c_out_pad)
        ss = jnp.sum(acc * acc, axis=0, keepdims=True)     # (1, c_out_pad)
        stats_ref[0] = jnp.concatenate([s, ss], axis=0)    # (2, c_out_pad)

    def out_kernel(x_ref, w_ref, scale_ref, shift_ref, out_ref):
        # Pass 2: recompute conv, fuse BN FMA, store channel-major / lane-dense.
        acc = conv_tile(x_ref, w_ref)
        y = acc * scale_ref[...] + shift_ref[...]          # (rows, c_out_pad)
        out_ref[0] = jnp.transpose(y)[:c_out, :]           # (c_out, rows)

    return stats_kernel, out_kernel


@functools.partial(jax.jit, static_argnames=("kernel_size", "stride", "padding"))
def relu_conv_bn(x_nchw, weight_oihw, gamma, beta, *, kernel_size, stride, padding):
    """Forward pass of ReLUConvBN.  x_nchw: (N, C_in, H, W) float32."""
    n, c_in, h, w = x_nchw.shape
    c_out = weight_oihw.shape[0]
    kh = kw = kernel_size
    h_pad, w_pad = h + 2 * padding, w + 2 * padding
    h_out = (h_pad - kh) // stride + 1
    w_out = (w_pad - kw) // stride + 1
    c_out_pad = -(-c_out // LANE) * LANE
    m = n * h_out * w_out

    # ---- glue: NCHW -> padded NHWC (module interface is NCHW) --------------
    x_nhwc = jnp.transpose(x_nchw, (0, 2, 3, 1)).astype(jnp.float32)
    x_p = jnp.pad(x_nhwc, ((0, 0), (padding, padding), (padding, padding), (0, 0)))
    x_flat = x_p.reshape(n * h_pad, w_pad, c_in)

    # weight: (C_out, C_in, kh, kw) -> (kh*kw, C_in, C_out_pad), lanes zero-padded.
    w_taps = jnp.transpose(weight_oihw, (2, 3, 1, 0)).astype(jnp.float32)
    w_taps = w_taps.reshape(kh * kw, c_in, c_out)
    w_taps = jnp.pad(w_taps, ((0, 0), (0, 0), (0, c_out_pad - c_out)))

    # ---- tiling: TH output rows x full W_out per grid step ------------------
    th = _pick_th(h_out, w_out, target_rows=256)   # fills 256-wide MXU on v6e/v7x
    num_t = h_out // th
    rows = th * w_out
    n_tiles = n * num_t

    stats_kernel, out_kernel = _make_kernels(
        kh, kw, stride, th, w_out, c_in, c_out, c_out_pad)

    flops = 2 * m * kh * kw * c_in * c_out_pad
    temp_bytes = 8 * rows * c_out_pad * 4          # acc / y / transpose temporaries

    # ---- pass 1: per-tile channel (sum, sum_sq) partials ---------------------
    stats = pl.pallas_call(
        stats_kernel,
        grid=(n, num_t),
        in_specs=[
            pl.BlockSpec((h_pad, w_pad, c_in), lambda i, t: (i, 0, 0)),
            pl.BlockSpec((kh * kw, c_in, c_out_pad), lambda i, t: (0, 0, 0)),
        ],
        out_specs=pl.BlockSpec((1, 2, c_out_pad),
                               lambda i, t: (i * num_t + t, 0, 0)),
        out_shape=jax.ShapeDtypeStruct((n_tiles, 2, c_out_pad), jnp.float32),
        compiler_params=pltpu.CompilerParams(
            dimension_semantics=("parallel", "parallel"),
            vmem_limit_bytes=_vmem_limit_bytes(
                [(h_pad, w_pad, c_in), (kh * kw, c_in, c_out_pad),
                 (1, 2, c_out_pad)], temp_bytes)),
        cost_estimate=pl.CostEstimate(
            flops=int(flops), transcendentals=0,
            bytes_accessed=int(4 * (x_flat.size + w_taps.size
                                    + n_tiles * 2 * c_out_pad))),
    )(x_flat, w_taps)

    # ---- BatchNorm finalize (train-mode batch statistics, biased variance) ---
    m_f = jnp.float32(m)
    mean = jnp.sum(stats[:, 0, :], axis=0) / m_f
    # TODO(synk): E[x^2]-E[x]^2 can cancel in f32 if |mean| >> std; use a
    # shifted/compensated sum of squares for production-scale activations.
    var = jnp.maximum(jnp.sum(stats[:, 1, :], axis=0) / m_f - mean * mean, 0.0)
    gamma_p = jnp.pad(gamma.astype(jnp.float32), (0, c_out_pad - c_out))
    beta_p = jnp.pad(beta.astype(jnp.float32), (0, c_out_pad - c_out))
    scale_v = gamma_p * jax.lax.rsqrt(var + BN_EPS)   # padded channels -> 0
    shift_v = beta_p - mean * scale_v                 # padded channels -> 0

    # ---- pass 2: conv recompute fused with BN FMA, channel-major output ------
    out_flat = pl.pallas_call(
        out_kernel,
        grid=(n, num_t),
        in_specs=[
            pl.BlockSpec((h_pad, w_pad, c_in), lambda i, t: (i, 0, 0)),
            pl.BlockSpec((kh * kw, c_in, c_out_pad), lambda i, t: (0, 0, 0)),
            pl.BlockSpec((1, c_out_pad), lambda i, t: (0, 0)),
            pl.BlockSpec((1, c_out_pad), lambda i, t: (0, 0)),
        ],
        out_specs=pl.BlockSpec((1, c_out, rows), lambda i, t: (i, 0, t)),
        out_shape=jax.ShapeDtypeStruct((n, c_out, h_out * w_out), jnp.float32),
        compiler_params=pltpu.CompilerParams(
            dimension_semantics=("parallel", "parallel"),
            vmem_limit_bytes=_vmem_limit_bytes(
                [(h_pad, w_pad, c_in), (kh * kw, c_in, c_out_pad),
                 (1, c_out_pad), (1, c_out_pad), (1, c_out, rows)], temp_bytes)),
        cost_estimate=pl.CostEstimate(
            flops=int(flops + 2 * m * c_out_pad), transcendentals=0,
            bytes_accessed=int(4 * (x_flat.size + w_taps.size + 2 * c_out_pad
                                    + n * c_out * h_out * w_out))),
    )(x_flat, w_taps, scale_v.reshape(1, c_out_pad), shift_v.reshape(1, c_out_pad))

    # Pure reshape: data is already in (N, C_out, H_out, W_out) order.
    return out_flat.reshape(n, c_out, h_out, w_out)


def _reference(x_nchw, weight_oihw, gamma, beta, stride, padding):
    """Pure-JAX reference (train-mode BN, biased variance)."""
    relu_x = jnp.maximum(x_nchw, 0.0)
    conv = jax.lax.conv_general_dilated(
        relu_x, weight_oihw,
        window_strides=(stride, stride),
        padding=[(padding, padding), (padding, padding)],
        dimension_numbers=("NCHW", "OIHW", "NCHW"))
    mean = conv.mean(axis=(0, 2, 3), keepdims=True)
    var = conv.var(axis=(0, 2, 3), keepdims=True)
    y_hat = (conv - mean) / jnp.sqrt(var + BN_EPS)
    return y_hat * gamma.reshape(1, -1, 1, 1) + beta.reshape(1, -1, 1, 1)


if __name__ == "__main__":
    # ReLUConvBN(C_in=4, C_out=8, kernel_size=3, stride=1, padding=1, affine=True)
    N, C_IN, H, W = 2, 4, 16, 16
    C_OUT, K, STRIDE, PAD = 8, 3, 1, 1

    key = jax.random.PRNGKey(0)
    k_x, k_w = jax.random.split(key)
    x = jax.random.normal(k_x, (N, C_IN, H, W), dtype=jnp.float32)
    weight = jax.random.normal(k_w, (C_OUT, C_IN, K, K), dtype=jnp.float32) * 0.1
    gamma = jnp.ones((C_OUT,), dtype=jnp.float32)   # BatchNorm2d affine defaults
    beta = jnp.zeros((C_OUT,), dtype=jnp.float32)

    out = relu_conv_bn(x, weight, gamma, beta,
                       kernel_size=K, stride=STRIDE, padding=PAD)
    out = jax.block_until_ready(out)

    ref = _reference(x, weight, gamma, beta, STRIDE, PAD)
    assert out.shape == (N, C_OUT, H, W), out.shape
    err = float(jnp.max(jnp.abs(out - ref)))
    assert err < 1e-4, err
    print("KERNEL_OK")
</pallas_src>

<mosaic_0001>
module attributes {stable_mosaic.version = 11 : i64} {
  func.func @stats_kernel(%arg0: i32, %arg1: i32, %arg2: memref<18x18x4xf32, #tpu.memory_space<vmem>>, %arg3: memref<9x4x128xf32, #tpu.memory_space<vmem>>, %arg4: memref<1x2x128xf32, #tpu.memory_space<vmem>>) attributes {dimension_semantics = [#tpu.dimension_semantics<parallel>, #tpu.dimension_semantics<parallel>], iteration_bounds = array<i64: 2, 1>, scalar_prefetch = 0 : i64, scratch_operands = 0 : i64, tpu.core_type = #tpu.core_type<tc>, window_params = [{transform_indices = @transform_0, window_bounds = array<i64: 18, 18, 4>}, {pipeline_mode = #tpu.pipeline_mode<synchronous>, transform_indices = @transform_1, window_bounds = array<i64: 9, 4, 128>}, {transform_indices = @transform_2, window_bounds = array<i64: 1, 2, 128>}]} {
    %c16_i32 = arith.constant 16 : i32
    %0 = arith.muli %arg1, %c16_i32 : i32
    %1 = tpu.assume_multiple %0, 16 : i32
    %2 = arith.index_cast %1 : i32 to index
    %c0 = arith.constant 0 : index
    %c0_0 = arith.constant 0 : index
    %3 = vector.load %arg2[%2, %c0, %c0_0] : memref<18x18x4xf32, #tpu.memory_space<vmem>>, vector<18x18x4xf32>
    %cst = arith.constant 0.000000e+00 : f32
    %4 = vector.broadcast %cst : f32 to vector<18x18x4xf32>
    %5 = arith.maximumf %3, %4 : vector<18x18x4xf32>
    %cst_1 = arith.constant 0.000000e+00 : f32
    %6 = vector.broadcast %cst_1 : f32 to vector<256x128xf32>
    %7 = vector.extract_strided_slice %5 {offsets = [0, 0, 0], sizes = [16, 16, 4], strides = [1, 1, 1]} : vector<18x18x4xf32> to vector<16x16x4xf32>
    %8 = vector.shape_cast %7 : vector<16x16x4xf32> to vector<256x4xf32>
    %c0_2 = arith.constant 0 : index
    %c0_3 = arith.constant 0 : index
    %c0_4 = arith.constant 0 : index
    %9 = vector.load %arg3[%c0_2, %c0_3, %c0_4] : memref<9x4x128xf32, #tpu.memory_space<vmem>>, vector<1x4x128xf32>
    %10 = vector.shape_cast %9 : vector<1x4x128xf32> to vector<4x128xf32>
    %cst_5 = arith.constant dense<0.000000e+00> : vector<256x128xf32>
    %11 = tpu.matmul %8, %10, %cst_5 {dimension_numbers = #tpu.dot_dimension_numbers<[1], [0], [0], [1], [0, 0, 1, 1], [], []>} : vector<256x4xf32>, vector<4x128xf32>, vector<256x128xf32> -> vector<256x128xf32>
    %12 = arith.addf %6, %11 : vector<256x128xf32>
    %13 = vector.extract_strided_slice %5 {offsets = [0, 1, 0], sizes = [16, 16, 4], strides = [1, 1, 1]} : vector<18x18x4xf32> to vector<16x16x4xf32>
    %14 = vector.shape_cast %13 : vector<16x16x4xf32> to vector<256x4xf32>
    %c1 = arith.constant 1 : index
    %c0_6 = arith.constant 0 : index
    %c0_7 = arith.constant 0 : index
    %15 = vector.load %arg3[%c1, %c0_6, %c0_7] : memref<9x4x128xf32, #tpu.memory_space<vmem>>, vector<1x4x128xf32>
    %16 = vector.shape_cast %15 : vector<1x4x128xf32> to vector<4x128xf32>
    %cst_8 = arith.constant dense<0.000000e+00> : vector<256x128xf32>
    %17 = tpu.matmul %14, %16, %cst_8 {dimension_numbers = #tpu.dot_dimension_numbers<[1], [0], [0], [1], [0, 0, 1, 1], [], []>} : vector<256x4xf32>, vector<4x128xf32>, vector<256x128xf32> -> vector<256x128xf32>
    %18 = arith.addf %12, %17 : vector<256x128xf32>
    %19 = vector.extract_strided_slice %5 {offsets = [0, 2, 0], sizes = [16, 16, 4], strides = [1, 1, 1]} : vector<18x18x4xf32> to vector<16x16x4xf32>
    %20 = vector.shape_cast %19 : vector<16x16x4xf32> to vector<256x4xf32>
    %c2 = arith.constant 2 : index
    %c0_9 = arith.constant 0 : index
    %c0_10 = arith.constant 0 : index
    %21 = vector.load %arg3[%c2, %c0_9, %c0_10] : memref<9x4x128xf32, #tpu.memory_space<vmem>>, vector<1x4x128xf32>
    %22 = vector.shape_cast %21 : vector<1x4x128xf32> to vector<4x128xf32>
    %cst_11 = arith.constant dense<0.000000e+00> : vector<256x128xf32>
    %23 = tpu.matmul %20, %22, %cst_11 {dimension_numbers = #tpu.dot_dimension_numbers<[1], [0], [0], [1], [0, 0, 1, 1], [], []>} : vector<256x4xf32>, vector<4x128xf32>, vector<256x128xf32> -> vector<256x128xf32>
    %24 = arith.addf %18, %23 : vector<256x128xf32>
    %25 = vector.extract_strided_slice %5 {offsets = [1, 0, 0], sizes = [16, 16, 4], strides = [1, 1, 1]} : vector<18x18x4xf32> to vector<16x16x4xf32>
    %26 = vector.shape_cast %25 : vector<16x16x4xf32> to vector<256x4xf32>
    %c3 = arith.constant 3 : index
    %c0_12 = arith.constant 0 : index
    %c0_13 = arith.constant 0 : index
    %27 = vector.load %arg3[%c3, %c0_12, %c0_13] : memref<9x4x128xf32, #tpu.memory_space<vmem>>, vector<1x4x128xf32>
    %28 = vector.shape_cast %27 : vector<1x4x128xf32> to vector<4x128xf32>
    %cst_14 = arith.constant dense<0.000000e+00> : vector<256x128xf32>
    %29 = tpu.matmul %26, %28, %cst_14 {dimension_numbers = #tpu.dot_dimension_numbers<[1], [0], [0], [1], [0, 0, 1, 1], [], []>} : vector<256x4xf32>, vector<4x128xf32>, vector<256x128xf32> -> vector<256x128xf32>
    %30 = arith.addf %24, %29 : vector<256x128xf32>
    %31 = vector.extract_strided_slice %5 {offsets = [1, 1, 0], sizes = [16, 16, 4], strides = [1, 1, 1]} : vector<18x18x4xf32> to vector<16x16x4xf32>
    %32 = vector.shape_cast %31 : vector<16x16x4xf32> to vector<256x4xf32>
    %c4 = arith.constant 4 : index
    %c0_15 = arith.constant 0 : index
    %c0_16 = arith.constant 0 : index
    %33 = vector.load %arg3[%c4, %c0_15, %c0_16] : memref<9x4x128xf32, #tpu.memory_space<vmem>>, vector<1x4x128xf32>
    %34 = vector.shape_cast %33 : vector<1x4x128xf32> to vector<4x128xf32>
    %cst_17 = arith.constant dense<0.000000e+00> : vector<256x128xf32>
    %35 = tpu.matmul %32, %34, %cst_17 {dimension_numbers = #tpu.dot_dimension_numbers<[1], [0], [0], [1], [0, 0, 1, 1], [], []>} : vector<256x4xf32>, vector<4x128xf32>, vector<256x128xf32> -> vector<256x128xf32>
    %36 = arith.addf %30, %35 : vector<256x128xf32>
    %37 = vector.extract_strided_slice %5 {offsets = [1, 2, 0], sizes = [16, 16, 4], strides = [1, 1, 1]} : vector<18x18x4xf32> to vector<16x16x4xf32>
    %38 = vector.shape_cast %37 : vector<16x16x4xf32> to vector<256x4xf32>
    %c5 = arith.constant 5 : index
    %c0_18 = arith.constant 0 : index
    %c0_19 = arith.constant 0 : index
    %39 = vector.load %arg3[%c5, %c0_18, %c0_19] : memref<9x4x128xf32, #tpu.memory_space<vmem>>, vector<1x4x128xf32>
    %40 = vector.shape_cast %39 : vector<1x4x128xf32> to vector<4x128xf32>
    %cst_20 = arith.constant dense<0.000000e+00> : vector<256x128xf32>
    %41 = tpu.matmul %38, %40, %cst_20 {dimension_numbers = #tpu.dot_dimension_numbers<[1], [0], [0], [1], [0, 0, 1, 1], [], []>} : vector<256x4xf32>, vector<4x128xf32>, vector<256x128xf32> -> vector<256x128xf32>
    %42 = arith.addf %36, %41 : vector<256x128xf32>
    %43 = vector.extract_strided_slice %5 {offsets = [2, 0, 0], sizes = [16, 16, 4], strides = [1, 1, 1]} : vector<18x18x4xf32> to vector<16x16x4xf32>
    %44 = vector.shape_cast %43 : vector<16x16x4xf32> to vector<256x4xf32>
    %c6 = arith.constant 6 : index
    %c0_21 = arith.constant 0 : index
    %c0_22 = arith.constant 0 : index
    %45 = vector.load %arg3[%c6, %c0_21, %c0_22] : memref<9x4x128xf32, #tpu.memory_space<vmem>>, vector<1x4x128xf32>
    %46 = vector.shape_cast %45 : vector<1x4x128xf32> to vector<4x128xf32>
    %cst_23 = arith.constant dense<0.000000e+00> : vector<256x128xf32>
    %47 = tpu.matmul %44, %46, %cst_23 {dimension_numbers = #tpu.dot_dimension_numbers<[1], [0], [0], [1], [0, 0, 1, 1], [], []>} : vector<256x4xf32>, vector<4x128xf32>, vector<256x128xf32> -> vector<256x128xf32>
    %48 = arith.addf %42, %47 : vector<256x128xf32>
    %49 = vector.extract_strided_slice %5 {offsets = [2, 1, 0], sizes = [16, 16, 4], strides = [1, 1, 1]} : vector<18x18x4xf32> to vector<16x16x4xf32>
    %50 = vector.shape_cast %49 : vector<16x16x4xf32> to vector<256x4xf32>
    %c7 = arith.constant 7 : index
    %c0_24 = arith.constant 0 : index
    %c0_25 = arith.constant 0 : index
    %51 = vector.load %arg3[%c7, %c0_24, %c0_25] : memref<9x4x128xf32, #tpu.memory_space<vmem>>, vector<1x4x128xf32>
    %52 = vector.shape_cast %51 : vector<1x4x128xf32> to vector<4x128xf32>
    %cst_26 = arith.constant dense<0.000000e+00> : vector<256x128xf32>
    %53 = tpu.matmul %50, %52, %cst_26 {dimension_numbers = #tpu.dot_dimension_numbers<[1], [0], [0], [1], [0, 0, 1, 1], [], []>} : vector<256x4xf32>, vector<4x128xf32>, vector<256x128xf32> -> vector<256x128xf32>
    %54 = arith.addf %48, %53 : vector<256x128xf32>
    %55 = vector.extract_strided_slice %5 {offsets = [2, 2, 0], sizes = [16, 16, 4], strides = [1, 1, 1]} : vector<18x18x4xf32> to vector<16x16x4xf32>
    %56 = vector.shape_cast %55 : vector<16x16x4xf32> to vector<256x4xf32>
    %c8 = arith.constant 8 : index
    %c0_27 = arith.constant 0 : index
    %c0_28 = arith.constant 0 : index
    %57 = vector.load %arg3[%c8, %c0_27, %c0_28] : memref<9x4x128xf32, #tpu.memory_space<vmem>>, vector<1x4x128xf32>
    %58 = vector.shape_cast %57 : vector<1x4x128xf32> to vector<4x128xf32>
    %cst_29 = arith.constant dense<0.000000e+00> : vector<256x128xf32>
    %59 = tpu.matmul %56, %58, %cst_29 {dimension_numbers = #tpu.dot_dimension_numbers<[1], [0], [0], [1], [0, 0, 1, 1], [], []>} : vector<256x4xf32>, vector<4x128xf32>, vector<256x128xf32> -> vector<256x128xf32>
    %60 = arith.addf %54, %59 : vector<256x128xf32>
    %cst_30 = arith.constant dense<0.000000e+00> : vector<128xf32>
    %61 = vector.multi_reduction <add>, %60, %cst_30 [0] : vector<256x128xf32> to vector<128xf32>
    %62 = vector.shape_cast %61 : vector<128xf32> to vector<1x128xf32>
    %63 = arith.mulf %60, %60 : vector<256x128xf32>
    %cst_31 = arith.constant dense<0.000000e+00> : vector<128xf32>
    %64 = vector.multi_reduction <add>, %63, %cst_31 [0] : vector<256x128xf32> to vector<128xf32>
    %65 = vector.shape_cast %64 : vector<128xf32> to vector<1x128xf32>
    %66 = tpu.concatenate %62, %65 in 0 : vector<1x128xf32>, vector<1x128xf32> -> vector<2x128xf32>
    %c0_32 = arith.constant 0 : index
    %c0_33 = arith.constant 0 : index
    %c0_34 = arith.constant 0 : index
    %67 = vector.load %arg4[%c0_32, %c0_33, %c0_34] : memref<1x2x128xf32, #tpu.memory_space<vmem>>, vector<1x2x128xf32>
    %68 = vector.shape_cast %67 : vector<1x2x128xf32> to vector<2x128xf32>
    %69 = vector.shape_cast %66 : vector<2x128xf32> to vector<1x2x128xf32>
    tpu.vector_store %arg4[%c0_32, %c0_33, %c0_34], %69 {strides = array<i32>} : memref<1x2x128xf32, #tpu.memory_space<vmem>>, vector<1x2x128xf32>,
    return
  }
  func.func @transform_0(%arg0: i32, %arg1: i32) -> (i32, i32, i32) {
    %c0_i32 = arith.constant 0 : i32
    %c0_i32_0 = arith.constant 0 : i32
    %c0_i32_1 = arith.constant 0 : i32
    return %arg0, %c0_i32, %c0_i32_0 : i32, i32, i32
  }
  func.func @transform_1(%arg0: i32, %arg1: i32) -> (i32, i32, i32) {
    %c0_i32 = arith.constant 0 : i32
    %c0_i32_0 = arith.constant 0 : i32
    %c0_i32_1 = arith.constant 0 : i32
    %c0_i32_2 = arith.constant 0 : i32
    return %c0_i32, %c0_i32_0, %c0_i32_1 : i32, i32, i32
  }
  func.func @transform_2(%arg0: i32, %arg1: i32) -> (i32, i32, i32) {
    %c1_i32 = arith.constant 1 : i32
    %0 = arith.muli %arg0, %c1_i32 : i32
    %1 = arith.addi %0, %arg1 : i32
    %c0_i32 = arith.constant 0 : i32
    %c0_i32_0 = arith.constant 0 : i32
    %c0_i32_1 = arith.constant 0 : i32
    return %1, %c0_i32, %c0_i32_0 : i32, i32, i32
  }
}

module attributes {stable_mosaic.version = 11 : i64} {
  func.func @out_kernel(%arg0: i32, %arg1: i32, %arg2: memref<18x18x4xf32, #tpu.memory_space<vmem>>, %arg3: memref<9x4x128xf32, #tpu.memory_space<vmem>>, %arg4: memref<1x128xf32, #tpu.memory_space<vmem>>, %arg5: memref<1x128xf32, #tpu.memory_space<vmem>>, %arg6: memref<1x8x256xf32, #tpu.memory_space<vmem>>) attributes {dimension_semantics = [#tpu.dimension_semantics<parallel>, #tpu.dimension_semantics<parallel>], iteration_bounds = array<i64: 2, 1>, scalar_prefetch = 0 : i64, scratch_operands = 0 : i64, tpu.core_type = #tpu.core_type<tc>, window_params = [{transform_indices = @transform_0, window_bounds = array<i64: 18, 18, 4>}, {pipeline_mode = #tpu.pipeline_mode<synchronous>, transform_indices = @transform_1, window_bounds = array<i64: 9, 4, 128>}, {pipeline_mode = #tpu.pipeline_mode<synchronous>, transform_indices = @transform_2, window_bounds = array<i64: 1, 128>}, {pipeline_mode = #tpu.pipeline_mode<synchronous>, transform_indices = @transform_3, window_bounds = array<i64: 1, 128>}, {transform_indices = @transform_4, window_bounds = array<i64: 1, 8, 256>}]} {
    %c16_i32 = arith.constant 16 : i32
    %0 = arith.muli %arg1, %c16_i32 : i32
    %1 = tpu.assume_multiple %0, 16 : i32
    %2 = arith.index_cast %1 : i32 to index
    %c0 = arith.constant 0 : index
    %c0_0 = arith.constant 0 : index
    %3 = vector.load %arg2[%2, %c0, %c0_0] : memref<18x18x4xf32, #tpu.memory_space<vmem>>, vector<18x18x4xf32>
    %cst = arith.constant 0.000000e+00 : f32
    %4 = vector.broadcast %cst : f32 to vector<18x18x4xf32>
    %5 = arith.maximumf %3, %4 : vector<18x18x4xf32>
    %cst_1 = arith.constant 0.000000e+00 : f32
    %6 = vector.broadcast %cst_1 : f32 to vector<256x128xf32>
    %7 = vector.extract_strided_slice %5 {offsets = [0, 0, 0], sizes = [16, 16, 4], strides = [1, 1, 1]} : vector<18x18x4xf32> to vector<16x16x4xf32>
    %8 = vector.shape_cast %7 : vector<16x16x4xf32> to vector<256x4xf32>
    %c0_2 = arith.constant 0 : index
    %c0_3 = arith.constant 0 : index
    %c0_4 = arith.constant 0 : index
    %9 = vector.load %arg3[%c0_2, %c0_3, %c0_4] : memref<9x4x128xf32, #tpu.memory_space<vmem>>, vector<1x4x128xf32>
    %10 = vector.shape_cast %9 : vector<1x4x128xf32> to vector<4x128xf32>
    %cst_5 = arith.constant dense<0.000000e+00> : vector<256x128xf32>
    %11 = tpu.matmul %8, %10, %cst_5 {dimension_numbers = #tpu.dot_dimension_numbers<[1], [0], [0], [1], [0, 0, 1, 1], [], []>} : vector<256x4xf32>, vector<4x128xf32>, vector<256x128xf32> -> vector<256x128xf32>
    %12 = arith.addf %6, %11 : vector<256x128xf32>
    %13 = vector.extract_strided_slice %5 {offsets = [0, 1, 0], sizes = [16, 16, 4], strides = [1, 1, 1]} : vector<18x18x4xf32> to vector<16x16x4xf32>
    %14 = vector.shape_cast %13 : vector<16x16x4xf32> to vector<256x4xf32>
    %c1 = arith.constant 1 : index
    %c0_6 = arith.constant 0 : index
    %c0_7 = arith.constant 0 : index
    %15 = vector.load %arg3[%c1, %c0_6, %c0_7] : memref<9x4x128xf32, #tpu.memory_space<vmem>>, vector<1x4x128xf32>
    %16 = vector.shape_cast %15 : vector<1x4x128xf32> to vector<4x128xf32>
    %cst_8 = arith.constant dense<0.000000e+00> : vector<256x128xf32>
    %17 = tpu.matmul %14, %16, %cst_8 {dimension_numbers = #tpu.dot_dimension_numbers<[1], [0], [0], [1], [0, 0, 1, 1], [], []>} : vector<256x4xf32>, vector<4x128xf32>, vector<256x128xf32> -> vector<256x128xf32>
    %18 = arith.addf %12, %17 : vector<256x128xf32>
    %19 = vector.extract_strided_slice %5 {offsets = [0, 2, 0], sizes = [16, 16, 4], strides = [1, 1, 1]} : vector<18x18x4xf32> to vector<16x16x4xf32>
    %20 = vector.shape_cast %19 : vector<16x16x4xf32> to vector<256x4xf32>
    %c2 = arith.constant 2 : index
    %c0_9 = arith.constant 0 : index
    %c0_10 = arith.constant 0 : index
    %21 = vector.load %arg3[%c2, %c0_9, %c0_10] : memref<9x4x128xf32, #tpu.memory_space<vmem>>, vector<1x4x128xf32>
    %22 = vector.shape_cast %21 : vector<1x4x128xf32> to vector<4x128xf32>
    %cst_11 = arith.constant dense<0.000000e+00> : vector<256x128xf32>
    %23 = tpu.matmul %20, %22, %cst_11 {dimension_numbers = #tpu.dot_dimension_numbers<[1], [0], [0], [1], [0, 0, 1, 1], [], []>} : vector<256x4xf32>, vector<4x128xf32>, vector<256x128xf32> -> vector<256x128xf32>
    %24 = arith.addf %18, %23 : vector<256x128xf32>
    %25 = vector.extract_strided_slice %5 {offsets = [1, 0, 0], sizes = [16, 16, 4], strides = [1, 1, 1]} : vector<18x18x4xf32> to vector<16x16x4xf32>
    %26 = vector.shape_cast %25 : vector<16x16x4xf32> to vector<256x4xf32>
    %c3 = arith.constant 3 : index
    %c0_12 = arith.constant 0 : index
    %c0_13 = arith.constant 0 : index
    %27 = vector.load %arg3[%c3, %c0_12, %c0_13] : memref<9x4x128xf32, #tpu.memory_space<vmem>>, vector<1x4x128xf32>
    %28 = vector.shape_cast %27 : vector<1x4x128xf32> to vector<4x128xf32>
    %cst_14 = arith.constant dense<0.000000e+00> : vector<256x128xf32>
    %29 = tpu.matmul %26, %28, %cst_14 {dimension_numbers = #tpu.dot_dimension_numbers<[1], [0], [0], [1], [0, 0, 1, 1], [], []>} : vector<256x4xf32>, vector<4x128xf32>, vector<256x128xf32> -> vector<256x128xf32>
    %30 = arith.addf %24, %29 : vector<256x128xf32>
    %31 = vector.extract_strided_slice %5 {offsets = [1, 1, 0], sizes = [16, 16, 4], strides = [1, 1, 1]} : vector<18x18x4xf32> to vector<16x16x4xf32>
    %32 = vector.shape_cast %31 : vector<16x16x4xf32> to vector<256x4xf32>
    %c4 = arith.constant 4 : index
    %c0_15 = arith.constant 0 : index
    %c0_16 = arith.constant 0 : index
    %33 = vector.load %arg3[%c4, %c0_15, %c0_16] : memref<9x4x128xf32, #tpu.memory_space<vmem>>, vector<1x4x128xf32>
    %34 = vector.shape_cast %33 : vector<1x4x128xf32> to vector<4x128xf32>
    %cst_17 = arith.constant dense<0.000000e+00> : vector<256x128xf32>
    %35 = tpu.matmul %32, %34, %cst_17 {dimension_numbers = #tpu.dot_dimension_numbers<[1], [0], [0], [1], [0, 0, 1, 1], [], []>} : vector<256x4xf32>, vector<4x128xf32>, vector<256x128xf32> -> vector<256x128xf32>
    %36 = arith.addf %30, %35 : vector<256x128xf32>
    %37 = vector.extract_strided_slice %5 {offsets = [1, 2, 0], sizes = [16, 16, 4], strides = [1, 1, 1]} : vector<18x18x4xf32> to vector<16x16x4xf32>
    %38 = vector.shape_cast %37 : vector<16x16x4xf32> to vector<256x4xf32>
    %c5 = arith.constant 5 : index
    %c0_18 = arith.constant 0 : index
    %c0_19 = arith.constant 0 : index
    %39 = vector.load %arg3[%c5, %c0_18, %c0_19] : memref<9x4x128xf32, #tpu.memory_space<vmem>>, vector<1x4x128xf32>
    %40 = vector.shape_cast %39 : vector<1x4x128xf32> to vector<4x128xf32>
    %cst_20 = arith.constant dense<0.000000e+00> : vector<256x128xf32>
    %41 = tpu.matmul %38, %40, %cst_20 {dimension_numbers = #tpu.dot_dimension_numbers<[1], [0], [0], [1], [0, 0, 1, 1], [], []>} : vector<256x4xf32>, vector<4x128xf32>, vector<256x128xf32> -> vector<256x128xf32>
    %42 = arith.addf %36, %41 : vector<256x128xf32>
    %43 = vector.extract_strided_slice %5 {offsets = [2, 0, 0], sizes = [16, 16, 4], strides = [1, 1, 1]} : vector<18x18x4xf32> to vector<16x16x4xf32>
    %44 = vector.shape_cast %43 : vector<16x16x4xf32> to vector<256x4xf32>
    %c6 = arith.constant 6 : index
    %c0_21 = arith.constant 0 : index
    %c0_22 = arith.constant 0 : index
    %45 = vector.load %arg3[%c6, %c0_21, %c0_22] : memref<9x4x128xf32, #tpu.memory_space<vmem>>, vector<1x4x128xf32>
    %46 = vector.shape_cast %45 : vector<1x4x128xf32> to vector<4x128xf32>
    %cst_23 = arith.constant dense<0.000000e+00> : vector<256x128xf32>
    %47 = tpu.matmul %44, %46, %cst_23 {dimension_numbers = #tpu.dot_dimension_numbers<[1], [0], [0], [1], [0, 0, 1, 1], [], []>} : vector<256x4xf32>, vector<4x128xf32>, vector<256x128xf32> -> vector<256x128xf32>
    %48 = arith.addf %42, %47 : vector<256x128xf32>
    %49 = vector.extract_strided_slice %5 {offsets = [2, 1, 0], sizes = [16, 16, 4], strides = [1, 1, 1]} : vector<18x18x4xf32> to vector<16x16x4xf32>
    %50 = vector.shape_cast %49 : vector<16x16x4xf32> to vector<256x4xf32>
    %c7 = arith.constant 7 : index
    %c0_24 = arith.constant 0 : index
    %c0_25 = arith.constant 0 : index
    %51 = vector.load %arg3[%c7, %c0_24, %c0_25] : memref<9x4x128xf32, #tpu.memory_space<vmem>>, vector<1x4x128xf32>
    %52 = vector.shape_cast %51 : vector<1x4x128xf32> to vector<4x128xf32>
    %cst_26 = arith.constant dense<0.000000e+00> : vector<256x128xf32>
    %53 = tpu.matmul %50, %52, %cst_26 {dimension_numbers = #tpu.dot_dimension_numbers<[1], [0], [0], [1], [0, 0, 1, 1], [], []>} : vector<256x4xf32>, vector<4x128xf32>, vector<256x128xf32> -> vector<256x128xf32>
    %54 = arith.addf %48, %53 : vector<256x128xf32>
    %55 = vector.extract_strided_slice %5 {offsets = [2, 2, 0], sizes = [16, 16, 4], strides = [1, 1, 1]} : vector<18x18x4xf32> to vector<16x16x4xf32>
    %56 = vector.shape_cast %55 : vector<16x16x4xf32> to vector<256x4xf32>
    %c8 = arith.constant 8 : index
    %c0_27 = arith.constant 0 : index
    %c0_28 = arith.constant 0 : index
    %57 = vector.load %arg3[%c8, %c0_27, %c0_28] : memref<9x4x128xf32, #tpu.memory_space<vmem>>, vector<1x4x128xf32>
    %58 = vector.shape_cast %57 : vector<1x4x128xf32> to vector<4x128xf32>
    %cst_29 = arith.constant dense<0.000000e+00> : vector<256x128xf32>
    %59 = tpu.matmul %56, %58, %cst_29 {dimension_numbers = #tpu.dot_dimension_numbers<[1], [0], [0], [1], [0, 0, 1, 1], [], []>} : vector<256x4xf32>, vector<4x128xf32>, vector<256x128xf32> -> vector<256x128xf32>
    %60 = arith.addf %54, %59 : vector<256x128xf32>
    %c0_30 = arith.constant 0 : index
    %c0_31 = arith.constant 0 : index
    %61 = vector.load %arg4[%c0_30, %c0_31] : memref<1x128xf32, #tpu.memory_space<vmem>>, vector<1x128xf32>
    %62 = vector.broadcast %61 : vector<1x128xf32> to vector<256x128xf32>
    %63 = arith.mulf %60, %62 : vector<256x128xf32>
    %c0_32 = arith.constant 0 : index
    %c0_33 = arith.constant 0 : index
    %64 = vector.load %arg5[%c0_32, %c0_33] : memref<1x128xf32, #tpu.memory_space<vmem>>, vector<1x128xf32>
    %65 = vector.broadcast %64 : vector<1x128xf32> to vector<256x128xf32>
    %66 = arith.addf %63, %65 : vector<256x128xf32>
    %67 = tpu.transpose %66, [1, 0] : vector<256x128xf32> -> vector<128x256xf32>
    %68 = vector.extract_strided_slice %67 {offsets = [0, 0], sizes = [8, 256], strides = [1, 1]} : vector<128x256xf32> to vector<8x256xf32>
    %c0_34 = arith.constant 0 : index
    %c0_35 = arith.constant 0 : index
    %c0_36 = arith.constant 0 : index
    %69 = vector.load %arg6[%c0_34, %c0_35, %c0_36] : memref<1x8x256xf32, #tpu.memory_space<vmem>>, vector<1x8x256xf32>
    %70 = vector.shape_cast %69 : vector<1x8x256xf32> to vector<8x256xf32>
    %71 = vector.shape_cast %68 : vector<8x256xf32> to vector<1x8x256xf32>
    tpu.vector_store %arg6[%c0_34, %c0_35, %c0_36], %71 {strides = array<i32>} : memref<1x8x256xf32, #tpu.memory_space<vmem>>, vector<1x8x256xf32>,
    return
  }
  func.func @transform_0(%arg0: i32, %arg1: i32) -> (i32, i32, i32) {
    %c0_i32 = arith.constant 0 : i32
    %c0_i32_0 = arith.constant 0 : i32
    %c0_i32_1 = arith.constant 0 : i32
    return %arg0, %c0_i32, %c0_i32_0 : i32, i32, i32
  }
  func.func @transform_1(%arg0: i32, %arg1: i32) -> (i32, i32, i32) {
    %c0_i32 = arith.constant 0 : i32
    %c0_i32_0 = arith.constant 0 : i32
    %c0_i32_1 = arith.constant 0 : i32
    %c0_i32_2 = arith.constant 0 : i32
    return %c0_i32, %c0_i32_0, %c0_i32_1 : i32, i32, i32
  }
  func.func @transform_2(%arg0: i32, %arg1: i32) -> (i32, i32) {
    %c0_i32 = arith.constant 0 : i32
    %c0_i32_0 = arith.constant 0 : i32
    %c0_i32_1 = arith.constant 0 : i32
    return %c0_i32, %c0_i32_0 : i32, i32
  }
  func.func @transform_3(%arg0: i32, %arg1: i32) -> (i32, i32) {
    %c0_i32 = arith.constant 0 : i32
    %c0_i32_0 = arith.constant 0 : i32
    %c0_i32_1 = arith.constant 0 : i32
    return %c0_i32, %c0_i32_0 : i32, i32
  }
  func.func @transform_4(%arg0: i32, %arg1: i32) -> (i32, i32, i32) {
    %c0_i32 = arith.constant 0 : i32
    %c0_i32_0 = arith.constant 0 : i32
    return %arg0, %c0_i32, %arg1 : i32, i32, i32
  }
}

</mosaic_0001>

<llo_original>
// kernel: relu_conv_bn.2
$region0: #{relu_conv_bn.2}
  #allocation0 [shape = 'u32[]', space=smem, size = 0x4, offset = 0x4, fixed_abs, tag = 'smem constant byte address 0x4 - core index']
  #allocation1 [shape = 'u32[72,128]{1,0:T(1,128)}', space=vmem, size = 0x9000, scoped, tag = 'internal scratch']
  %s0 = inlined_call_operand.vmem [shape: f32[36,18,4], index: 0, kind: input, shape index: {}]
  %s1 = inlined_call_operand.vmem [shape: f32[9,4,128], index: 1, kind: input, shape index: {}]
  %s2 = inlined_call_operand.vmem [shape: f32[2,2,128], index: 2, kind: output, shape index: {}]
  %s3 = sld [smem:[#allocation0]]
  $region41: #{relu_conv_bn.2} parent=0
    _
  %s5 = ssub.s32 1, %s3
  %s6 = scalar_select 0, %s5, %s3
  loop: start=0, step=1, limit=4
  $region2: #{relu_conv_bn.2} parent=0 // loop_pre_header
    _
  $region3: #{relu_conv_bn.2} parent=0 // loop_header
    %s8 = sphi 0, %s12
    %p9 = scmp.ge.s32.totalorder %s8, 4
    %s15 = sphi 0, %s27
    %s16 = sphi 0, %s23
    %s17 = sphi 0, %s15
    %s18 = sphi 0, %s16
    %s19 = sphi 0, %s17
    %s20 = sphi 0, %s18
    %s30 = sphi 0, %s32
    %s33 = sphi 0, %s30
    %s34 = sphi 0, %s33
    %s50 = sphi 0, %s34
    %s54 = sphi 0, %s54
    %s56 = sphi 0, %s54
    %s57 = sphi 0, %s56
    %s71 = sphi 0, %s57
    %s79 = sphi 0, %s81
    %s82 = sphi 0, %s79
    %s83 = sphi 0, %s82
    %s99 = sphi 0, %s83
  $region4: #{relu_conv_bn.2} parent=0 // loop_header_branch
    %11 = sbr.rel (%p9) target = $region8
  $region5: #{relu_conv_bn.2} parent=0 // loop_body
    %s13 = ssub.s32 %s8, 1
    %s14 = ssub.s32 %s8, 2
    %s21 = sadd.s32 1, %s16
    %p22 = scmp.ge.s32.totalorder %s21, 1
    %s23 = scalar_select %p22, 0, %s21
    %s24 = sadd.s32 1, %s15
    %s25 = scalar_select %p22, %s24, %s15
    %p26 = scmp.ge.s32.totalorder %s25, 2
    %s27 = scalar_select %p26, 0, %s25
    %s28 = ssub.s32 %s15, %s27
    %p29 = scmp.eq.s32.totalorder %s28, 0
    %s31 = sadd.s32 %s30, 1
    %s32 = scalar_select %p29, %s30, %s31
    %p35 = pneg %p29
    %p36 = scmp.eq.s32.totalorder %s8, 1
    %p37 = por %p35, %p36
    %p38 = scmp.ne.s32.totalorder %s30, %s33
    %p39 = scmp.eq.s32.totalorder %s8, 0
    %p40 = por %p38, %p39
    %p41 = scmp.ne.s32.totalorder %s30, %s33
    %p42 = scmp.eq.s32.totalorder %s13, 1
    %p43 = por %p41, %p42
    %p44 = scmp.ne.s32.totalorder %s33, %s34
    %p45 = scmp.eq.s32.totalorder %s13, 0
    %p46 = por %p44, %p45
    %p47 = scmp.ne.s32.totalorder %s33, %s34
    %p48 = scmp.eq.s32.totalorder %s14, 1
    %p49 = por %p47, %p48
    %p51 = scmp.ne.s32.totalorder %s34, %s50
    %p52 = scmp.eq.s32.totalorder %s14, 0
    %p53 = por %p51, %p52
    %s55 = sadd.s32 %s54, 1
    %p58 = scmp.eq.s32.totalorder %s8, 1
    %p59 = scmp.ne.s32.totalorder %s54, %s56
    %p60 = scmp.eq.s32.totalorder %s8, 0
    %p61 = por %p59, %p60
    %p62 = scmp.ne.s32.totalorder %s54, %s56
    %p63 = scmp.eq.s32.totalorder %s13, 1
    %p64 = por %p62, %p63
    %p65 = scmp.ne.s32.totalorder %s56, %s57
    %p66 = scmp.eq.s32.totalorder %s13, 0
    %p67 = por %p65, %p66
    %p68 = scmp.ne.s32.totalorder %s56, %s57
    %p69 = scmp.eq.s32.totalorder %s14, 1
    %p70 = por %p68, %p69
    %p72 = scmp.ne.s32.totalorder %s57, %s71
    %p73 = scmp.eq.s32.totalorder %s14, 0
    %p74 = por %p72, %p73
    %s75 = sadd.s32 %s15, %s16
    %s76 = sadd.s32 %s27, %s23
    %s77 = ssub.s32 %s75, %s76
    %p78 = scmp.eq.s32.totalorder %s77, 0
    %s80 = sadd.s32 %s79, 1
    %s81 = scalar_select %p78, %s79, %s80
    %p84 = pneg %p78
    %p85 = scmp.eq.s32.totalorder %s8, 1
    %p86 = por %p84, %p85
    %p87 = scmp.ne.s32.totalorder %s79, %s82
    %p88 = scmp.eq.s32.totalorder %s8, 0
    %p89 = por %p87, %p88
    %p90 = scmp.ne.s32.totalorder %s79, %s82
    %p91 = scmp.eq.s32.totalorder %s13, 1
    %p92 = por %p90, %p91
    %p93 = scmp.ne.s32.totalorder %s82, %s83
    %p94 = scmp.eq.s32.totalorder %s13, 0
    %p95 = por %p93, %p94
    %p96 = scmp.ne.s32.totalorder %s82, %s83
    %p97 = scmp.eq.s32.totalorder %s14, 1
    %p98 = por %p96, %p97
    %p100 = scmp.ne.s32.totalorder %s83, %s99
    %p101 = scmp.eq.s32.totalorder %s14, 0
    %p102 = por %p100, %p101
    %p103 = scmp.le.s32.totalorder 1, %s8
    %p104 = scmp.lt.s32.totalorder %s8, 3
    %p105 = pnand %p103, %p104
    %p106 = pneg %p105
    // Predicated region
    $region9: #{relu_conv_bn.2} parent=5 // pred_check
      _
    $region10: #{relu_conv_bn.2} parent=5 // pred_check_branch
      %108 = sbr.rel (%p105) target = $region12
    $region11: #{relu_conv_bn.2} parent=5 // pred_region
      %s109 = ssub.s32 %s8, 1
      // Predicated region
      $region13: #{relu_conv_bn.2} parent=11 // pred_check
        %p110 = pneg %p67
      $region14: #{relu_conv_bn.2} parent=11 // pred_check_branch
        %112 = sbr.rel (%p110) target = $region16
      $region15: #{relu_conv_bn.2} parent=11 // pred_region
        _
      $region16: #{relu_conv_bn.2} parent=11 // pred_fallthru
        _
    $region12: #{relu_conv_bn.2} parent=5 // pred_fallthru
      _
    %p113 = scmp.lt.s32.totalorder %s8, 2
    // Predicated region
    $region17: #{relu_conv_bn.2} parent=5 // pred_check
      %p114 = pneg %p113
    $region18: #{relu_conv_bn.2} parent=5 // pred_check_branch
      %116 = sbr.rel (%p114) target = $region20
    $region19: #{relu_conv_bn.2} parent=5 // pred_region
      // Predicated region
      $region21: #{relu_conv_bn.2} parent=19 // pred_check
        %p117 = pneg %p40
      $region22: #{relu_conv_bn.2} parent=19 // pred_check_branch
        %119 = sbr.rel (%p117) target = $region24
      $region23: #{relu_conv_bn.2} parent=19 // pred_region
        %s120 = smul.u32 18, %s15
        %p121 = scmp.lt.s32.totalorder %s120, 35
        %s122 = scalar_select %p121, %s120, 35
        %s123 = smul.addr %s122, 3
        %s124 = smul.addr %s123, 8
        %s125 = scalar_lea.vmem %s0, %s124
        %s126 = smul.u32 18, %s15
      $region24: #{relu_conv_bn.2} parent=19 // pred_fallthru
        _
    $region20: #{relu_conv_bn.2} parent=5 // pred_fallthru
      _
    %p127 = scmp.le.s32.totalorder 1, %s8
    %p128 = scmp.lt.s32.totalorder %s8, 3
    %p129 = pnand %p127, %p128
    %p130 = pneg %p129
    // Predicated region
    $region25: #{relu_conv_bn.2} parent=5 // pred_check
      _
    $region26: #{relu_conv_bn.2} parent=5 // pred_check_branch
      %132 = sbr.rel (%p129) target = $region28
    $region27: #{relu_conv_bn.2} parent=5 // pred_region
      %s133 = ssub.s32 %s8, 1
      %s134 = smul.u32 18, %s17
      %p135 = scmp.lt.s32.totalorder %s134, 35
      %s136 = scalar_select %p135, %s134, 35
      %s137 = smul.addr %s136, 3
      %s138 = smul.addr %s137, 8
      %s139 = scalar_lea.vmem %s0, %s138
      %p140 = pneg %p46
      %p141 = pneg %p43
      %p142 = pneg %p67
      %p143 = pneg %p64
      %p144 = pneg %p95
      %p145 = pneg %p92
      %s146 = sadd.s32 %s17, %s18
      %p147 = scmp.lt.s32.totalorder %s146, 1
      %s148 = scalar_select %p147, %s146, 1
      %s149 = smul.addr %s148, 2
      %s150 = scalar_lea.vmem %s2, %s149
      %s151 = smul.u32 18, %s17
      %p152 = scmp.lt.s32.totalorder %s151, 35
      %s153 = scalar_select %p152, %s151, 35
      %s154 = smul.addr %s153, 3
      %s155 = smul.addr %s154, 8
      %s156 = scalar_lea.vmem %s0, %s155
      %s157 = smul.u32 18, %s17
      %s158 = sadd.s32 %s17, %s18
      %p159 = scmp.lt.s32.totalorder %s158, 1
      %s160 = scalar_select %p159, %s158, 1
      %s161 = smul.addr %s160, 2
      %s162 = scalar_lea.vmem %s2, %s161
      %s163 = sadd.s32 %s17, %s18
      %s164 = smul.u32 %s18, 16
      %s165 = smul.u32 %s164, 24
      %s166 = scalar_lea.vmem %s156, %s165
      %v167 = vld [vmem:[%s166] sm:$0xff]
      %v168 = vld [vmem:[%s166 + $0x8] sm:$0xff]
      %v169 = vld [vmem:[%s166 + $0x10] sm:$0x3]
      %v170 = vld [vmem:[%s166 + $0x18] sm:$0xff]
      %v171 = vld [vmem:[%s166 + $0x20] sm:$0xff]
      %v172 = vld [vmem:[%s166 + $0x28] sm:$0x3]
      %v173 = vld [vmem:[%s166 + $0x30] sm:$0xff]
      %v174 = vld [vmem:[%s166 + $0x38] sm:$0xff]
      %v175 = vld [vmem:[%s166 + $0x40] sm:$0x3]
      %v176 = vld [vmem:[%s166 + $0x48] sm:$0xff]
      %v177 = vld [vmem:[%s166 + $0x50] sm:$0xff]
      %v178 = vld [vmem:[%s166 + $0x58] sm:$0x3]
      %v179 = vld [vmem:[%s166 + $0x60] sm:$0xff]
      %v180 = vld [vmem:[%s166 + $0x68] sm:$0xff]
      %v181 = vld [vmem:[%s166 + $0x70] sm:$0x3]
      %v182 = vld [vmem:[%s166 + $0x78] sm:$0xff]
      %v183 = vld [vmem:[%s166 + $0x80] sm:$0xff]
      %v184 = vld [vmem:[%s166 + $0x88] sm:$0x3]
      %v185 = vld [vmem:[%s166 + $0x90] sm:$0xff]
      %v186 = vld [vmem:[%s166 + $0x98] sm:$0xff]
      %v187 = vld [vmem:[%s166 + $0xa0] sm:$0x3]
      %v188 = vld [vmem:[%s166 + $0xa8] sm:$0xff]
      %v189 = vld [vmem:[%s166 + $0xb0] sm:$0xff]
      %v190 = vld [vmem:[%s166 + $0xb8] sm:$0x3]
      %v191 = vld [vmem:[%s166 + $0xc0] sm:$0xff]
      %v192 = vld [vmem:[%s166 + $0xc8] sm:$0xff]
      %v193 = vld [vmem:[%s166 + $0xd0] sm:$0x3]
      %v194 = vld [vmem:[%s166 + $0xd8] sm:$0xff]
      %v195 = vld [vmem:[%s166 + $0xe0] sm:$0xff]
      %v196 = vld [vmem:[%s166 + $0xe8] sm:$0x3]
      %v197 = vld [vmem:[%s166 + $0xf0] sm:$0xff]
      %v198 = vld [vmem:[%s166 + $0xf8] sm:$0xff]
      %v199 = vld [vmem:[%s166 + $0x100] sm:$0x3]
      %v200 = vld [vmem:[%s166 + $0x108] sm:$0xff]
      %v201 = vld [vmem:[%s166 + $0x110] sm:$0xff]
      %v202 = vld [vmem:[%s166 + $0x118] sm:$0x3]
      %v203 = vld [vmem:[%s166 + $0x120] sm:$0xff]
      %v204 = vld [vmem:[%s166 + $0x128] sm:$0xff]
      %v205 = vld [vmem:[%s166 + $0x130] sm:$0x3]
      %v206 = vld [vmem:[%s166 + $0x138] sm:$0xff]
      %v207 = vld [vmem:[%s166 + $0x140] sm:$0xff]
      %v208 = vld [vmem:[%s166 + $0x148] sm:$0x3]
      %v209 = vld [vmem:[%s166 + $0x150] sm:$0xff]
      %v210 = vld [vmem:[%s166 + $0x158] sm:$0xff]
      %v211 = vld [vmem:[%s166 + $0x160] sm:$0x3]
      %v212 = vld [vmem:[%s166 + $0x168] sm:$0xff]
      %v213 = vld [vmem:[%s166 + $0x170] sm:$0xff]
      %v214 = vld [vmem:[%s166 + $0x178] sm:$0x3]
      %v215 = vld [vmem:[%s166 + $0x180] sm:$0xff]
      %v216 = vld [vmem:[%s166 + $0x188] sm:$0xff]
      %v217 = vld [vmem:[%s166 + $0x190] sm:$0x3]
      %v218 = vld [vmem:[%s166 + $0x198] sm:$0xff]
      %v219 = vld [vmem:[%s166 + $0x1a0] sm:$0xff]
      %v220 = vld [vmem:[%s166 + $0x1a8] sm:$0x3]
      %v221 = vmax.f32 %v167, 0.0
      %v222 = vmax.f32 %v168, 0.0
      %v223 = vmax.f32 %v169, 0.0
      %v224 = vmax.f32 %v170, 0.0
      %v225 = vmax.f32 %v171, 0.0
      %v226 = vmax.f32 %v172, 0.0
      %v227 = vmax.f32 %v173, 0.0
      %v228 = vmax.f32 %v174, 0.0
      %v229 = vmax.f32 %v175, 0.0
      %v230 = vmax.f32 %v176, 0.0
      %v231 = vmax.f32 %v177, 0.0
      %v232 = vmax.f32 %v178, 0.0
      %v233 = vmax.f32 %v179, 0.0
      %v234 = vmax.f32 %v180, 0.0
      %v235 = vmax.f32 %v181, 0.0
      %v236 = vmax.f32 %v182, 0.0
      %v237 = vmax.f32 %v183, 0.0
      %v238 = vmax.f32 %v184, 0.0
      %v239 = vmax.f32 %v185, 0.0
      %v240 = vmax.f32 %v186, 0.0
      %v241 = vmax.f32 %v187, 0.0
      %v242 = vmax.f32 %v188, 0.0
      %v243 = vmax.f32 %v189, 0.0
      %v244 = vmax.f32 %v190, 0.0
      %v245 = vmax.f32 %v191, 0.0
      %v246 = vmax.f32 %v192, 0.0
      %v247 = vmax.f32 %v193, 0.0
      %v248 = vmax.f32 %v194, 0.0
      %v249 = vmax.f32 %v195, 0.0
      %v250 = vmax.f32 %v196, 0.0
      %v251 = vmax.f32 %v197, 0.0
      %v252 = vmax.f32 %v198, 0.0
      %v253 = vmax.f32 %v199, 0.0
      %v254 = vmax.f32 %v200, 0.0
      %v255 = vmax.f32 %v201, 0.0
      %v256 = vmax.f32 %v202, 0.0
      %v257 = vmax.f32 %v203, 0.0
      %v258 = vmax.f32 %v204, 0.0
      %v259 = vmax.f32 %v205, 0.0
      %v260 = vmax.f32 %v206, 0.0
      %v261 = vmax.f32 %v207, 0.0
      %v262 = vmax.f32 %v208, 0.0
      %v263 = vmax.f32 %v209, 0.0
      %v264 = vmax.f32 %v210, 0.0
      %v265 = vmax.f32 %v211, 0.0
      %v266 = vmax.f32 %v212, 0.0
      %v267 = vmax.f32 %v213, 0.0
      %v268 = vmax.f32 %v214, 0.0
      %v269 = vmax.f32 %v215, 0.0
      %v270 = vmax.f32 %v216, 0.0
      %v271 = vmax.f32 %v217, 0.0
      %v272 = vmax.f32 %v218, 0.0
      %v273 = vmax.f32 %v219, 0.0
      %v274 = vmax.f32 %v220, 0.0
      %v275 = vld [vmem:[%s1] sm:$0xf]
      %vm324 = vcmask 1046528
      %v325 = vrot.slane %v221, 1
      %v326 = vrot.slane %v222, 1
      %v327 = vsel %vm324, %v325, %v326
      %v328 = vrot.slane %v223, 1
      %v329 = vsel %vm324, %v326, %v328
      %v330 = vrot.slane %v224, 1
      %v331 = vrot.slane %v225, 1
      %v332 = vsel %vm324, %v330, %v331
      %v333 = vrot.slane %v226, 1
      %v334 = vsel %vm324, %v331, %v333
      %v335 = vrot.slane %v227, 1
      %v336 = vrot.slane %v228, 1
      %v337 = vsel %vm324, %v335, %v336
      %v338 = vrot.slane %v229, 1
      %v339 = vsel %vm324, %v336, %v338
      %v340 = vrot.slane %v230, 1
      %v341 = vrot.slane %v231, 1
      %v342 = vsel %vm324, %v340, %v341
      %v343 = vrot.slane %v232, 1
      %v344 = vsel %vm324, %v341, %v343
      %v345 = vrot.slane %v233, 1
      %v346 = vrot.slane %v234, 1
      %v347 = vsel %vm324, %v345, %v346
      %v348 = vrot.slane %v235, 1
      %v349 = vsel %vm324, %v346, %v348
      %v350 = vrot.slane %v236, 1
      %v351 = vrot.slane %v237, 1
      %v352 = vsel %vm324, %v350, %v351
      %v353 = vrot.slane %v238, 1
      %v354 = vsel %vm324, %v351, %v353
      %v355 = vrot.slane %v239, 1
      %v356 = vrot.slane %v240, 1
      %v357 = vsel %vm324, %v355, %v356
      %v358 = vrot.slane %v241, 1
      %v359 = vsel %vm324, %v356, %v358
      %v360 = vrot.slane %v242, 1
      %v361 = vrot.slane %v243, 1
      %v362 = vsel %vm324, %v360, %v361
      %v363 = vrot.slane %v244, 1
      %v364 = vsel %vm324, %v361, %v363
      %v365 = vrot.slane %v245, 1
      %v366 = vrot.slane %v246, 1
      %v367 = vsel %vm324, %v365, %v366
      %v368 = vrot.slane %v247, 1
      %v369 = vsel %vm324, %v366, %v368
      %v370 = vrot.slane %v248, 1
      %v371 = vrot.slane %v249, 1
      %v372 = vsel %vm324, %v370, %v371
      %v373 = vrot.slane %v250, 1
      %v374 = vsel %vm324, %v371, %v373
      %v375 = vrot.slane %v251, 1
      %v376 = vrot.slane %v252, 1
      %v377 = vsel %vm324, %v375, %v376
      %v378 = vrot.slane %v253, 1
      %v379 = vsel %vm324, %v376, %v378
      %v380 = vrot.slane %v254, 1
      %v381 = vrot.slane %v255, 1
      %v382 = vsel %vm324, %v380, %v381
      %v383 = vrot.slane %v256, 1
      %v384 = vsel %vm324, %v381, %v383
      %v385 = vrot.slane %v257, 1
      %v386 = vrot.slane %v258, 1
      %v387 = vsel %vm324, %v385, %v386
      %v388 = vrot.slane %v259, 1
      %v389 = vsel %vm324, %v386, %v388
      %v390 = vrot.slane %v260, 1
      %v391 = vrot.slane %v261, 1
      %v392 = vsel %vm324, %v390, %v391
      %v393 = vrot.slane %v262, 1
      %v394 = vsel %vm324, %v391, %v393
      %v395 = vrot.slane %v263, 1
      %v396 = vrot.slane %v264, 1
      %v397 = vsel %vm324, %v395, %v396
      %v398 = vrot.slane %v265, 1
      %v399 = vsel %vm324, %v396, %v398
      %v400 = vrot.slane %v266, 1
      %v401 = vrot.slane %v267, 1
      %v402 = vsel %vm324, %v400, %v401
      %v403 = vrot.slane %v268, 1
      %v404 = vsel %vm324, %v401, %v403
      %s405 = scalar_lea.vmem %s1, 4
      %v406 = vld [vmem:[%s405] sm:$0xf]
      %vm407 = vcmask 31744
      %v408 = vsel %vm407, %v327, 0
      %v410 = vsel %vm407, %v329, 0
      %v412 = vsel %vm407, %v332, 0
      %v414 = vsel %vm407, %v334, 0
      %v416 = vsel %vm407, %v337, 0
      %v418 = vsel %vm407, %v339, 0
      %v420 = vsel %vm407, %v342, 0
      %v422 = vsel %vm407, %v344, 0
      %v424 = vsel %vm407, %v347, 0
      %v426 = vsel %vm407, %v349, 0
      %v428 = vsel %vm407, %v352, 0
      %v430 = vsel %vm407, %v354, 0
      %v432 = vsel %vm407, %v357, 0
      %v434 = vsel %vm407, %v359, 0
      %v436 = vsel %vm407, %v362, 0
      %v438 = vsel %vm407, %v364, 0
      %v440 = vsel %vm407, %v367, 0
      %v442 = vsel %vm407, %v369, 0
      %v444 = vsel %vm407, %v372, 0
      %v446 = vsel %vm407, %v374, 0
      %v448 = vsel %vm407, %v377, 0
      %v450 = vsel %vm407, %v379, 0
      %v452 = vsel %vm407, %v382, 0
      %v454 = vsel %vm407, %v384, 0
      %v456 = vsel %vm407, %v387, 0
      %v458 = vsel %vm407, %v389, 0
      %v460 = vsel %vm407, %v392, 0
      %v462 = vsel %vm407, %v394, 0
      %v464 = vsel %vm407, %v397, 0
      %v466 = vsel %vm407, %v399, 0
      %v468 = vsel %vm407, %v402, 0
      %v470 = vsel %vm407, %v404, 0
      %vm472 = vcmask 1043456
      %v474 = vsel %vm472, %v406, 0
      %476 = vmatpush.msra.mxu0 0.0
      %477 = vmatpush.msra.mxu0 0.0
      %478 = vmatpush.msra.mxu0 0.0
      %479 = vmatpush.msra.mxu0 0.0
      %480 = vmatpush.msra.mxu0 0.0
      %481 = vmatpush.msra.mxu0 0.0
      %482 = vmatpush.msra.mxu0 0.0
      %483 = vmatpush.msra.mxu0 0.0
      %484 = vmatpush.msra.mxu0 0.0
      %485 = vmatpush.msra.mxu0 0.0
      %486 = vmatpush.msra.mxu0 0.0
      %487 = vmatpush.msra.mxu0 0.0
      %488 = vmatpush.msra.mxu0 0.0
      %489 = vmatpush.msra.mxu0 0.0
      %490 = vmatpush.msra.mxu0 0.0
      %491 = vmatpush.msra.mxu0 %v474
      %492 = vmatmul.f32.gmra.mxu0 %v408
      %v493 = vpop.f32.mrf.mxu0
      %v494 = vadd.f32 0.0, %v493
      %495 = vmatmul.f32.gmra.mxu0 %v410
      %v496 = vpop.f32.mrf.mxu0
      %v497 = vadd.f32 0.0, %v496
      %498 = vmatmul.f32.gmra.mxu0 %v412
      %v499 = vpop.f32.mrf.mxu0
      %v500 = vadd.f32 0.0, %v499
      %501 = vmatmul.f32.gmra.mxu0 %v414
      %v502 = vpop.f32.mrf.mxu0
      %v503 = vadd.f32 0.0, %v502
      %504 = vmatmul.f32.gmra.mxu0 %v416
      %v505 = vpop.f32.mrf.mxu0
      %v506 = vadd.f32 0.0, %v505
      %507 = vmatmul.f32.gmra.mxu0 %v418
      %v508 = vpop.f32.mrf.mxu0
      %v509 = vadd.f32 0.0, %v508
      %510 = vmatmul.f32.gmra.mxu0 %v420
      %v511 = vpop.f32.mrf.mxu0
      %v512 = vadd.f32 0.0, %v511
      %513 = vmatmul.f32.gmra.mxu0 %v422
      %v514 = vpop.f32.mrf.mxu0
      %v515 = vadd.f32 0.0, %v514
      %516 = vmatmul.f32.gmra.mxu0 %v424
      %v517 = vpop.f32.mrf.mxu0
      %v518 = vadd.f32 0.0, %v517
      %519 = vmatmul.f32.gmra.mxu0 %v426
      %v520 = vpop.f32.mrf.mxu0
      %v521 = vadd.f32 0.0, %v520
      %522 = vmatmul.f32.gmra.mxu0 %v428
      %v523 = vpop.f32.mrf.mxu0
      %v524 = vadd.f32 0.0, %v523
      %525 = vmatmul.f32.gmra.mxu0 %v430
      %v526 = vpop.f32.mrf.mxu0
      %v527 = vadd.f32 0.0, %v526
      %528 = vmatmul.f32.gmra.mxu0 %v432
      %v529 = vpop.f32.mrf.mxu0
      %v530 = vadd.f32 0.0, %v529
      %531 = vmatmul.f32.gmra.mxu0 %v434
      %v532 = vpop.f32.mrf.mxu0
      %v533 = vadd.f32 0.0, %v532
      %534 = vmatmul.f32.gmra.mxu0 %v436
      %v535 = vpop.f32.mrf.mxu0
      %v536 = vadd.f32 0.0, %v535
      %537 = vmatmul.f32.gmra.mxu0 %v438
      %v538 = vpop.f32.mrf.mxu0
      %v539 = vadd.f32 0.0, %v538
      %540 = vmatmul.f32.gmra.mxu0 %v440
      %v541 = vpop.f32.mrf.mxu0
      %v542 = vadd.f32 0.0, %v541
      %543 = vmatmul.f32.gmra.mxu0 %v442
      %v544 = vpop.f32.mrf.mxu0
      %v545 = vadd.f32 0.0, %v544
      %546 = vmatmul.f32.gmra.mxu0 %v444
      %v547 = vpop.f32.mrf.mxu0
      %v548 = vadd.f32 0.0, %v547
      %549 = vmatmul.f32.gmra.mxu0 %v446
      %v550 = vpop.f32.mrf.mxu0
      %v551 = vadd.f32 0.0, %v550
      %552 = vmatmul.f32.gmra.mxu0 %v448
      %v553 = vpop.f32.mrf.mxu0
      %v554 = vadd.f32 0.0, %v553
      %555 = vmatmul.f32.gmra.mxu0 %v450
      %v556 = vpop.f32.mrf.mxu0
      %v557 = vadd.f32 0.0, %v556
      %558 = vmatmul.f32.gmra.mxu0 %v452
      %v559 = vpop.f32.mrf.mxu0
      %v560 = vadd.f32 0.0, %v559
      %561 = vmatmul.f32.gmra.mxu0 %v454
      %v562 = vpop.f32.mrf.mxu0
      %v563 = vadd.f32 0.0, %v562
      %564 = vmatmul.f32.gmra.mxu0 %v456
      %v565 = vpop.f32.mrf.mxu0
      %v566 = vadd.f32 0.0, %v565
      %567 = vmatmul.f32.gmra.mxu0 %v458
      %v568 = vpop.f32.mrf.mxu0
      %v569 = vadd.f32 0.0, %v568
      %570 = vmatmul.f32.gmra.mxu0 %v460
      %v571 = vpop.f32.mrf.mxu0
      %v572 = vadd.f32 0.0, %v571
      %573 = vmatmul.f32.gmra.mxu0 %v462
      %v574 = vpop.f32.mrf.mxu0
      %v575 = vadd.f32 0.0, %v574
      %576 = vmatmul.f32.gmra.mxu0 %v464
      %v577 = vpop.f32.mrf.mxu0
      %v578 = vadd.f32 0.0, %v577
      %579 = vmatmul.f32.gmra.mxu0 %v466
      %v580 = vpop.f32.mrf.mxu0
      %v581 = vadd.f32 0.0, %v580
      %582 = vmatmul.f32.gmra.mxu0 %v468
      %v583 = vpop.f32.mrf.mxu0
      %v584 = vadd.f32 0.0, %v583
      %585 = vmatmul.f32.gmra.mxu0 %v470
      %v586 = vpop.f32.mrf.mxu0
      %v587 = vadd.f32 0.0, %v586
      %588 = vdwg.mxu0
      %v589 = vsel %vm407, %v221, 0
      %v591 = vsel %vm407, %v222, 0
      %v593 = vsel %vm407, %v224, 0
      %v595 = vsel %vm407, %v225, 0
      %v597 = vsel %vm407, %v227, 0
      %v599 = vsel %vm407, %v228, 0
      %v601 = vsel %vm407, %v230, 0
      %v603 = vsel %vm407, %v231, 0
      %v605 = vsel %vm407, %v233, 0
      %v607 = vsel %vm407, %v234, 0
      %v609 = vsel %vm407, %v236, 0
      %v611 = vsel %vm407, %v237, 0
      %v613 = vsel %vm407, %v239, 0
      %v615 = vsel %vm407, %v240, 0
      %v617 = vsel %vm407, %v242, 0
      %v619 = vsel %vm407, %v243, 0
      %v621 = vsel %vm407, %v245, 0
      %v623 = vsel %vm407, %v246, 0
      %v625 = vsel %vm407, %v248, 0
      %v627 = vsel %vm407, %v249, 0
      %v629 = vsel %vm407, %v251, 0
      %v631 = vsel %vm407, %v252, 0
      %v633 = vsel %vm407, %v254, 0
      %v635 = vsel %vm407, %v255, 0
      %v637 = vsel %vm407, %v257, 0
      %v639 = vsel %vm407, %v258, 0
      %v641 = vsel %vm407, %v260, 0
      %v643 = vsel %vm407, %v261, 0
      %v645 = vsel %vm407, %v263, 0
      %v647 = vsel %vm407, %v264, 0
      %v649 = vsel %vm407, %v266, 0
      %v651 = vsel %vm407, %v267, 0
      %v654 = vsel %vm472, %v275, 0
      %656 = vmatpush.msra.mxu0 0.0
      %657 = vmatpush.msra.mxu0 0.0
      %658 = vmatpush.msra.mxu0 0.0
      %659 = vmatpush.msra.mxu0 0.0
      %660 = vmatpush.msra.mxu0 0.0
      %661 = vmatpush.msra.mxu0 0.0
      %662 = vmatpush.msra.mxu0 0.0
      %663 = vmatpush.msra.mxu0 0.0
      %664 = vmatpush.msra.mxu0 0.0
      %665 = vmatpush.msra.mxu0 0.0
      %666 = vmatpush.msra.mxu0 0.0
      %667 = vmatpush.msra.mxu0 0.0
      %668 = vmatpush.msra.mxu0 0.0
      %669 = vmatpush.msra.mxu0 0.0
      %670 = vmatpush.msra.mxu0 0.0
      %671 = vmatpush.msra.mxu0 %v654
      %672 = vmatmul.f32.gmra.mxu0 %v589
      %v673 = vpop.f32.mrf.mxu0
      %v674 = vadd.f32 %v494, %v673
      %675 = vmatmul.f32.gmra.mxu0 %v591
      %v676 = vpop.f32.mrf.mxu0
      %v677 = vadd.f32 %v497, %v676
      %678 = vmatmul.f32.gmra.mxu0 %v593
      %v679 = vpop.f32.mrf.mxu0
      %v680 = vadd.f32 %v500, %v679
      %681 = vmatmul.f32.gmra.mxu0 %v595
      %v682 = vpop.f32.mrf.mxu0
      %v683 = vadd.f32 %v503, %v682
      %684 = vmatmul.f32.gmra.mxu0 %v597
      %v685 = vpop.f32.mrf.mxu0
      %v686 = vadd.f32 %v506, %v685
      %687 = vmatmul.f32.gmra.mxu0 %v599
      %v688 = vpop.f32.mrf.mxu0
      %v689 = vadd.f32 %v509, %v688
      %690 = vmatmul.f32.gmra.mxu0 %v601
      %v691 = vpop.f32.mrf.mxu0
      %v692 = vadd.f32 %v512, %v691
      %693 = vmatmul.f32.gmra.mxu0 %v603
      %v694 = vpop.f32.mrf.mxu0
      %v695 = vadd.f32 %v515, %v694
      %696 = vmatmul.f32.gmra.mxu0 %v605
      %v697 = vpop.f32.mrf.mxu0
      %v698 = vadd.f32 %v518, %v697
      %699 = vmatmul.f32.gmra.mxu0 %v607
      %v700 = vpop.f32.mrf.mxu0
      %v701 = vadd.f32 %v521, %v700
      %702 = vmatmul.f32.gmra.mxu0 %v609
      %v703 = vpop.f32.mrf.mxu0
      %v704 = vadd.f32 %v524, %v703
      %705 = vmatmul.f32.gmra.mxu0 %v611
      %v706 = vpop.f32.mrf.mxu0
      %v707 = vadd.f32 %v527, %v706
      %708 = vmatmul.f32.gmra.mxu0 %v613
      %v709 = vpop.f32.mrf.mxu0
      %v710 = vadd.f32 %v530, %v709
      %711 = vmatmul.f32.gmra.mxu0 %v615
      %v712 = vpop.f32.mrf.mxu0
      %v713 = vadd.f32 %v533, %v712
      %714 = vmatmul.f32.gmra.mxu0 %v617
      %v715 = vpop.f32.mrf.mxu0
      %v716 = vadd.f32 %v536, %v715
      %717 = vmatmul.f32.gmra.mxu0 %v619
      %v718 = vpop.f32.mrf.mxu0
      %v719 = vadd.f32 %v539, %v718
      %720 = vmatmul.f32.gmra.mxu0 %v621
      %v721 = vpop.f32.mrf.mxu0
      %v722 = vadd.f32 %v542, %v721
      %723 = vmatmul.f32.gmra.mxu0 %v623
      %v724 = vpop.f32.mrf.mxu0
      %v725 = vadd.f32 %v545, %v724
      %726 = vmatmul.f32.gmra.mxu0 %v625
      %v727 = vpop.f32.mrf.mxu0
      %v728 = vadd.f32 %v548, %v727
      %729 = vmatmul.f32.gmra.mxu0 %v627
      %v730 = vpop.f32.mrf.mxu0
      %v731 = vadd.f32 %v551, %v730
      %732 = vmatmul.f32.gmra.mxu0 %v629
      %v733 = vpop.f32.mrf.mxu0
      %v734 = vadd.f32 %v554, %v733
      %735 = vmatmul.f32.gmra.mxu0 %v631
      %v736 = vpop.f32.mrf.mxu0
      %v737 = vadd.f32 %v557, %v736
      %738 = vmatmul.f32.gmra.mxu0 %v633
      %v739 = vpop.f32.mrf.mxu0
      %v740 = vadd.f32 %v560, %v739
      %741 = vmatmul.f32.gmra.mxu0 %v635
      %v742 = vpop.f32.mrf.mxu0
      %v743 = vadd.f32 %v563, %v742
      %744 = vmatmul.f32.gmra.mxu0 %v637
      %v745 = vpop.f32.mrf.mxu0
      %v746 = vadd.f32 %v566, %v745
      %747 = vmatmul.f32.gmra.mxu0 %v639
      %v748 = vpop.f32.mrf.mxu0
      %v749 = vadd.f32 %v569, %v748
      %750 = vmatmul.f32.gmra.mxu0 %v641
      %v751 = vpop.f32.mrf.mxu0
      %v752 = vadd.f32 %v572, %v751
      %753 = vmatmul.f32.gmra.mxu0 %v643
      %v754 = vpop.f32.mrf.mxu0
      %v755 = vadd.f32 %v575, %v754
      %756 = vmatmul.f32.gmra.mxu0 %v645
      %v757 = vpop.f32.mrf.mxu0
      %v758 = vadd.f32 %v578, %v757
      %759 = vmatmul.f32.gmra.mxu0 %v647
      %v760 = vpop.f32.mrf.mxu0
      %v761 = vadd.f32 %v581, %v760
      %762 = vmatmul.f32.gmra.mxu0 %v649
      %v763 = vpop.f32.mrf.mxu0
      %v764 = vadd.f32 %v584, %v763
      %765 = vmatmul.f32.gmra.mxu0 %v651
      %v766 = vpop.f32.mrf.mxu0
      %v767 = vadd.f32 %v587, %v766
      %768 = vdwg.mxu0
      %vm769 = vcmask 1045504
      %v770 = vrot.slane %v221, 2
      %v771 = vrot.slane %v222, 2
      %v772 = vsel %vm769, %v770, %v771
      %v773 = vrot.slane %v223, 2
      %v774 = vsel %vm769, %v771, %v773
      %v775 = vrot.slane %v224, 2
      %v776 = vrot.slane %v225, 2
      %v777 = vsel %vm769, %v775, %v776
      %v778 = vrot.slane %v226, 2
      %v779 = vsel %vm769, %v776, %v778
      %v780 = vrot.slane %v227, 2
      %v781 = vrot.slane %v228, 2
      %v782 = vsel %vm769, %v780, %v781
      %v783 = vrot.slane %v229, 2
      %v784 = vsel %vm769, %v781, %v783
      %v785 = vrot.slane %v230, 2
      %v786 = vrot.slane %v231, 2
      %v787 = vsel %vm769, %v785, %v786
      %v788 = vrot.slane %v232, 2
      %v789 = vsel %vm769, %v786, %v788
      %v790 = vrot.slane %v233, 2
      %v791 = vrot.slane %v234, 2
      %v792 = vsel %vm769, %v790, %v791
      %v793 = vrot.slane %v235, 2
      %v794 = vsel %vm769, %v791, %v793
      %v795 = vrot.slane %v236, 2
      %v796 = vrot.slane %v237, 2
      %v797 = vsel %vm769, %v795, %v796
      %v798 = vrot.slane %v238, 2
      %v799 = vsel %vm769, %v796, %v798
      %v800 = vrot.slane %v239, 2
      %v801 = vrot.slane %v240, 2
      %v802 = vsel %vm769, %v800, %v801
      %v803 = vrot.slane %v241, 2
      %v804 = vsel %vm769, %v801, %v803
      %v805 = vrot.slane %v242, 2
      %v806 = vrot.slane %v243, 2
      %v807 = vsel %vm769, %v805, %v806
      %v808 = vrot.slane %v244, 2
      %v809 = vsel %vm769, %v806, %v808
      %v810 = vrot.slane %v245, 2
      %v811 = vrot.slane %v246, 2
      %v812 = vsel %vm769, %v810, %v811
      %v813 = vrot.slane %v247, 2
      %v814 = vsel %vm769, %v811, %v813
      %v815 = vrot.slane %v248, 2
      %v816 = vrot.slane %v249, 2
      %v817 = vsel %vm769, %v815, %v816
      %v818 = vrot.slane %v250, 2
      %v819 = vsel %vm769, %v816, %v818
      %v820 = vrot.slane %v251, 2
      %v821 = vrot.slane %v252, 2
      %v822 = vsel %vm769, %v820, %v821
      %v823 = vrot.slane %v253, 2
      %v824 = vsel %vm769, %v821, %v823
      %v825 = vrot.slane %v254, 2
      %v826 = vrot.slane %v255, 2
      %v827 = vsel %vm769, %v825, %v826
      %v828 = vrot.slane %v256, 2
      %v829 = vsel %vm769, %v826, %v828
      %v830 = vrot.slane %v257, 2
      %v831 = vrot.slane %v258, 2
      %v832 = vsel %vm769, %v830, %v831
      %v833 = vrot.slane %v259, 2
      %v834 = vsel %vm769, %v831, %v833
      %v835 = vrot.slane %v260, 2
      %v836 = vrot.slane %v261, 2
      %v837 = vsel %vm769, %v835, %v836
      %v838 = vrot.slane %v262, 2
      %v839 = vsel %vm769, %v836, %v838
      %v840 = vrot.slane %v263, 2
      %v841 = vrot.slane %v264, 2
      %v842 = vsel %vm769, %v840, %v841
      %v843 = vrot.slane %v265, 2
      %v844 = vsel %vm769, %v841, %v843
      %v845 = vrot.slane %v266, 2
      %v846 = vrot.slane %v267, 2
      %v847 = vsel %vm769, %v845, %v846
      %v848 = vrot.slane %v268, 2
      %v849 = vsel %vm769, %v846, %v848
      %s850 = scalar_lea.vmem %s1, 8
      %v851 = vld [vmem:[%s850] sm:$0xf]
      %v852 = vsel %vm407, %v772, 0
      %v854 = vsel %vm407, %v774, 0
      %v856 = vsel %vm407, %v777, 0
      %v858 = vsel %vm407, %v779, 0
      %v860 = vsel %vm407, %v782, 0
      %v862 = vsel %vm407, %v784, 0
      %v864 = vsel %vm407, %v787, 0
      %v866 = vsel %vm407, %v789, 0
      %v868 = vsel %vm407, %v792, 0
      %v870 = vsel %vm407, %v794, 0
      %v872 = vsel %vm407, %v797, 0
      %v874 = vsel %vm407, %v799, 0
      %v876 = vsel %vm407, %v802, 0
      %v878 = vsel %vm407, %v804, 0
      %v880 = vsel %vm407, %v807, 0
      %v882 = vsel %vm407, %v809, 0
      %v884 = vsel %vm407, %v812, 0
      %v886 = vsel %vm407, %v814, 0
      %v888 = vsel %vm407, %v817, 0
      %v890 = vsel %vm407, %v819, 0
      %v892 = vsel %vm407, %v822, 0
      %v894 = vsel %vm407, %v824, 0
      %v896 = vsel %vm407, %v827, 0
      %v898 = vsel %vm407, %v829, 0
      %v900 = vsel %vm407, %v832, 0
      %v902 = vsel %vm407, %v834, 0
      %v904 = vsel %vm407, %v837, 0
      %v906 = vsel %vm407, %v839, 0
      %v908 = vsel %vm407, %v842, 0
      %v910 = vsel %vm407, %v844, 0
      %v912 = vsel %vm407, %v847, 0
      %v914 = vsel %vm407, %v849, 0
      %v917 = vsel %vm472, %v851, 0
      %919 = vmatpush.msra.mxu0 0.0
      %920 = vmatpush.msra.mxu0 0.0
      %921 = vmatpush.msra.mxu0 0.0
      %922 = vmatpush.msra.mxu0 0.0
      %923 = vmatpush.msra.mxu0 0.0
      %924 = vmatpush.msra.mxu0 0.0
      %925 = vmatpush.msra.mxu0 0.0
      %926 = vmatpush.msra.mxu0 0.0
      %927 = vmatpush.msra.mxu0 0.0
      %928 = vmatpush.msra.mxu0 0.0
      %929 = vmatpush.msra.mxu0 0.0
      %930 = vmatpush.msra.mxu0 0.0
      %931 = vmatpush.msra.mxu0 0.0
      %932 = vmatpush.msra.mxu0 0.0
      %933 = vmatpush.msra.mxu0 0.0
      %934 = vmatpush.msra.mxu0 %v917
      %935 = vmatmul.f32.gmra.mxu0 %v852
      %v936 = vpop.f32.mrf.mxu0
      %v937 = vadd.f32 0.0, %v936
      %938 = vmatmul.f32.gmra.mxu0 %v854
      %v939 = vpop.f32.mrf.mxu0
      %v940 = vadd.f32 0.0, %v939
      %941 = vmatmul.f32.gmra.mxu0 %v856
      %v942 = vpop.f32.mrf.mxu0
      %v943 = vadd.f32 0.0, %v942
      %944 = vmatmul.f32.gmra.mxu0 %v858
      %v945 = vpop.f32.mrf.mxu0
      %v946 = vadd.f32 0.0, %v945
      %947 = vmatmul.f32.gmra.mxu0 %v860
      %v948 = vpop.f32.mrf.mxu0
      %v949 = vadd.f32 0.0, %v948
      %950 = vmatmul.f32.gmra.mxu0 %v862
      %v951 = vpop.f32.mrf.mxu0
      %v952 = vadd.f32 0.0, %v951
      %953 = vmatmul.f32.gmra.mxu0 %v864
      %v954 = vpop.f32.mrf.mxu0
      %v955 = vadd.f32 0.0, %v954
      %956 = vmatmul.f32.gmra.mxu0 %v866
      %v957 = vpop.f32.mrf.mxu0
      %v958 = vadd.f32 0.0, %v957
      %959 = vmatmul.f32.gmra.mxu0 %v868
      %v960 = vpop.f32.mrf.mxu0
      %v961 = vadd.f32 0.0, %v960
      %962 = vmatmul.f32.gmra.mxu0 %v870
      %v963 = vpop.f32.mrf.mxu0
      %v964 = vadd.f32 0.0, %v963
      %965 = vmatmul.f32.gmra.mxu0 %v872
      %v966 = vpop.f32.mrf.mxu0
      %v967 = vadd.f32 0.0, %v966
      %968 = vmatmul.f32.gmra.mxu0 %v874
      %v969 = vpop.f32.mrf.mxu0
      %v970 = vadd.f32 0.0, %v969
      %971 = vmatmul.f32.gmra.mxu0 %v876
      %v972 = vpop.f32.mrf.mxu0
      %v973 = vadd.f32 0.0, %v972
      %974 = vmatmul.f32.gmra.mxu0 %v878
      %v975 = vpop.f32.mrf.mxu0
      %v976 = vadd.f32 0.0, %v975
      %977 = vmatmul.f32.gmra.mxu0 %v880
      %v978 = vpop.f32.mrf.mxu0
      %v979 = vadd.f32 0.0, %v978
      %980 = vmatmul.f32.gmra.mxu0 %v882
      %v981 = vpop.f32.mrf.mxu0
      %v982 = vadd.f32 0.0, %v981
      %983 = vmatmul.f32.gmra.mxu0 %v884
      %v984 = vpop.f32.mrf.mxu0
      %v985 = vadd.f32 0.0, %v984
      %986 = vmatmul.f32.gmra.mxu0 %v886
      %v987 = vpop.f32.mrf.mxu0
      %v988 = vadd.f32 0.0, %v987
      %989 = vmatmul.f32.gmra.mxu0 %v888
      %v990 = vpop.f32.mrf.mxu0
      %v991 = vadd.f32 0.0, %v990
      %992 = vmatmul.f32.gmra.mxu0 %v890
      %v993 = vpop.f32.mrf.mxu0
      %v994 = vadd.f32 0.0, %v993
      %995 = vmatmul.f32.gmra.mxu0 %v892
      %v996 = vpop.f32.mrf.mxu0
      %v997 = vadd.f32 0.0, %v996
      %998 = vmatmul.f32.gmra.mxu0 %v894
      %v999 = vpop.f32.mrf.mxu0
      %v1000 = vadd.f32 0.0, %v999
      %1001 = vmatmul.f32.gmra.mxu0 %v896
      %v1002 = vpop.f32.mrf.mxu0
      %v1003 = vadd.f32 0.0, %v1002
      %1004 = vmatmul.f32.gmra.mxu0 %v898
      %v1005 = vpop.f32.mrf.mxu0
      %v1006 = vadd.f32 0.0, %v1005
      %1007 = vmatmul.f32.gmra.mxu0 %v900
      %v1008 = vpop.f32.mrf.mxu0
      %v1009 = vadd.f32 0.0, %v1008
      %1010 = vmatmul.f32.gmra.mxu0 %v902
      %v1011 = vpop.f32.mrf.mxu0
      %v1012 = vadd.f32 0.0, %v1011
      %1013 = vmatmul.f32.gmra.mxu0 %v904
      %v1014 = vpop.f32.mrf.mxu0
      %v1015 = vadd.f32 0.0, %v1014
      %1016 = vmatmul.f32.gmra.mxu0 %v906
      %v1017 = vpop.f32.mrf.mxu0
      %v1018 = vadd.f32 0.0, %v1017
      %1019 = vmatmul.f32.gmra.mxu0 %v908
      %v1020 = vpop.f32.mrf.mxu0
      %v1021 = vadd.f32 0.0, %v1020
      %1022 = vmatmul.f32.gmra.mxu0 %v910
      %v1023 = vpop.f32.mrf.mxu0
      %v1024 = vadd.f32 0.0, %v1023
      %1025 = vmatmul.f32.gmra.mxu0 %v912
      %v1026 = vpop.f32.mrf.mxu0
      %v1027 = vadd.f32 0.0, %v1026
      %1028 = vmatmul.f32.gmra.mxu0 %v914
      %v1029 = vpop.f32.mrf.mxu0
      %v1030 = vadd.f32 0.0, %v1029
      %1031 = vdwg.mxu0
      %v1032 = vadd.f32 %v674, %v937
      %v1033 = vadd.f32 %v677, %v940
      %v1034 = vadd.f32 %v680, %v943
      %v1035 = vadd.f32 %v683, %v946
      %v1036 = vadd.f32 %v686, %v949
      %v1037 = vadd.f32 %v689, %v952
      %v1038 = vadd.f32 %v692, %v955
      %v1039 = vadd.f32 %v695, %v958
      %v1040 = vadd.f32 %v698, %v961
      %v1041 = vadd.f32 %v701, %v964
      %v1042 = vadd.f32 %v704, %v967
      %v1043 = vadd.f32 %v707, %v970
      %v1044 = vadd.f32 %v710, %v973
      %v1045 = vadd.f32 %v713, %v976
      %v1046 = vadd.f32 %v716, %v979
      %v1047 = vadd.f32 %v719, %v982
      %v1048 = vadd.f32 %v722, %v985
      %v1049 = vadd.f32 %v725, %v988
      %v1050 = vadd.f32 %v728, %v991
      %v1051 = vadd.f32 %v731, %v994
      %v1052 = vadd.f32 %v734, %v997
      %v1053 = vadd.f32 %v737, %v1000
      %v1054 = vadd.f32 %v740, %v1003
      %v1055 = vadd.f32 %v743, %v1006
      %v1056 = vadd.f32 %v746, %v1009
      %v1057 = vadd.f32 %v749, %v1012
      %v1058 = vadd.f32 %v752, %v1015
      %v1059 = vadd.f32 %v755, %v1018
      %v1060 = vadd.f32 %v758, %v1021
      %v1061 = vadd.f32 %v761, %v1024
      %v1062 = vadd.f32 %v764, %v1027
      %v1063 = vadd.f32 %v767, %v1030
      %s1064 = scalar_lea.vmem %s1, 12
      %v1065 = vld [vmem:[%s1064] sm:$0xf]
      %v1067 = vsel %vm407, %v269, 0
      %v1070 = vsel %vm407, %v270, 0
      %v1073 = vsel %vm472, %v1065, 0
      %1075 = vmatpush.msra.mxu0 0.0
      %1076 = vmatpush.msra.mxu0 0.0
      %1077 = vmatpush.msra.mxu0 0.0
      %1078 = vmatpush.msra.mxu0 0.0
      %1079 = vmatpush.msra.mxu0 0.0
      %1080 = vmatpush.msra.mxu0 0.0
      %1081 = vmatpush.msra.mxu0 0.0
      %1082 = vmatpush.msra.mxu0 0.0
      %1083 = vmatpush.msra.mxu0 0.0
      %1084 = vmatpush.msra.mxu0 0.0
      %1085 = vmatpush.msra.mxu0 0.0
      %1086 = vmatpush.msra.mxu0 0.0
      %1087 = vmatpush.msra.mxu0 0.0
      %1088 = vmatpush.msra.mxu0 0.0
      %1089 = vmatpush.msra.mxu0 0.0
      %1090 = vmatpush.msra.mxu0 %v1073
      %1091 = vmatmul.f32.gmra.mxu0 %v593
      %v1092 = vpop.f32.mrf.mxu0
      %v1093 = vadd.f32 0.0, %v1092
      %1094 = vmatmul.f32.gmra.mxu0 %v595
      %v1095 = vpop.f32.mrf.mxu0
      %v1096 = vadd.f32 0.0, %v1095
      %1097 = vmatmul.f32.gmra.mxu0 %v597
      %v1098 = vpop.f32.mrf.mxu0
      %v1099 = vadd.f32 0.0, %v1098
      %1100 = vmatmul.f32.gmra.mxu0 %v599
      %v1101 = vpop.f32.mrf.mxu0
      %v1102 = vadd.f32 0.0, %v1101
      %1103 = vmatmul.f32.gmra.mxu0 %v601
      %v1104 = vpop.f32.mrf.mxu0
      %v1105 = vadd.f32 0.0, %v1104
      %1106 = vmatmul.f32.gmra.mxu0 %v603
      %v1107 = vpop.f32.mrf.mxu0
      %v1108 = vadd.f32 0.0, %v1107
      %1109 = vmatmul.f32.gmra.mxu0 %v605
      %v1110 = vpop.f32.mrf.mxu0
      %v1111 = vadd.f32 0.0, %v1110
      %1112 = vmatmul.f32.gmra.mxu0 %v607
      %v1113 = vpop.f32.mrf.mxu0
      %v1114 = vadd.f32 0.0, %v1113
      %1115 = vmatmul.f32.gmra.mxu0 %v609
      %v1116 = vpop.f32.mrf.mxu0
      %v1117 = vadd.f32 0.0, %v1116
      %1118 = vmatmul.f32.gmra.mxu0 %v611
      %v1119 = vpop.f32.mrf.mxu0
      %v1120 = vadd.f32 0.0, %v1119
      %1121 = vmatmul.f32.gmra.mxu0 %v613
      %v1122 = vpop.f32.mrf.mxu0
      %v1123 = vadd.f32 0.0, %v1122
      %1124 = vmatmul.f32.gmra.mxu0 %v615
      %v1125 = vpop.f32.mrf.mxu0
      %v1126 = vadd.f32 0.0, %v1125
      %1127 = vmatmul.f32.gmra.mxu0 %v617
      %v1128 = vpop.f32.mrf.mxu0
      %v1129 = vadd.f32 0.0, %v1128
      %1130 = vmatmul.f32.gmra.mxu0 %v619
      %v1131 = vpop.f32.mrf.mxu0
      %v1132 = vadd.f32 0.0, %v1131
      %1133 = vmatmul.f32.gmra.mxu0 %v621
      %v1134 = vpop.f32.mrf.mxu0
      %v1135 = vadd.f32 0.0, %v1134
      %1136 = vmatmul.f32.gmra.mxu0 %v623
      %v1137 = vpop.f32.mrf.mxu0
      %v1138 = vadd.f32 0.0, %v1137
      %1139 = vmatmul.f32.gmra.mxu0 %v625
      %v1140 = vpop.f32.mrf.mxu0
      %v1141 = vadd.f32 0.0, %v1140
      %1142 = vmatmul.f32.gmra.mxu0 %v627
      %v1143 = vpop.f32.mrf.mxu0
      %v1144 = vadd.f32 0.0, %v1143
      %1145 = vmatmul.f32.gmra.mxu0 %v629
      %v1146 = vpop.f32.mrf.mxu0
      %v1147 = vadd.f32 0.0, %v1146
      %1148 = vmatmul.f32.gmra.mxu0 %v631
      %v1149 = vpop.f32.mrf.mxu0
      %v1150 = vadd.f32 0.0, %v1149
      %1151 = vmatmul.f32.gmra.mxu0 %v633
      %v1152 = vpop.f32.mrf.mxu0
      %v1153 = vadd.f32 0.0, %v1152
      %1154 = vmatmul.f32.gmra.mxu0 %v635
      %v1155 = vpop.f32.mrf.mxu0
      %v1156 = vadd.f32 0.0, %v1155
      %1157 = vmatmul.f32.gmra.mxu0 %v637
      %v1158 = vpop.f32.mrf.mxu0
      %v1159 = vadd.f32 0.0, %v1158
      %1160 = vmatmul.f32.gmra.mxu0 %v639
      %v1161 = vpop.f32.mrf.mxu0
      %v1162 = vadd.f32 0.0, %v1161
      %1163 = vmatmul.f32.gmra.mxu0 %v641
      %v1164 = vpop.f32.mrf.mxu0
      %v1165 = vadd.f32 0.0, %v1164
      %1166 = vmatmul.f32.gmra.mxu0 %v643
      %v1167 = vpop.f32.mrf.mxu0
      %v1168 = vadd.f32 0.0, %v1167
      %1169 = vmatmul.f32.gmra.mxu0 %v645
      %v1170 = vpop.f32.mrf.mxu0
      %v1171 = vadd.f32 0.0, %v1170
      %1172 = vmatmul.f32.gmra.mxu0 %v647
      %v1173 = vpop.f32.mrf.mxu0
      %v1174 = vadd.f32 0.0, %v1173
      %1175 = vmatmul.f32.gmra.mxu0 %v649
      %v1176 = vpop.f32.mrf.mxu0
      %v1177 = vadd.f32 0.0, %v1176
      %1178 = vmatmul.f32.gmra.mxu0 %v651
      %v1179 = vpop.f32.mrf.mxu0
      %v1180 = vadd.f32 0.0, %v1179
      %1181 = vmatmul.f32.gmra.mxu0 %v1067
      %v1182 = vpop.f32.mrf.mxu0
      %v1183 = vadd.f32 0.0, %v1182
      %1184 = vmatmul.f32.gmra.mxu0 %v1070
      %v1185 = vpop.f32.mrf.mxu0
      %v1186 = vadd.f32 0.0, %v1185
      %1187 = vdwg.mxu0
      %v1188 = vadd.f32 %v1032, %v1093
      %v1189 = vadd.f32 %v1033, %v1096
      %v1190 = vadd.f32 %v1034, %v1099
      %v1191 = vadd.f32 %v1035, %v1102
      %v1192 = vadd.f32 %v1036, %v1105
      %v1193 = vadd.f32 %v1037, %v1108
      %v1194 = vadd.f32 %v1038, %v1111
      %v1195 = vadd.f32 %v1039, %v1114
      %v1196 = vadd.f32 %v1040, %v1117
      %v1197 = vadd.f32 %v1041, %v1120
      %v1198 = vadd.f32 %v1042, %v1123
      %v1199 = vadd.f32 %v1043, %v1126
      %v1200 = vadd.f32 %v1044, %v1129
      %v1201 = vadd.f32 %v1045, %v1132
      %v1202 = vadd.f32 %v1046, %v1135
      %v1203 = vadd.f32 %v1047, %v1138
      %v1204 = vadd.f32 %v1048, %v1141
      %v1205 = vadd.f32 %v1049, %v1144
      %v1206 = vadd.f32 %v1050, %v1147
      %v1207 = vadd.f32 %v1051, %v1150
      %v1208 = vadd.f32 %v1052, %v1153
      %v1209 = vadd.f32 %v1053, %v1156
      %v1210 = vadd.f32 %v1054, %v1159
      %v1211 = vadd.f32 %v1055, %v1162
      %v1212 = vadd.f32 %v1056, %v1165
      %v1213 = vadd.f32 %v1057, %v1168
      %v1214 = vadd.f32 %v1058, %v1171
      %v1215 = vadd.f32 %v1059, %v1174
      %v1216 = vadd.f32 %v1060, %v1177
      %v1217 = vadd.f32 %v1061, %v1180
      %v1218 = vadd.f32 %v1062, %v1183
      %v1219 = vadd.f32 %v1063, %v1186
      %v1221 = vrot.slane %v269, 1
      %v1222 = vrot.slane %v270, 1
      %v1223 = vsel %vm324, %v1221, %v1222
      %v1224 = vrot.slane %v271, 1
      %v1225 = vsel %vm324, %v1222, %v1224
      %s1226 = scalar_lea.vmem %s1, 16
      %v1227 = vld [vmem:[%s1226] sm:$0xf]
      %v1228 = vsel %vm407, %v1223, 0
      %v1230 = vsel %vm407, %v1225, 0
      %v1233 = vsel %vm472, %v1227, 0
      %1235 = vmatpush.msra.mxu0 0.0
      %1236 = vmatpush.msra.mxu0 0.0
      %1237 = vmatpush.msra.mxu0 0.0
      %1238 = vmatpush.msra.mxu0 0.0
      %1239 = vmatpush.msra.mxu0 0.0
      %1240 = vmatpush.msra.mxu0 0.0
      %1241 = vmatpush.msra.mxu0 0.0
      %1242 = vmatpush.msra.mxu0 0.0
      %1243 = vmatpush.msra.mxu0 0.0
      %1244 = vmatpush.msra.mxu0 0.0
      %1245 = vmatpush.msra.mxu0 0.0
      %1246 = vmatpush.msra.mxu0 0.0
      %1247 = vmatpush.msra.mxu0 0.0
      %1248 = vmatpush.msra.mxu0 0.0
      %1249 = vmatpush.msra.mxu0 0.0
      %1250 = vmatpush.msra.mxu0 %v1233
      %1251 = vmatmul.f32.gmra.mxu0 %v412
      %v1252 = vpop.f32.mrf.mxu0
      %v1253 = vadd.f32 0.0, %v1252
      %1254 = vmatmul.f32.gmra.mxu0 %v414
      %v1255 = vpop.f32.mrf.mxu0
      %v1256 = vadd.f32 0.0, %v1255
      %1257 = vmatmul.f32.gmra.mxu0 %v416
      %v1258 = vpop.f32.mrf.mxu0
      %v1259 = vadd.f32 0.0, %v1258
      %1260 = vmatmul.f32.gmra.mxu0 %v418
      %v1261 = vpop.f32.mrf.mxu0
      %v1262 = vadd.f32 0.0, %v1261
      %1263 = vmatmul.f32.gmra.mxu0 %v420
      %v1264 = vpop.f32.mrf.mxu0
      %v1265 = vadd.f32 0.0, %v1264
      %1266 = vmatmul.f32.gmra.mxu0 %v422
      %v1267 = vpop.f32.mrf.mxu0
      %v1268 = vadd.f32 0.0, %v1267
      %1269 = vmatmul.f32.gmra.mxu0 %v424
      %v1270 = vpop.f32.mrf.mxu0
      %v1271 = vadd.f32 0.0, %v1270
      %1272 = vmatmul.f32.gmra.mxu0 %v426
      %v1273 = vpop.f32.mrf.mxu0
      %v1274 = vadd.f32 0.0, %v1273
      %1275 = vmatmul.f32.gmra.mxu0 %v428
      %v1276 = vpop.f32.mrf.mxu0
      %v1277 = vadd.f32 0.0, %v1276
      %1278 = vmatmul.f32.gmra.mxu0 %v430
      %v1279 = vpop.f32.mrf.mxu0
      %v1280 = vadd.f32 0.0, %v1279
      %1281 = vmatmul.f32.gmra.mxu0 %v432
      %v1282 = vpop.f32.mrf.mxu0
      %v1283 = vadd.f32 0.0, %v1282
      %1284 = vmatmul.f32.gmra.mxu0 %v434
      %v1285 = vpop.f32.mrf.mxu0
      %v1286 = vadd.f32 0.0, %v1285
      %1287 = vmatmul.f32.gmra.mxu0 %v436
      %v1288 = vpop.f32.mrf.mxu0
      %v1289 = vadd.f32 0.0, %v1288
      %1290 = vmatmul.f32.gmra.mxu0 %v438
      %v1291 = vpop.f32.mrf.mxu0
      %v1292 = vadd.f32 0.0, %v1291
      %1293 = vmatmul.f32.gmra.mxu0 %v440
      %v1294 = vpop.f32.mrf.mxu0
      %v1295 = vadd.f32 0.0, %v1294
      %1296 = vmatmul.f32.gmra.mxu0 %v442
      %v1297 = vpop.f32.mrf.mxu0
      %v1298 = vadd.f32 0.0, %v1297
      %1299 = vmatmul.f32.gmra.mxu0 %v444
      %v1300 = vpop.f32.mrf.mxu0
      %v1301 = vadd.f32 0.0, %v1300
      %1302 = vmatmul.f32.gmra.mxu0 %v446
      %v1303 = vpop.f32.mrf.mxu0
      %v1304 = vadd.f32 0.0, %v1303
      %1305 = vmatmul.f32.gmra.mxu0 %v448
      %v1306 = vpop.f32.mrf.mxu0
      %v1307 = vadd.f32 0.0, %v1306
      %1308 = vmatmul.f32.gmra.mxu0 %v450
      %v1309 = vpop.f32.mrf.mxu0
      %v1310 = vadd.f32 0.0, %v1309
      %1311 = vmatmul.f32.gmra.mxu0 %v452
      %v1312 = vpop.f32.mrf.mxu0
      %v1313 = vadd.f32 0.0, %v1312
      %1314 = vmatmul.f32.gmra.mxu0 %v454
      %v1315 = vpop.f32.mrf.mxu0
      %v1316 = vadd.f32 0.0, %v1315
      %1317 = vmatmul.f32.gmra.mxu0 %v456
      %v1318 = vpop.f32.mrf.mxu0
      %v1319 = vadd.f32 0.0, %v1318
      %1320 = vmatmul.f32.gmra.mxu0 %v458
      %v1321 = vpop.f32.mrf.mxu0
      %v1322 = vadd.f32 0.0, %v1321
      %1323 = vmatmul.f32.gmra.mxu0 %v460
      %v1324 = vpop.f32.mrf.mxu0
      %v1325 = vadd.f32 0.0, %v1324
      %1326 = vmatmul.f32.gmra.mxu0 %v462
      %v1327 = vpop.f32.mrf.mxu0
      %v1328 = vadd.f32 0.0, %v1327
      %1329 = vmatmul.f32.gmra.mxu0 %v464
      %v1330 = vpop.f32.mrf.mxu0
      %v1331 = vadd.f32 0.0, %v1330
      %1332 = vmatmul.f32.gmra.mxu0 %v466
      %v1333 = vpop.f32.mrf.mxu0
      %v1334 = vadd.f32 0.0, %v1333
      %1335 = vmatmul.f32.gmra.mxu0 %v468
      %v1336 = vpop.f32.mrf.mxu0
      %v1337 = vadd.f32 0.0, %v1336
      %1338 = vmatmul.f32.gmra.mxu0 %v470
      %v1339 = vpop.f32.mrf.mxu0
      %v1340 = vadd.f32 0.0, %v1339
      %1341 = vmatmul.f32.gmra.mxu0 %v1228
      %v1342 = vpop.f32.mrf.mxu0
      %v1343 = vadd.f32 0.0, %v1342
      %1344 = vmatmul.f32.gmra.mxu0 %v1230
      %v1345 = vpop.f32.mrf.mxu0
      %v1346 = vadd.f32 0.0, %v1345
      %1347 = vdwg.mxu0
      %v1348 = vadd.f32 %v1188, %v1253
      %v1349 = vadd.f32 %v1189, %v1256
      %v1350 = vadd.f32 %v1190, %v1259
      %v1351 = vadd.f32 %v1191, %v1262
      %v1352 = vadd.f32 %v1192, %v1265
      %v1353 = vadd.f32 %v1193, %v1268
      %v1354 = vadd.f32 %v1194, %v1271
      %v1355 = vadd.f32 %v1195, %v1274
      %v1356 = vadd.f32 %v1196, %v1277
      %v1357 = vadd.f32 %v1197, %v1280
      %v1358 = vadd.f32 %v1198, %v1283
      %v1359 = vadd.f32 %v1199, %v1286
      %v1360 = vadd.f32 %v1200, %v1289
      %v1361 = vadd.f32 %v1201, %v1292
      %v1362 = vadd.f32 %v1202, %v1295
      %v1363 = vadd.f32 %v1203, %v1298
      %v1364 = vadd.f32 %v1204, %v1301
      %v1365 = vadd.f32 %v1205, %v1304
      %v1366 = vadd.f32 %v1206, %v1307
      %v1367 = vadd.f32 %v1207, %v1310
      %v1368 = vadd.f32 %v1208, %v1313
      %v1369 = vadd.f32 %v1209, %v1316
      %v1370 = vadd.f32 %v1210, %v1319
      %v1371 = vadd.f32 %v1211, %v1322
      %v1372 = vadd.f32 %v1212, %v1325
      %v1373 = vadd.f32 %v1213, %v1328
      %v1374 = vadd.f32 %v1214, %v1331
      %v1375 = vadd.f32 %v1215, %v1334
      %v1376 = vadd.f32 %v1216, %v1337
      %v1377 = vadd.f32 %v1217, %v1340
      %v1378 = vadd.f32 %v1218, %v1343
      %v1379 = vadd.f32 %v1219, %v1346
      %v1380 = vrot.slane %v269, 2
      %v1381 = vrot.slane %v270, 2
      %v1382 = vsel %vm769, %v1380, %v1381
      %v1383 = vrot.slane %v271, 2
      %v1384 = vsel %vm769, %v1381, %v1383
      %s1385 = scalar_lea.vmem %s1, 20
      %v1386 = vld [vmem:[%s1385] sm:$0xf]
      %v1387 = vsel %vm407, %v1382, 0
      %v1389 = vsel %vm407, %v1384, 0
      %v1392 = vsel %vm472, %v1386, 0
      %1394 = vmatpush.msra.mxu0 0.0
      %1395 = vmatpush.msra.mxu0 0.0
      %1396 = vmatpush.msra.mxu0 0.0
      %1397 = vmatpush.msra.mxu0 0.0
      %1398 = vmatpush.msra.mxu0 0.0
      %1399 = vmatpush.msra.mxu0 0.0
      %1400 = vmatpush.msra.mxu0 0.0
      %1401 = vmatpush.msra.mxu0 0.0
      %1402 = vmatpush.msra.mxu0 0.0
      %1403 = vmatpush.msra.mxu0 0.0
      %1404 = vmatpush.msra.mxu0 0.0
      %1405 = vmatpush.msra.mxu0 0.0
      %1406 = vmatpush.msra.mxu0 0.0
      %1407 = vmatpush.msra.mxu0 0.0
      %1408 = vmatpush.msra.mxu0 0.0
      %1409 = vmatpush.msra.mxu0 %v1392
      %1410 = vmatmul.f32.gmra.mxu0 %v856
      %v1411 = vpop.f32.mrf.mxu0
      %v1412 = vadd.f32 0.0, %v1411
      %1413 = vmatmul.f32.gmra.mxu0 %v858
      %v1414 = vpop.f32.mrf.mxu0
      %v1415 = vadd.f32 0.0, %v1414
      %1416 = vmatmul.f32.gmra.mxu0 %v860
      %v1417 = vpop.f32.mrf.mxu0
      %v1418 = vadd.f32 0.0, %v1417
      %1419 = vmatmul.f32.gmra.mxu0 %v862
      %v1420 = vpop.f32.mrf.mxu0
      %v1421 = vadd.f32 0.0, %v1420
      %1422 = vmatmul.f32.gmra.mxu0 %v864
      %v1423 = vpop.f32.mrf.mxu0
      %v1424 = vadd.f32 0.0, %v1423
      %1425 = vmatmul.f32.gmra.mxu0 %v866
      %v1426 = vpop.f32.mrf.mxu0
      %v1427 = vadd.f32 0.0, %v1426
      %1428 = vmatmul.f32.gmra.mxu0 %v868
      %v1429 = vpop.f32.mrf.mxu0
      %v1430 = vadd.f32 0.0, %v1429
      %1431 = vmatmul.f32.gmra.mxu0 %v870
      %v1432 = vpop.f32.mrf.mxu0
      %v1433 = vadd.f32 0.0, %v1432
      %1434 = vmatmul.f32.gmra.mxu0 %v872
      %v1435 = vpop.f32.mrf.mxu0
      %v1436 = vadd.f32 0.0, %v1435
      %1437 = vmatmul.f32.gmra.mxu0 %v874
      %v1438 = vpop.f32.mrf.mxu0
      %v1439 = vadd.f32 0.0, %v1438
      %1440 = vmatmul.f32.gmra.mxu0 %v876
      %v1441 = vpop.f32.mrf.mxu0
      %v1442 = vadd.f32 0.0, %v1441
      %1443 = vmatmul.f32.gmra.mxu0 %v878
      %v1444 = vpop.f32.mrf.mxu0
      %v1445 = vadd.f32 0.0, %v1444
      %1446 = vmatmul.f32.gmra.mxu0 %v880
      %v1447 = vpop.f32.mrf.mxu0
      %v1448 = vadd.f32 0.0, %v1447
      %1449 = vmatmul.f32.gmra.mxu0 %v882
      %v1450 = vpop.f32.mrf.mxu0
      %v1451 = vadd.f32 0.0, %v1450
      %1452 = vmatmul.f32.gmra.mxu0 %v884
      %v1453 = vpop.f32.mrf.mxu0
      %v1454 = vadd.f32 0.0, %v1453
      %1455 = vmatmul.f32.gmra.mxu0 %v886
      %v1456 = vpop.f32.mrf.mxu0
      %v1457 = vadd.f32 0.0, %v1456
      %1458 = vmatmul.f32.gmra.mxu0 %v888
      %v1459 = vpop.f32.mrf.mxu0
      %v1460 = vadd.f32 0.0, %v1459
      %1461 = vmatmul.f32.gmra.mxu0 %v890
      %v1462 = vpop.f32.mrf.mxu0
      %v1463 = vadd.f32 0.0, %v1462
      %1464 = vmatmul.f32.gmra.mxu0 %v892
      %v1465 = vpop.f32.mrf.mxu0
      %v1466 = vadd.f32 0.0, %v1465
      %1467 = vmatmul.f32.gmra.mxu0 %v894
      %v1468 = vpop.f32.mrf.mxu0
      %v1469 = vadd.f32 0.0, %v1468
      %1470 = vmatmul.f32.gmra.mxu0 %v896
      %v1471 = vpop.f32.mrf.mxu0
      %v1472 = vadd.f32 0.0, %v1471
      %1473 = vmatmul.f32.gmra.mxu0 %v898
      %v1474 = vpop.f32.mrf.mxu0
      %v1475 = vadd.f32 0.0, %v1474
      %1476 = vmatmul.f32.gmra.mxu0 %v900
      %v1477 = vpop.f32.mrf.mxu0
      %v1478 = vadd.f32 0.0, %v1477
      %1479 = vmatmul.f32.gmra.mxu0 %v902
      %v1480 = vpop.f32.mrf.mxu0
      %v1481 = vadd.f32 0.0, %v1480
      %1482 = vmatmul.f32.gmra.mxu0 %v904
      %v1483 = vpop.f32.mrf.mxu0
      %v1484 = vadd.f32 0.0, %v1483
      %1485 = vmatmul.f32.gmra.mxu0 %v906
      %v1486 = vpop.f32.mrf.mxu0
      %v1487 = vadd.f32 0.0, %v1486
      %1488 = vmatmul.f32.gmra.mxu0 %v908
      %v1489 = vpop.f32.mrf.mxu0
      %v1490 = vadd.f32 0.0, %v1489
      %1491 = vmatmul.f32.gmra.mxu0 %v910
      %v1492 = vpop.f32.mrf.mxu0
      %v1493 = vadd.f32 0.0, %v1492
      %1494 = vmatmul.f32.gmra.mxu0 %v912
      %v1495 = vpop.f32.mrf.mxu0
      %v1496 = vadd.f32 0.0, %v1495
      %1497 = vmatmul.f32.gmra.mxu0 %v914
      %v1498 = vpop.f32.mrf.mxu0
      %v1499 = vadd.f32 0.0, %v1498
      %1500 = vmatmul.f32.gmra.mxu0 %v1387
      %v1501 = vpop.f32.mrf.mxu0
      %v1502 = vadd.f32 0.0, %v1501
      %1503 = vmatmul.f32.gmra.mxu0 %v1389
      %v1504 = vpop.f32.mrf.mxu0
      %v1505 = vadd.f32 0.0, %v1504
      %1506 = vdwg.mxu0
      %v1507 = vadd.f32 %v1348, %v1412
      %v1508 = vadd.f32 %v1349, %v1415
      %v1509 = vadd.f32 %v1350, %v1418
      %v1510 = vadd.f32 %v1351, %v1421
      %v1511 = vadd.f32 %v1352, %v1424
      %v1512 = vadd.f32 %v1353, %v1427
      %v1513 = vadd.f32 %v1354, %v1430
      %v1514 = vadd.f32 %v1355, %v1433
      %v1515 = vadd.f32 %v1356, %v1436
      %v1516 = vadd.f32 %v1357, %v1439
      %v1517 = vadd.f32 %v1358, %v1442
      %v1518 = vadd.f32 %v1359, %v1445
      %v1519 = vadd.f32 %v1360, %v1448
      %v1520 = vadd.f32 %v1361, %v1451
      %v1521 = vadd.f32 %v1362, %v1454
      %v1522 = vadd.f32 %v1363, %v1457
      %v1523 = vadd.f32 %v1364, %v1460
      %v1524 = vadd.f32 %v1365, %v1463
      %v1525 = vadd.f32 %v1366, %v1466
      %v1526 = vadd.f32 %v1367, %v1469
      %v1527 = vadd.f32 %v1368, %v1472
      %v1528 = vadd.f32 %v1369, %v1475
      %v1529 = vadd.f32 %v1370, %v1478
      %v1530 = vadd.f32 %v1371, %v1481
      %v1531 = vadd.f32 %v1372, %v1484
      %v1532 = vadd.f32 %v1373, %v1487
      %v1533 = vadd.f32 %v1374, %v1490
      %v1534 = vadd.f32 %v1375, %v1493
      %v1535 = vadd.f32 %v1376, %v1496
      %v1536 = vadd.f32 %v1377, %v1499
      %v1537 = vadd.f32 %v1378, %v1502
      %v1538 = vadd.f32 %v1379, %v1505
      %s1539 = scalar_lea.vmem %s1, 24
      %v1540 = vld [vmem:[%s1539] sm:$0xf]
      %v1542 = vsel %vm407, %v272, 0
      %v1545 = vsel %vm407, %v273, 0
      %v1548 = vsel %vm472, %v1540, 0
      %1550 = vmatpush.msra.mxu0 0.0
      %1551 = vmatpush.msra.mxu0 0.0
      %1552 = vmatpush.msra.mxu0 0.0
      %1553 = vmatpush.msra.mxu0 0.0
      %1554 = vmatpush.msra.mxu0 0.0
      %1555 = vmatpush.msra.mxu0 0.0
      %1556 = vmatpush.msra.mxu0 0.0
      %1557 = vmatpush.msra.mxu0 0.0
      %1558 = vmatpush.msra.mxu0 0.0
      %1559 = vmatpush.msra.mxu0 0.0
      %1560 = vmatpush.msra.mxu0 0.0
      %1561 = vmatpush.msra.mxu0 0.0
      %1562 = vmatpush.msra.mxu0 0.0
      %1563 = vmatpush.msra.mxu0 0.0
      %1564 = vmatpush.msra.mxu0 0.0
      %1565 = vmatpush.msra.mxu0 %v1548
      %1566 = vmatmul.f32.gmra.mxu0 %v597
      %v1567 = vpop.f32.mrf.mxu0
      %v1568 = vadd.f32 0.0, %v1567
      %1569 = vmatmul.f32.gmra.mxu0 %v599
      %v1570 = vpop.f32.mrf.mxu0
      %v1571 = vadd.f32 0.0, %v1570
      %1572 = vmatmul.f32.gmra.mxu0 %v601
      %v1573 = vpop.f32.mrf.mxu0
      %v1574 = vadd.f32 0.0, %v1573
      %1575 = vmatmul.f32.gmra.mxu0 %v603
      %v1576 = vpop.f32.mrf.mxu0
      %v1577 = vadd.f32 0.0, %v1576
      %1578 = vmatmul.f32.gmra.mxu0 %v605
      %v1579 = vpop.f32.mrf.mxu0
      %v1580 = vadd.f32 0.0, %v1579
      %1581 = vmatmul.f32.gmra.mxu0 %v607
      %v1582 = vpop.f32.mrf.mxu0
      %v1583 = vadd.f32 0.0, %v1582
      %1584 = vmatmul.f32.gmra.mxu0 %v609
      %v1585 = vpop.f32.mrf.mxu0
      %v1586 = vadd.f32 0.0, %v1585
      %1587 = vmatmul.f32.gmra.mxu0 %v611
      %v1588 = vpop.f32.mrf.mxu0
      %v1589 = vadd.f32 0.0, %v1588
      %1590 = vmatmul.f32.gmra.mxu0 %v613
      %v1591 = vpop.f32.mrf.mxu0
      %v1592 = vadd.f32 0.0, %v1591
      %1593 = vmatmul.f32.gmra.mxu0 %v615
      %v1594 = vpop.f32.mrf.mxu0
      %v1595 = vadd.f32 0.0, %v1594
      %1596 = vmatmul.f32.gmra.mxu0 %v617
      %v1597 = vpop.f32.mrf.mxu0
      %v1598 = vadd.f32 0.0, %v1597
      %1599 = vmatmul.f32.gmra.mxu0 %v619
      %v1600 = vpop.f32.mrf.mxu0
      %v1601 = vadd.f32 0.0, %v1600
      %1602 = vmatmul.f32.gmra.mxu0 %v621
      %v1603 = vpop.f32.mrf.mxu0
      %v1604 = vadd.f32 0.0, %v1603
      %1605 = vmatmul.f32.gmra.mxu0 %v623
      %v1606 = vpop.f32.mrf.mxu0
      %v1607 = vadd.f32 0.0, %v1606
      %1608 = vmatmul.f32.gmra.mxu0 %v625
      %v1609 = vpop.f32.mrf.mxu0
      %v1610 = vadd.f32 0.0, %v1609
      %1611 = vmatmul.f32.gmra.mxu0 %v627
      %v1612 = vpop.f32.mrf.mxu0
      %v1613 = vadd.f32 0.0, %v1612
      %1614 = vmatmul.f32.gmra.mxu0 %v629
      %v1615 = vpop.f32.mrf.mxu0
      %v1616 = vadd.f32 0.0, %v1615
      %1617 = vmatmul.f32.gmra.mxu0 %v631
      %v1618 = vpop.f32.mrf.mxu0
      %v1619 = vadd.f32 0.0, %v1618
      %1620 = vmatmul.f32.gmra.mxu0 %v633
      %v1621 = vpop.f32.mrf.mxu0
      %v1622 = vadd.f32 0.0, %v1621
      %1623 = vmatmul.f32.gmra.mxu0 %v635
      %v1624 = vpop.f32.mrf.mxu0
      %v1625 = vadd.f32 0.0, %v1624
      %1626 = vmatmul.f32.gmra.mxu0 %v637
      %v1627 = vpop.f32.mrf.mxu0
      %v1628 = vadd.f32 0.0, %v1627
      %1629 = vmatmul.f32.gmra.mxu0 %v639
      %v1630 = vpop.f32.mrf.mxu0
      %v1631 = vadd.f32 0.0, %v1630
      %1632 = vmatmul.f32.gmra.mxu0 %v641
      %v1633 = vpop.f32.mrf.mxu0
      %v1634 = vadd.f32 0.0, %v1633
      %1635 = vmatmul.f32.gmra.mxu0 %v643
      %v1636 = vpop.f32.mrf.mxu0
      %v1637 = vadd.f32 0.0, %v1636
      %1638 = vmatmul.f32.gmra.mxu0 %v645
      %v1639 = vpop.f32.mrf.mxu0
      %v1640 = vadd.f32 0.0, %v1639
      %1641 = vmatmul.f32.gmra.mxu0 %v647
      %v1642 = vpop.f32.mrf.mxu0
      %v1643 = vadd.f32 0.0, %v1642
      %1644 = vmatmul.f32.gmra.mxu0 %v649
      %v1645 = vpop.f32.mrf.mxu0
      %v1646 = vadd.f32 0.0, %v1645
      %1647 = vmatmul.f32.gmra.mxu0 %v651
      %v1648 = vpop.f32.mrf.mxu0
      %v1649 = vadd.f32 0.0, %v1648
      %1650 = vmatmul.f32.gmra.mxu0 %v1067
      %v1651 = vpop.f32.mrf.mxu0
      %v1652 = vadd.f32 0.0, %v1651
      %1653 = vmatmul.f32.gmra.mxu0 %v1070
      %v1654 = vpop.f32.mrf.mxu0
      %v1655 = vadd.f32 0.0, %v1654
      %1656 = vmatmul.f32.gmra.mxu0 %v1542
      %v1657 = vpop.f32.mrf.mxu0
      %v1658 = vadd.f32 0.0, %v1657
      %1659 = vmatmul.f32.gmra.mxu0 %v1545
      %v1660 = vpop.f32.mrf.mxu0
      %v1661 = vadd.f32 0.0, %v1660
      %1662 = vdwg.mxu0
      %v1663 = vadd.f32 %v1507, %v1568
      %v1664 = vadd.f32 %v1508, %v1571
      %v1665 = vadd.f32 %v1509, %v1574
      %v1666 = vadd.f32 %v1510, %v1577
      %v1667 = vadd.f32 %v1511, %v1580
      %v1668 = vadd.f32 %v1512, %v1583
      %v1669 = vadd.f32 %v1513, %v1586
      %v1670 = vadd.f32 %v1514, %v1589
      %v1671 = vadd.f32 %v1515, %v1592
      %v1672 = vadd.f32 %v1516, %v1595
      %v1673 = vadd.f32 %v1517, %v1598
      %v1674 = vadd.f32 %v1518, %v1601
      %v1675 = vadd.f32 %v1519, %v1604
      %v1676 = vadd.f32 %v1520, %v1607
      %v1677 = vadd.f32 %v1521, %v1610
      %v1678 = vadd.f32 %v1522, %v1613
      %v1679 = vadd.f32 %v1523, %v1616
      %v1680 = vadd.f32 %v1524, %v1619
      %v1681 = vadd.f32 %v1525, %v1622
      %v1682 = vadd.f32 %v1526, %v1625
      %v1683 = vadd.f32 %v1527, %v1628
      %v1684 = vadd.f32 %v1528, %v1631
      %v1685 = vadd.f32 %v1529, %v1634
      %v1686 = vadd.f32 %v1530, %v1637
      %v1687 = vadd.f32 %v1531, %v1640
      %v1688 = vadd.f32 %v1532, %v1643
      %v1689 = vadd.f32 %v1533, %v1646
      %v1690 = vadd.f32 %v1534, %v1649
      %v1691 = vadd.f32 %v1535, %v1652
      %v1692 = vadd.f32 %v1536, %v1655
      %v1693 = vadd.f32 %v1537, %v1658
      %v1694 = vadd.f32 %v1538, %v1661
      %v1696 = vrot.slane %v272, 1
      %v1697 = vrot.slane %v273, 1
      %v1698 = vsel %vm324, %v1696, %v1697
      %v1699 = vrot.slane %v274, 1
      %v1700 = vsel %vm324, %v1697, %v1699
      %s1701 = scalar_lea.vmem %s1, 28
      %v1702 = vld [vmem:[%s1701] sm:$0xf]
      %v1703 = vsel %vm407, %v1698, 0
      %v1705 = vsel %vm407, %v1700, 0
      %v1708 = vsel %vm472, %v1702, 0
      %1710 = vmatpush.msra.mxu0 0.0
      %1711 = vmatpush.msra.mxu0 0.0
      %1712 = vmatpush.msra.mxu0 0.0
      %1713 = vmatpush.msra.mxu0 0.0
      %1714 = vmatpush.msra.mxu0 0.0
      %1715 = vmatpush.msra.mxu0 0.0
      %1716 = vmatpush.msra.mxu0 0.0
      %1717 = vmatpush.msra.mxu0 0.0
      %1718 = vmatpush.msra.mxu0 0.0
      %1719 = vmatpush.msra.mxu0 0.0
      %1720 = vmatpush.msra.mxu0 0.0
      %1721 = vmatpush.msra.mxu0 0.0
      %1722 = vmatpush.msra.mxu0 0.0
      %1723 = vmatpush.msra.mxu0 0.0
      %1724 = vmatpush.msra.mxu0 0.0
      %1725 = vmatpush.msra.mxu0 %v1708
      %1726 = vmatmul.f32.gmra.mxu0 %v416
      %v1727 = vpop.f32.mrf.mxu0
      %v1728 = vadd.f32 0.0, %v1727
      %1729 = vmatmul.f32.gmra.mxu0 %v418
      %v1730 = vpop.f32.mrf.mxu0
      %v1731 = vadd.f32 0.0, %v1730
      %1732 = vmatmul.f32.gmra.mxu0 %v420
      %v1733 = vpop.f32.mrf.mxu0
      %v1734 = vadd.f32 0.0, %v1733
      %1735 = vmatmul.f32.gmra.mxu0 %v422
      %v1736 = vpop.f32.mrf.mxu0
      %v1737 = vadd.f32 0.0, %v1736
      %1738 = vmatmul.f32.gmra.mxu0 %v424
      %v1739 = vpop.f32.mrf.mxu0
      %v1740 = vadd.f32 0.0, %v1739
      %1741 = vmatmul.f32.gmra.mxu0 %v426
      %v1742 = vpop.f32.mrf.mxu0
      %v1743 = vadd.f32 0.0, %v1742
      %1744 = vmatmul.f32.gmra.mxu0 %v428
      %v1745 = vpop.f32.mrf.mxu0
      %v1746 = vadd.f32 0.0, %v1745
      %1747 = vmatmul.f32.gmra.mxu0 %v430
      %v1748 = vpop.f32.mrf.mxu0
      %v1749 = vadd.f32 0.0, %v1748
      %1750 = vmatmul.f32.gmra.mxu0 %v432
      %v1751 = vpop.f32.mrf.mxu0
      %v1752 = vadd.f32 0.0, %v1751
      %1753 = vmatmul.f32.gmra.mxu0 %v434
      %v1754 = vpop.f32.mrf.mxu0
      %v1755 = vadd.f32 0.0, %v1754
      %1756 = vmatmul.f32.gmra.mxu0 %v436
      %v1757 = vpop.f32.mrf.mxu0
      %v1758 = vadd.f32 0.0, %v1757
      %1759 = vmatmul.f32.gmra.mxu0 %v438
      %v1760 = vpop.f32.mrf.mxu0
      %v1761 = vadd.f32 0.0, %v1760
      %1762 = vmatmul.f32.gmra.mxu0 %v440
      %v1763 = vpop.f32.mrf.mxu0
      %v1764 = vadd.f32 0.0, %v1763
      %1765 = vmatmul.f32.gmra.mxu0 %v442
      %v1766 = vpop.f32.mrf.mxu0
      %v1767 = vadd.f32 0.0, %v1766
      %1768 = vmatmul.f32.gmra.mxu0 %v444
      %v1769 = vpop.f32.mrf.mxu0
      %v1770 = vadd.f32 0.0, %v1769
      %1771 = vmatmul.f32.gmra.mxu0 %v446
      %v1772 = vpop.f32.mrf.mxu0
      %v1773 = vadd.f32 0.0, %v1772
      %1774 = vmatmul.f32.gmra.mxu0 %v448
      %v1775 = vpop.f32.mrf.mxu0
      %v1776 = vadd.f32 0.0, %v1775
      %1777 = vmatmul.f32.gmra.mxu0 %v450
      %v1778 = vpop.f32.mrf.mxu0
      %v1779 = vadd.f32 0.0, %v1778
      %1780 = vmatmul.f32.gmra.mxu0 %v452
      %v1781 = vpop.f32.mrf.mxu0
      %v1782 = vadd.f32 0.0, %v1781
      %1783 = vmatmul.f32.gmra.mxu0 %v454
      %v1784 = vpop.f32.mrf.mxu0
      %v1785 = vadd.f32 0.0, %v1784
      %1786 = vmatmul.f32.gmra.mxu0 %v456
      %v1787 = vpop.f32.mrf.mxu0
      %v1788 = vadd.f32 0.0, %v1787
      %1789 = vmatmul.f32.gmra.mxu0 %v458
      %v1790 = vpop.f32.mrf.mxu0
      %v1791 = vadd.f32 0.0, %v1790
      %1792 = vmatmul.f32.gmra.mxu0 %v460
      %v1793 = vpop.f32.mrf.mxu0
      %v1794 = vadd.f32 0.0, %v1793
      %1795 = vmatmul.f32.gmra.mxu0 %v462
      %v1796 = vpop.f32.mrf.mxu0
      %v1797 = vadd.f32 0.0, %v1796
      %1798 = vmatmul.f32.gmra.mxu0 %v464
      %v1799 = vpop.f32.mrf.mxu0
      %v1800 = vadd.f32 0.0, %v1799
      %1801 = vmatmul.f32.gmra.mxu0 %v466
      %v1802 = vpop.f32.mrf.mxu0
      %v1803 = vadd.f32 0.0, %v1802
      %1804 = vmatmul.f32.gmra.mxu0 %v468
      %v1805 = vpop.f32.mrf.mxu0
      %v1806 = vadd.f32 0.0, %v1805
      %1807 = vmatmul.f32.gmra.mxu0 %v470
      %v1808 = vpop.f32.mrf.mxu0
      %v1809 = vadd.f32 0.0, %v1808
      %1810 = vmatmul.f32.gmra.mxu0 %v1228
      %v1811 = vpop.f32.mrf.mxu0
      %v1812 = vadd.f32 0.0, %v1811
      %1813 = vmatmul.f32.gmra.mxu0 %v1230
      %v1814 = vpop.f32.mrf.mxu0
      %v1815 = vadd.f32 0.0, %v1814
      %1816 = vmatmul.f32.gmra.mxu0 %v1703
      %v1817 = vpop.f32.mrf.mxu0
      %v1818 = vadd.f32 0.0, %v1817
      %1819 = vmatmul.f32.gmra.mxu0 %v1705
      %v1820 = vpop.f32.mrf.mxu0
      %v1821 = vadd.f32 0.0, %v1820
      %1822 = vdwg.mxu0
      %v1823 = vadd.f32 %v1663, %v1728
      %v1824 = vadd.f32 %v1664, %v1731
      %v1825 = vadd.f32 %v1665, %v1734
      %v1826 = vadd.f32 %v1666, %v1737
      %v1827 = vadd.f32 %v1667, %v1740
      %v1828 = vadd.f32 %v1668, %v1743
      %v1829 = vadd.f32 %v1669, %v1746
      %v1830 = vadd.f32 %v1670, %v1749
      %v1831 = vadd.f32 %v1671, %v1752
      %v1832 = vadd.f32 %v1672, %v1755
      %v1833 = vadd.f32 %v1673, %v1758
      %v1834 = vadd.f32 %v1674, %v1761
      %v1835 = vadd.f32 %v1675, %v1764
      %v1836 = vadd.f32 %v1676, %v1767
      %v1837 = vadd.f32 %v1677, %v1770
      %v1838 = vadd.f32 %v1678, %v1773
      %v1839 = vadd.f32 %v1679, %v1776
      %v1840 = vadd.f32 %v1680, %v1779
      %v1841 = vadd.f32 %v1681, %v1782
      %v1842 = vadd.f32 %v1682, %v1785
      %v1843 = vadd.f32 %v1683, %v1788
      %v1844 = vadd.f32 %v1684, %v1791
      %v1845 = vadd.f32 %v1685, %v1794
      %v1846 = vadd.f32 %v1686, %v1797
      %v1847 = vadd.f32 %v1687, %v1800
      %v1848 = vadd.f32 %v1688, %v1803
      %v1849 = vadd.f32 %v1689, %v1806
      %v1850 = vadd.f32 %v1690, %v1809
      %v1851 = vadd.f32 %v1691, %v1812
      %v1852 = vadd.f32 %v1692, %v1815
      %v1853 = vadd.f32 %v1693, %v1818
      %v1854 = vadd.f32 %v1694, %v1821
      %v1855 = vrot.slane %v272, 2
      %v1856 = vrot.slane %v273, 2
      %v1857 = vsel %vm769, %v1855, %v1856
      %v1858 = vrot.slane %v274, 2
      %v1859 = vsel %vm769, %v1856, %v1858
      %s1860 = scalar_lea.vmem %s1, 32
      %v1861 = vld [vmem:[%s1860] sm:$0xf]
      %v1862 = vsel %vm407, %v1857, 0
      %v1864 = vsel %vm407, %v1859, 0
      %v1867 = vsel %vm472, %v1861, 0
      %1869 = vmatpush.msra.mxu0 0.0
      %1870 = vmatpush.msra.mxu0 0.0
      %1871 = vmatpush.msra.mxu0 0.0
      %1872 = vmatpush.msra.mxu0 0.0
      %1873 = vmatpush.msra.mxu0 0.0
      %1874 = vmatpush.msra.mxu0 0.0
      %1875 = vmatpush.msra.mxu0 0.0
      %1876 = vmatpush.msra.mxu0 0.0
      %1877 = vmatpush.msra.mxu0 0.0
      %1878 = vmatpush.msra.mxu0 0.0
      %1879 = vmatpush.msra.mxu0 0.0
      %1880 = vmatpush.msra.mxu0 0.0
      %1881 = vmatpush.msra.mxu0 0.0
      %1882 = vmatpush.msra.mxu0 0.0
      %1883 = vmatpush.msra.mxu0 0.0
      %1884 = vmatpush.msra.mxu0 %v1867
      %1885 = vmatmul.f32.gmra.mxu0 %v860
      %v1886 = vpop.f32.mrf.mxu0
      %v1887 = vadd.f32 0.0, %v1886
      %1888 = vmatmul.f32.gmra.mxu0 %v862
      %v1889 = vpop.f32.mrf.mxu0
      %v1890 = vadd.f32 0.0, %v1889
      %1891 = vmatmul.f32.gmra.mxu0 %v864
      %v1892 = vpop.f32.mrf.mxu0
      %v1893 = vadd.f32 0.0, %v1892
      %1894 = vmatmul.f32.gmra.mxu0 %v866
      %v1895 = vpop.f32.mrf.mxu0
      %v1896 = vadd.f32 0.0, %v1895
      %1897 = vmatmul.f32.gmra.mxu0 %v868
      %v1898 = vpop.f32.mrf.mxu0
      %v1899 = vadd.f32 0.0, %v1898
      %1900 = vmatmul.f32.gmra.mxu0 %v870
      %v1901 = vpop.f32.mrf.mxu0
      %v1902 = vadd.f32 0.0, %v1901
      %1903 = vmatmul.f32.gmra.mxu0 %v872
      %v1904 = vpop.f32.mrf.mxu0
      %v1905 = vadd.f32 0.0, %v1904
      %1906 = vmatmul.f32.gmra.mxu0 %v874
      %v1907 = vpop.f32.mrf.mxu0
      %v1908 = vadd.f32 0.0, %v1907
      %1909 = vmatmul.f32.gmra.mxu0 %v876
      %v1910 = vpop.f32.mrf.mxu0
      %v1911 = vadd.f32 0.0, %v1910
      %1912 = vmatmul.f32.gmra.mxu0 %v878
      %v1913 = vpop.f32.mrf.mxu0
      %v1914 = vadd.f32 0.0, %v1913
      %1915 = vmatmul.f32.gmra.mxu0 %v880
      %v1916 = vpop.f32.mrf.mxu0
      %v1917 = vadd.f32 0.0, %v1916
      %1918 = vmatmul.f32.gmra.mxu0 %v882
      %v1919 = vpop.f32.mrf.mxu0
      %v1920 = vadd.f32 0.0, %v1919
      %1921 = vmatmul.f32.gmra.mxu0 %v884
      %v1922 = vpop.f32.mrf.mxu0
      %v1923 = vadd.f32 0.0, %v1922
      %1924 = vmatmul.f32.gmra.mxu0 %v886
      %v1925 = vpop.f32.mrf.mxu0
      %v1926 = vadd.f32 0.0, %v1925
      %1927 = vmatmul.f32.gmra.mxu0 %v888
      %v1928 = vpop.f32.mrf.mxu0
      %v1929 = vadd.f32 0.0, %v1928
      %1930 = vmatmul.f32.gmra.mxu0 %v890
      %v1931 = vpop.f32.mrf.mxu0
      %v1932 = vadd.f32 0.0, %v1931
      %1933 = vmatmul.f32.gmra.mxu0 %v892
      %v1934 = vpop.f32.mrf.mxu0
      %v1935 = vadd.f32 0.0, %v1934
      %1936 = vmatmul.f32.gmra.mxu0 %v894
      %v1937 = vpop.f32.mrf.mxu0
      %v1938 = vadd.f32 0.0, %v1937
      %1939 = vmatmul.f32.gmra.mxu0 %v896
      %v1940 = vpop.f32.mrf.mxu0
      %v1941 = vadd.f32 0.0, %v1940
      %1942 = vmatmul.f32.gmra.mxu0 %v898
      %v1943 = vpop.f32.mrf.mxu0
      %v1944 = vadd.f32 0.0, %v1943
      %1945 = vmatmul.f32.gmra.mxu0 %v900
      %v1946 = vpop.f32.mrf.mxu0
      %v1947 = vadd.f32 0.0, %v1946
      %1948 = vmatmul.f32.gmra.mxu0 %v902
      %v1949 = vpop.f32.mrf.mxu0
      %v1950 = vadd.f32 0.0, %v1949
      %1951 = vmatmul.f32.gmra.mxu0 %v904
      %v1952 = vpop.f32.mrf.mxu0
      %v1953 = vadd.f32 0.0, %v1952
      %1954 = vmatmul.f32.gmra.mxu0 %v906
      %v1955 = vpop.f32.mrf.mxu0
      %v1956 = vadd.f32 0.0, %v1955
      %1957 = vmatmul.f32.gmra.mxu0 %v908
      %v1958 = vpop.f32.mrf.mxu0
      %v1959 = vadd.f32 0.0, %v1958
      %1960 = vmatmul.f32.gmra.mxu0 %v910
      %v1961 = vpop.f32.mrf.mxu0
      %v1962 = vadd.f32 0.0, %v1961
      %1963 = vmatmul.f32.gmra.mxu0 %v912
      %v1964 = vpop.f32.mrf.mxu0
      %v1965 = vadd.f32 0.0, %v1964
      %1966 = vmatmul.f32.gmra.mxu0 %v914
      %v1967 = vpop.f32.mrf.mxu0
      %v1968 = vadd.f32 0.0, %v1967
      %1969 = vmatmul.f32.gmra.mxu0 %v1387
      %v1970 = vpop.f32.mrf.mxu0
      %v1971 = vadd.f32 0.0, %v1970
      %1972 = vmatmul.f32.gmra.mxu0 %v1389
      %v1973 = vpop.f32.mrf.mxu0
      %v1974 = vadd.f32 0.0, %v1973
      %1975 = vmatmul.f32.gmra.mxu0 %v1862
      %v1976 = vpop.f32.mrf.mxu0
      %v1977 = vadd.f32 0.0, %v1976
      %1978 = vmatmul.f32.gmra.mxu0 %v1864
      %v1979 = vpop.f32.mrf.mxu0
      %v1980 = vadd.f32 0.0, %v1979
      %1981 = vdwg.mxu0
      %v1982 = vadd.f32 %v1823, %v1887
      %v1983 = vadd.f32 %v1824, %v1890
      %v1984 = vadd.f32 %v1825, %v1893
      %v1985 = vadd.f32 %v1826, %v1896
      %v1986 = vadd.f32 %v1827, %v1899
      %v1987 = vadd.f32 %v1828, %v1902
      %v1988 = vadd.f32 %v1829, %v1905
      %v1989 = vadd.f32 %v1830, %v1908
      %v1990 = vadd.f32 %v1831, %v1911
      %v1991 = vadd.f32 %v1832, %v1914
      %v1992 = vadd.f32 %v1833, %v1917
      %v1993 = vadd.f32 %v1834, %v1920
      %v1994 = vadd.f32 %v1835, %v1923
      %v1995 = vadd.f32 %v1836, %v1926
      %v1996 = vadd.f32 %v1837, %v1929
      %v1997 = vadd.f32 %v1838, %v1932
      %v1998 = vadd.f32 %v1839, %v1935
      %v1999 = vadd.f32 %v1840, %v1938
      %v2000 = vadd.f32 %v1841, %v1941
      %v2001 = vadd.f32 %v1842, %v1944
      %v2002 = vadd.f32 %v1843, %v1947
      %v2003 = vadd.f32 %v1844, %v1950
      %v2004 = vadd.f32 %v1845, %v1953
      %v2005 = vadd.f32 %v1846, %v1956
      %v2006 = vadd.f32 %v1847, %v1959
      %v2007 = vadd.f32 %v1848, %v1962
      %v2008 = vadd.f32 %v1849, %v1965
      %v2009 = vadd.f32 %v1850, %v1968
      %v2010 = vadd.f32 %v1851, %v1971
      %v2011 = vadd.f32 %v1852, %v1974
      %v2012 = vadd.f32 %v1853, %v1977
      %v2013 = vadd.f32 %v1854, %v1980
      %v2014 = vadd.f32 %v1982, %v1983
      %v2015 = vadd.f32 %v2014, %v1984
      %v2016 = vadd.f32 %v2015, %v1985
      %v2017 = vadd.f32 %v2016, %v1986
      %v2018 = vadd.f32 %v2017, %v1987
      %v2019 = vadd.f32 %v2018, %v1988
      %v2020 = vadd.f32 %v2019, %v1989
      %v2021 = vadd.f32 %v2020, %v1990
      %v2022 = vadd.f32 %v2021, %v1991
      %v2023 = vadd.f32 %v2022, %v1992
      %v2024 = vadd.f32 %v2023, %v1993
      %v2025 = vadd.f32 %v2024, %v1994
      %v2026 = vadd.f32 %v2025, %v1995
      %v2027 = vadd.f32 %v2026, %v1996
      %v2028 = vadd.f32 %v2027, %v1997
      %v2029 = vadd.f32 %v2028, %v1998
      %v2030 = vadd.f32 %v2029, %v1999
      %v2031 = vadd.f32 %v2030, %v2000
      %v2032 = vadd.f32 %v2031, %v2001
      %v2033 = vadd.f32 %v2032, %v2002
      %v2034 = vadd.f32 %v2033, %v2003
      %v2035 = vadd.f32 %v2034, %v2004
      %v2036 = vadd.f32 %v2035, %v2005
      %v2037 = vadd.f32 %v2036, %v2006
      %v2038 = vadd.f32 %v2037, %v2007
      %v2039 = vadd.f32 %v2038, %v2008
      %v2040 = vadd.f32 %v2039, %v2009
      %v2041 = vadd.f32 %v2040, %v2010
      %v2042 = vadd.f32 %v2041, %v2011
      %v2043 = vadd.f32 %v2042, %v2012
      %v2044 = vadd.f32 %v2043, %v2013
      %v2045 = vrot.slane %v2044, 4
      %v2046 = vadd.f32 %v2044, %v2045
      %v2047 = vrot.slane %v2046, 2
      %v2048 = vadd.f32 %v2046, %v2047
      %v2049 = vrot.slane %v2048, 1
      %v2050 = vadd.f32 %v2048, %v2049
      %v2051 = vmul.f32 %v1982, %v1982
      %v2052 = vmul.f32 %v1983, %v1983
      %v2053 = vmul.f32 %v1984, %v1984
      %v2054 = vmul.f32 %v1985, %v1985
      %v2055 = vmul.f32 %v1986, %v1986
      %v2056 = vmul.f32 %v1987, %v1987
      %v2057 = vmul.f32 %v1988, %v1988
      %v2058 = vmul.f32 %v1989, %v1989
      %v2059 = vmul.f32 %v1990, %v1990
      %v2060 = vmul.f32 %v1991, %v1991
      %v2061 = vmul.f32 %v1992, %v1992
      %v2062 = vmul.f32 %v1993, %v1993
      %v2063 = vmul.f32 %v1994, %v1994
      %v2064 = vmul.f32 %v1995, %v1995
      %v2065 = vmul.f32 %v1996, %v1996
      %v2066 = vmul.f32 %v1997, %v1997
      %v2067 = vmul.f32 %v1998, %v1998
      %v2068 = vmul.f32 %v1999, %v1999
      %v2069 = vmul.f32 %v2000, %v2000
      %v2070 = vmul.f32 %v2001, %v2001
      %v2071 = vmul.f32 %v2002, %v2002
      %v2072 = vmul.f32 %v2003, %v2003
      %v2073 = vmul.f32 %v2004, %v2004
      %v2074 = vmul.f32 %v2005, %v2005
      %v2075 = vmul.f32 %v2006, %v2006
      %v2076 = vmul.f32 %v2007, %v2007
      %v2077 = vmul.f32 %v2008, %v2008
      %v2078 = vmul.f32 %v2009, %v2009
      %v2079 = vmul.f32 %v2010, %v2010
      %v2080 = vmul.f32 %v2011, %v2011
      %v2081 = vmul.f32 %v2012, %v2012
      %v2082 = vmul.f32 %v2013, %v2013
      %v2083 = vadd.f32 %v2051, %v2052
      %v2084 = vadd.f32 %v2083, %v2053
      %v2085 = vadd.f32 %v2084, %v2054
      %v2086 = vadd.f32 %v2085, %v2055
      %v2087 = vadd.f32 %v2086, %v2056
      %v2088 = vadd.f32 %v2087, %v2057
      %v2089 = vadd.f32 %v2088, %v2058
      %v2090 = vadd.f32 %v2089, %v2059
      %v2091 = vadd.f32 %v2090, %v2060
      %v2092 = vadd.f32 %v2091, %v2061
      %v2093 = vadd.f32 %v2092, %v2062
      %v2094 = vadd.f32 %v2093, %v2063
      %v2095 = vadd.f32 %v2094, %v2064
      %v2096 = vadd.f32 %v2095, %v2065
      %v2097 = vadd.f32 %v2096, %v2066
      %v2098 = vadd.f32 %v2097, %v2067
      %v2099 = vadd.f32 %v2098, %v2068
      %v2100 = vadd.f32 %v2099, %v2069
      %v2101 = vadd.f32 %v2100, %v2070
      %v2102 = vadd.f32 %v2101, %v2071
      %v2103 = vadd.f32 %v2102, %v2072
      %v2104 = vadd.f32 %v2103, %v2073
      %v2105 = vadd.f32 %v2104, %v2074
      %v2106 = vadd.f32 %v2105, %v2075
      %v2107 = vadd.f32 %v2106, %v2076
      %v2108 = vadd.f32 %v2107, %v2077
      %v2109 = vadd.f32 %v2108, %v2078
      %v2110 = vadd.f32 %v2109, %v2079
      %v2111 = vadd.f32 %v2110, %v2080
      %v2112 = vadd.f32 %v2111, %v2081
      %v2113 = vadd.f32 %v2112, %v2082
      %v2114 = vrot.slane %v2113, 4
      %v2115 = vadd.f32 %v2113, %v2114
      %v2116 = vrot.slane %v2115, 2
      %v2117 = vadd.f32 %v2115, %v2116
      %v2118 = vrot.slane %v2117, 1
      %v2119 = vadd.f32 %v2117, %v2118
      %vm2120 = vcmask 1040384
      %v2121 = vsel %vm2120, %v2050, %v2119
      %2122 = vst [vmem:[%s162] sm:$0x3] %v2121
      %s2123 = sadd.s32 %s17, %s18
      %p2124 = scmp.lt.s32.totalorder %s2123, 1
      %s2125 = scalar_select %p2124, %s2123, 1
      %s2126 = smul.addr %s2125, 2
      %s2127 = scalar_lea.vmem %s2, %s2126
      // Predicated region
      $region29: #{relu_conv_bn.2} parent=27 // pred_check
        %p2128 = pneg %p92
      $region30: #{relu_conv_bn.2} parent=27 // pred_check_branch
        %2130 = sbr.rel (%p2128) target = $region32
      $region31: #{relu_conv_bn.2} parent=27 // pred_region
        %s2131 = sadd.s32 %s17, %s18
      $region32: #{relu_conv_bn.2} parent=27 // pred_fallthru
        _
    $region28: #{relu_conv_bn.2} parent=5 // pred_fallthru
      _
    %p2132 = scmp.le.s32.totalorder 2, %s8
    // Predicated region
    $region33: #{relu_conv_bn.2} parent=5 // pred_check
      %p2133 = pneg %p2132
    $region34: #{relu_conv_bn.2} parent=5 // pred_check_branch
      %2135 = sbr.rel (%p2133) target = $region36
    $region35: #{relu_conv_bn.2} parent=5 // pred_region
      %s2136 = ssub.s32 %s8, 2
      // Predicated region
      $region37: #{relu_conv_bn.2} parent=35 // pred_check
        %p2137 = pneg %p98
      $region38: #{relu_conv_bn.2} parent=35 // pred_check_branch
        %2139 = sbr.rel (%p2137) target = $region40
      $region39: #{relu_conv_bn.2} parent=35 // pred_region
        %s2140 = sadd.s32 %s19, %s20
        %p2141 = scmp.lt.s32.totalorder %s2140, 1
        %s2142 = scalar_select %p2141, %s2140, 1
        %s2143 = smul.addr %s2142, 2
        %s2144 = scalar_lea.vmem %s2, %s2143
      $region40: #{relu_conv_bn.2} parent=35 // pred_fallthru
        _
    $region36: #{relu_conv_bn.2} parent=5 // pred_fallthru
      _
  $region6: #{relu_conv_bn.2} parent=0 // loop_footer
    %s12 = sadd.s32 1, %s8
  $region7: #{relu_conv_bn.2} parent=0 // loop_footer_branch
    %7 = sbr.rel target = $region3
  $region8: #{relu_conv_bn.2} parent=0 // loop_exit
    _

// kernel: relu_conv_bn.3
$region0: #{relu_conv_bn.3}
  #allocation0 [shape = 'u32[]', space=smem, size = 0x4, offset = 0x4, fixed_abs, tag = 'smem constant byte address 0x4 - core index']
  #allocation1 [shape = 'u32[72,128]{1,0:T(1,128)}', space=vmem, size = 0x9000, scoped, tag = 'internal scratch']
  %s0 = inlined_call_operand.vmem [shape: f32[36,18,4], index: 0, kind: input, shape index: {}]
  %s1 = inlined_call_operand.vmem [shape: f32[9,4,128], index: 1, kind: input, shape index: {}]
  %s2 = inlined_call_operand.vmem [shape: f32[1,128], index: 2, kind: input, shape index: {}]
  %s3 = inlined_call_operand.vmem [shape: f32[1,128], index: 3, kind: input, shape index: {}]
  %s4 = inlined_call_operand.vmem [shape: f32[2,8,256], index: 4, kind: output, shape index: {}]
  %s5 = sld [smem:[#allocation0]]
  $region49: #{relu_conv_bn.3} parent=0
    _
  %s7 = ssub.s32 1, %s5
  %s8 = scalar_select 0, %s7, %s5
  loop: start=0, step=1, limit=4
  $region2: #{relu_conv_bn.3} parent=0 // loop_pre_header
    _
  $region3: #{relu_conv_bn.3} parent=0 // loop_header
    %s10 = sphi 0, %s14
    %p11 = scmp.ge.s32.totalorder %s10, 4
    %s17 = sphi 0, %s29
    %s18 = sphi 0, %s25
    %s19 = sphi 0, %s17
    %s20 = sphi 0, %s18
    %s21 = sphi 0, %s19
    %s22 = sphi 0, %s20
    %s32 = sphi 0, %s34
    %s35 = sphi 0, %s32
    %s36 = sphi 0, %s35
    %s52 = sphi 0, %s36
    %s56 = sphi 0, %s56
    %s58 = sphi 0, %s56
    %s59 = sphi 0, %s58
    %s73 = sphi 0, %s59
    %s77 = sphi 0, %s77
    %s79 = sphi 0, %s77
    %s80 = sphi 0, %s79
    %s94 = sphi 0, %s80
    %s98 = sphi 0, %s98
    %s100 = sphi 0, %s98
    %s101 = sphi 0, %s100
    %s115 = sphi 0, %s101
    %s123 = sphi 0, %s125
    %s126 = sphi 0, %s123
    %s127 = sphi 0, %s126
    %s143 = sphi 0, %s127
  $region4: #{relu_conv_bn.3} parent=0 // loop_header_branch
    %13 = sbr.rel (%p11) target = $region8
  $region5: #{relu_conv_bn.3} parent=0 // loop_body
    %s15 = ssub.s32 %s10, 1
    %s16 = ssub.s32 %s10, 2
    %s23 = sadd.s32 1, %s18
    %p24 = scmp.ge.s32.totalorder %s23, 1
    %s25 = scalar_select %p24, 0, %s23
    %s26 = sadd.s32 1, %s17
    %s27 = scalar_select %p24, %s26, %s17
    %p28 = scmp.ge.s32.totalorder %s27, 2
    %s29 = scalar_select %p28, 0, %s27
    %s30 = ssub.s32 %s17, %s29
    %p31 = scmp.eq.s32.totalorder %s30, 0
    %s33 = sadd.s32 %s32, 1
    %s34 = scalar_select %p31, %s32, %s33
    %p37 = pneg %p31
    %p38 = scmp.eq.s32.totalorder %s10, 1
    %p39 = por %p37, %p38
    %p40 = scmp.ne.s32.totalorder %s32, %s35
    %p41 = scmp.eq.s32.totalorder %s10, 0
    %p42 = por %p40, %p41
    %p43 = scmp.ne.s32.totalorder %s32, %s35
    %p44 = scmp.eq.s32.totalorder %s15, 1
    %p45 = por %p43, %p44
    %p46 = scmp.ne.s32.totalorder %s35, %s36
    %p47 = scmp.eq.s32.totalorder %s15, 0
    %p48 = por %p46, %p47
    %p49 = scmp.ne.s32.totalorder %s35, %s36
    %p50 = scmp.eq.s32.totalorder %s16, 1
    %p51 = por %p49, %p50
    %p53 = scmp.ne.s32.totalorder %s36, %s52
    %p54 = scmp.eq.s32.totalorder %s16, 0
    %p55 = por %p53, %p54
    %s57 = sadd.s32 %s56, 1
    %p60 = scmp.eq.s32.totalorder %s10, 1
    %p61 = scmp.ne.s32.totalorder %s56, %s58
    %p62 = scmp.eq.s32.totalorder %s10, 0
    %p63 = por %p61, %p62
    %p64 = scmp.ne.s32.totalorder %s56, %s58
    %p65 = scmp.eq.s32.totalorder %s15, 1
    %p66 = por %p64, %p65
    %p67 = scmp.ne.s32.totalorder %s58, %s59
    %p68 = scmp.eq.s32.totalorder %s15, 0
    %p69 = por %p67, %p68
    %p70 = scmp.ne.s32.totalorder %s58, %s59
    %p71 = scmp.eq.s32.totalorder %s16, 1
    %p72 = por %p70, %p71
    %p74 = scmp.ne.s32.totalorder %s59, %s73
    %p75 = scmp.eq.s32.totalorder %s16, 0
    %p76 = por %p74, %p75
    %s78 = sadd.s32 %s77, 1
    %p81 = scmp.eq.s32.totalorder %s10, 1
    %p82 = scmp.ne.s32.totalorder %s77, %s79
    %p83 = scmp.eq.s32.totalorder %s10, 0
    %p84 = por %p82, %p83
    %p85 = scmp.ne.s32.totalorder %s77, %s79
    %p86 = scmp.eq.s32.totalorder %s15, 1
    %p87 = por %p85, %p86
    %p88 = scmp.ne.s32.totalorder %s79, %s80
    %p89 = scmp.eq.s32.totalorder %s15, 0
    %p90 = por %p88, %p89
    %p91 = scmp.ne.s32.totalorder %s79, %s80
    %p92 = scmp.eq.s32.totalorder %s16, 1
    %p93 = por %p91, %p92
    %p95 = scmp.ne.s32.totalorder %s80, %s94
    %p96 = scmp.eq.s32.totalorder %s16, 0
    %p97 = por %p95, %p96
    %s99 = sadd.s32 %s98, 1
    %p102 = scmp.eq.s32.totalorder %s10, 1
    %p103 = scmp.ne.s32.totalorder %s98, %s100
    %p104 = scmp.eq.s32.totalorder %s10, 0
    %p105 = por %p103, %p104
    %p106 = scmp.ne.s32.totalorder %s98, %s100
    %p107 = scmp.eq.s32.totalorder %s15, 1
    %p108 = por %p106, %p107
    %p109 = scmp.ne.s32.totalorder %s100, %s101
    %p110 = scmp.eq.s32.totalorder %s15, 0
    %p111 = por %p109, %p110
    %p112 = scmp.ne.s32.totalorder %s100, %s101
    %p113 = scmp.eq.s32.totalorder %s16, 1
    %p114 = por %p112, %p113
    %p116 = scmp.ne.s32.totalorder %s101, %s115
    %p117 = scmp.eq.s32.totalorder %s16, 0
    %p118 = por %p116, %p117
    %s119 = ssub.s32 %s17, %s29
    %s120 = ssub.s32 %s18, %s25
    %s121 = sor.u32 %s119, %s120
    %p122 = scmp.eq.s32.totalorder %s121, 0
    %s124 = sadd.s32 %s123, 1
    %s125 = scalar_select %p122, %s123, %s124
    %p128 = pneg %p122
    %p129 = scmp.eq.s32.totalorder %s10, 1
    %p130 = por %p128, %p129
    %p131 = scmp.ne.s32.totalorder %s123, %s126
    %p132 = scmp.eq.s32.totalorder %s10, 0
    %p133 = por %p131, %p132
    %p134 = scmp.ne.s32.totalorder %s123, %s126
    %p135 = scmp.eq.s32.totalorder %s15, 1
    %p136 = por %p134, %p135
    %p137 = scmp.ne.s32.totalorder %s126, %s127
    %p138 = scmp.eq.s32.totalorder %s15, 0
    %p139 = por %p137, %p138
    %p140 = scmp.ne.s32.totalorder %s126, %s127
    %p141 = scmp.eq.s32.totalorder %s16, 1
    %p142 = por %p140, %p141
    %p144 = scmp.ne.s32.totalorder %s127, %s143
    %p145 = scmp.eq.s32.totalorder %s16, 0
    %p146 = por %p144, %p145
    %p147 = scmp.le.s32.totalorder 1, %s10
    %p148 = scmp.lt.s32.totalorder %s10, 3
    %p149 = pnand %p147, %p148
    %p150 = pneg %p149
    // Predicated region
    $region9: #{relu_conv_bn.3} parent=5 // pred_check
      _
    $region10: #{relu_conv_bn.3} parent=5 // pred_check_branch
      %152 = sbr.rel (%p149) target = $region12
    $region11: #{relu_conv_bn.3} parent=5 // pred_region
      %s153 = ssub.s32 %s10, 1
      // Predicated region
      $region13: #{relu_conv_bn.3} parent=11 // pred_check
        %p154 = pneg %p69
      $region14: #{relu_conv_bn.3} parent=11 // pred_check_branch
        %156 = sbr.rel (%p154) target = $region16
      $region15: #{relu_conv_bn.3} parent=11 // pred_region
        _
      $region16: #{relu_conv_bn.3} parent=11 // pred_fallthru
        _
      // Predicated region
      $region17: #{relu_conv_bn.3} parent=11 // pred_check
        %p157 = pneg %p90
      $region18: #{relu_conv_bn.3} parent=11 // pred_check_branch
        %159 = sbr.rel (%p157) target = $region20
      $region19: #{relu_conv_bn.3} parent=11 // pred_region
        _
      $region20: #{relu_conv_bn.3} parent=11 // pred_fallthru
        _
      // Predicated region
      $region21: #{relu_conv_bn.3} parent=11 // pred_check
        %p160 = pneg %p111
      $region22: #{relu_conv_bn.3} parent=11 // pred_check_branch
        %162 = sbr.rel (%p160) target = $region24
      $region23: #{relu_conv_bn.3} parent=11 // pred_region
        _
      $region24: #{relu_conv_bn.3} parent=11 // pred_fallthru
        _
    $region12: #{relu_conv_bn.3} parent=5 // pred_fallthru
      _
    %p163 = scmp.lt.s32.totalorder %s10, 2
    // Predicated region
    $region25: #{relu_conv_bn.3} parent=5 // pred_check
      %p164 = pneg %p163
    $region26: #{relu_conv_bn.3} parent=5 // pred_check_branch
      %166 = sbr.rel (%p164) target = $region28
    $region27: #{relu_conv_bn.3} parent=5 // pred_region
      // Predicated region
      $region29: #{relu_conv_bn.3} parent=27 // pred_check
        %p167 = pneg %p42
      $region30: #{relu_conv_bn.3} parent=27 // pred_check_branch
        %169 = sbr.rel (%p167) target = $region32
      $region31: #{relu_conv_bn.3} parent=27 // pred_region
        %s170 = smul.u32 18, %s17
        %p171 = scmp.lt.s32.totalorder %s170, 35
        %s172 = scalar_select %p171, %s170, 35
        %s173 = smul.addr %s172, 3
        %s174 = smul.addr %s173, 8
        %s175 = scalar_lea.vmem %s0, %s174
        %s176 = smul.u32 18, %s17
      $region32: #{relu_conv_bn.3} parent=27 // pred_fallthru
        _
    $region28: #{relu_conv_bn.3} parent=5 // pred_fallthru
      _
    %p177 = scmp.le.s32.totalorder 1, %s10
    %p178 = scmp.lt.s32.totalorder %s10, 3
    %p179 = pnand %p177, %p178
    %p180 = pneg %p179
    // Predicated region
    $region33: #{relu_conv_bn.3} parent=5 // pred_check
      _
    $region34: #{relu_conv_bn.3} parent=5 // pred_check_branch
      %182 = sbr.rel (%p179) target = $region36
    $region35: #{relu_conv_bn.3} parent=5 // pred_region
      %s183 = ssub.s32 %s10, 1
      %s184 = smul.u32 18, %s19
      %p185 = scmp.lt.s32.totalorder %s184, 35
      %s186 = scalar_select %p185, %s184, 35
      %s187 = smul.addr %s186, 3
      %s188 = smul.addr %s187, 8
      %s189 = scalar_lea.vmem %s0, %s188
      %p190 = pneg %p48
      %p191 = pneg %p45
      %p192 = pneg %p69
      %p193 = pneg %p66
      %p194 = pneg %p90
      %p195 = pneg %p87
      %p196 = pneg %p111
      %p197 = pneg %p108
      %p198 = pneg %p139
      %p199 = pneg %p136
      %s200 = smul.u32 2, %s20
      %p201 = scmp.lt.s32.totalorder %s19, 1
      %s202 = scalar_select %p201, %s19, 1
      %p203 = scmp.lt.s32.totalorder %s200, 1
      %s204 = scalar_select %p203, %s200, 1
      %s205 = smul.addr %s202, 2
      %s206 = sadd.s32 %s204, %s205
      %s207 = smul.addr %s206, 8
      %s208 = scalar_lea.vmem %s4, %s207
      %s209 = smul.u32 18, %s19
      %p210 = scmp.lt.s32.totalorder %s209, 35
      %s211 = scalar_select %p210, %s209, 35
      %s212 = smul.addr %s211, 3
      %s213 = smul.addr %s212, 8
      %s214 = scalar_lea.vmem %s0, %s213
      %s215 = smul.u32 18, %s19
      %s216 = smul.u32 2, %s20
      %p217 = scmp.lt.s32.totalorder %s19, 1
      %s218 = scalar_select %p217, %s19, 1
      %p219 = scmp.lt.s32.totalorder %s216, 1
      %s220 = scalar_select %p219, %s216, 1
      %s221 = smul.addr %s218, 2
      %s222 = sadd.s32 %s220, %s221
      %s223 = smul.addr %s222, 8
      %s224 = scalar_lea.vmem %s4, %s223
      %s225 = smul.u32 2, %s20
      %s226 = smul.u32 %s20, 16
      %s227 = smul.u32 %s226, 24
      %s228 = scalar_lea.vmem %s214, %s227
      %v229 = vld [vmem:[%s228] sm:$0xff]
      %v230 = vld [vmem:[%s228 + $0x8] sm:$0xff]
      %v231 = vld [vmem:[%s228 + $0x10] sm:$0x3]
      %v232 = vld [vmem:[%s228 + $0x18] sm:$0xff]
      %v233 = vld [vmem:[%s228 + $0x20] sm:$0xff]
      %v234 = vld [vmem:[%s228 + $0x28] sm:$0x3]
      %v235 = vld [vmem:[%s228 + $0x30] sm:$0xff]
      %v236 = vld [vmem:[%s228 + $0x38] sm:$0xff]
      %v237 = vld [vmem:[%s228 + $0x40] sm:$0x3]
      %v238 = vld [vmem:[%s228 + $0x48] sm:$0xff]
      %v239 = vld [vmem:[%s228 + $0x50] sm:$0xff]
      %v240 = vld [vmem:[%s228 + $0x58] sm:$0x3]
      %v241 = vld [vmem:[%s228 + $0x60] sm:$0xff]
      %v242 = vld [vmem:[%s228 + $0x68] sm:$0xff]
      %v243 = vld [vmem:[%s228 + $0x70] sm:$0x3]
      %v244 = vld [vmem:[%s228 + $0x78] sm:$0xff]
      %v245 = vld [vmem:[%s228 + $0x80] sm:$0xff]
      %v246 = vld [vmem:[%s228 + $0x88] sm:$0x3]
      %v247 = vld [vmem:[%s228 + $0x90] sm:$0xff]
      %v248 = vld [vmem:[%s228 + $0x98] sm:$0xff]
      %v249 = vld [vmem:[%s228 + $0xa0] sm:$0x3]
      %v250 = vld [vmem:[%s228 + $0xa8] sm:$0xff]
      %v251 = vld [vmem:[%s228 + $0xb0] sm:$0xff]
      %v252 = vld [vmem:[%s228 + $0xb8] sm:$0x3]
      %v253 = vld [vmem:[%s228 + $0xc0] sm:$0xff]
      %v254 = vld [vmem:[%s228 + $0xc8] sm:$0xff]
      %v255 = vld [vmem:[%s228 + $0xd0] sm:$0x3]
      %v256 = vld [vmem:[%s228 + $0xd8] sm:$0xff]
      %v257 = vld [vmem:[%s228 + $0xe0] sm:$0xff]
      %v258 = vld [vmem:[%s228 + $0xe8] sm:$0x3]
      %v259 = vld [vmem:[%s228 + $0xf0] sm:$0xff]
      %v260 = vld [vmem:[%s228 + $0xf8] sm:$0xff]
      %v261 = vld [vmem:[%s228 + $0x100] sm:$0x3]
      %v262 = vld [vmem:[%s228 + $0x108] sm:$0xff]
      %v263 = vld [vmem:[%s228 + $0x110] sm:$0xff]
      %v264 = vld [vmem:[%s228 + $0x118] sm:$0x3]
      %v265 = vld [vmem:[%s228 + $0x120] sm:$0xff]
      %v266 = vld [vmem:[%s228 + $0x128] sm:$0xff]
      %v267 = vld [vmem:[%s228 + $0x130] sm:$0x3]
      %v268 = vld [vmem:[%s228 + $0x138] sm:$0xff]
      %v269 = vld [vmem:[%s228 + $0x140] sm:$0xff]
      %v270 = vld [vmem:[%s228 + $0x148] sm:$0x3]
      %v271 = vld [vmem:[%s228 + $0x150] sm:$0xff]
      %v272 = vld [vmem:[%s228 + $0x158] sm:$0xff]
      %v273 = vld [vmem:[%s228 + $0x160] sm:$0x3]
      %v274 = vld [vmem:[%s228 + $0x168] sm:$0xff]
      %v275 = vld [vmem:[%s228 + $0x170] sm:$0xff]
      %v276 = vld [vmem:[%s228 + $0x178] sm:$0x3]
      %v277 = vld [vmem:[%s228 + $0x180] sm:$0xff]
      %v278 = vld [vmem:[%s228 + $0x188] sm:$0xff]
      %v279 = vld [vmem:[%s228 + $0x190] sm:$0x3]
      %v280 = vld [vmem:[%s228 + $0x198] sm:$0xff]
      %v281 = vld [vmem:[%s228 + $0x1a0] sm:$0xff]
      %v282 = vld [vmem:[%s228 + $0x1a8] sm:$0x3]
      %v283 = vmax.f32 %v229, 0.0
      %v284 = vmax.f32 %v230, 0.0
      %v285 = vmax.f32 %v231, 0.0
      %v286 = vmax.f32 %v232, 0.0
      %v287 = vmax.f32 %v233, 0.0
      %v288 = vmax.f32 %v234, 0.0
      %v289 = vmax.f32 %v235, 0.0
      %v290 = vmax.f32 %v236, 0.0
      %v291 = vmax.f32 %v237, 0.0
      %v292 = vmax.f32 %v238, 0.0
      %v293 = vmax.f32 %v239, 0.0
      %v294 = vmax.f32 %v240, 0.0
      %v295 = vmax.f32 %v241, 0.0
      %v296 = vmax.f32 %v242, 0.0
      %v297 = vmax.f32 %v243, 0.0
      %v298 = vmax.f32 %v244, 0.0
      %v299 = vmax.f32 %v245, 0.0
      %v300 = vmax.f32 %v246, 0.0
      %v301 = vmax.f32 %v247, 0.0
      %v302 = vmax.f32 %v248, 0.0
      %v303 = vmax.f32 %v249, 0.0
      %v304 = vmax.f32 %v250, 0.0
      %v305 = vmax.f32 %v251, 0.0
      %v306 = vmax.f32 %v252, 0.0
      %v307 = vmax.f32 %v253, 0.0
      %v308 = vmax.f32 %v254, 0.0
      %v309 = vmax.f32 %v255, 0.0
      %v310 = vmax.f32 %v256, 0.0
      %v311 = vmax.f32 %v257, 0.0
      %v312 = vmax.f32 %v258, 0.0
      %v313 = vmax.f32 %v259, 0.0
      %v314 = vmax.f32 %v260, 0.0
      %v315 = vmax.f32 %v261, 0.0
      %v316 = vmax.f32 %v262, 0.0
      %v317 = vmax.f32 %v263, 0.0
      %v318 = vmax.f32 %v264, 0.0
      %v319 = vmax.f32 %v265, 0.0
      %v320 = vmax.f32 %v266, 0.0
      %v321 = vmax.f32 %v267, 0.0
      %v322 = vmax.f32 %v268, 0.0
      %v323 = vmax.f32 %v269, 0.0
      %v324 = vmax.f32 %v270, 0.0
      %v325 = vmax.f32 %v271, 0.0
      %v326 = vmax.f32 %v272, 0.0
      %v327 = vmax.f32 %v273, 0.0
      %v328 = vmax.f32 %v274, 0.0
      %v329 = vmax.f32 %v275, 0.0
      %v330 = vmax.f32 %v276, 0.0
      %v331 = vmax.f32 %v277, 0.0
      %v332 = vmax.f32 %v278, 0.0
      %v333 = vmax.f32 %v279, 0.0
      %v334 = vmax.f32 %v280, 0.0
      %v335 = vmax.f32 %v281, 0.0
      %v336 = vmax.f32 %v282, 0.0
      %v337 = vld [vmem:[%s1] sm:$0xf]
      %vm386 = vcmask 1046528
      %v387 = vrot.slane %v283, 1
      %v388 = vrot.slane %v284, 1
      %v389 = vsel %vm386, %v387, %v388
      %v390 = vrot.slane %v285, 1
      %v391 = vsel %vm386, %v388, %v390
      %v392 = vrot.slane %v286, 1
      %v393 = vrot.slane %v287, 1
      %v394 = vsel %vm386, %v392, %v393
      %v395 = vrot.slane %v288, 1
      %v396 = vsel %vm386, %v393, %v395
      %v397 = vrot.slane %v289, 1
      %v398 = vrot.slane %v290, 1
      %v399 = vsel %vm386, %v397, %v398
      %v400 = vrot.slane %v291, 1
      %v401 = vsel %vm386, %v398, %v400
      %v402 = vrot.slane %v292, 1
      %v403 = vrot.slane %v293, 1
      %v404 = vsel %vm386, %v402, %v403
      %v405 = vrot.slane %v294, 1
      %v406 = vsel %vm386, %v403, %v405
      %v407 = vrot.slane %v295, 1
      %v408 = vrot.slane %v296, 1
      %v409 = vsel %vm386, %v407, %v408
      %v410 = vrot.slane %v297, 1
      %v411 = vsel %vm386, %v408, %v410
      %v412 = vrot.slane %v298, 1
      %v413 = vrot.slane %v299, 1
      %v414 = vsel %vm386, %v412, %v413
      %v415 = vrot.slane %v300, 1
      %v416 = vsel %vm386, %v413, %v415
      %v417 = vrot.slane %v301, 1
      %v418 = vrot.slane %v302, 1
      %v419 = vsel %vm386, %v417, %v418
      %v420 = vrot.slane %v303, 1
      %v421 = vsel %vm386, %v418, %v420
      %v422 = vrot.slane %v304, 1
      %v423 = vrot.slane %v305, 1
      %v424 = vsel %vm386, %v422, %v423
      %v425 = vrot.slane %v306, 1
      %v426 = vsel %vm386, %v423, %v425
      %v427 = vrot.slane %v307, 1
      %v428 = vrot.slane %v308, 1
      %v429 = vsel %vm386, %v427, %v428
      %v430 = vrot.slane %v309, 1
      %v431 = vsel %vm386, %v428, %v430
      %v432 = vrot.slane %v310, 1
      %v433 = vrot.slane %v311, 1
      %v434 = vsel %vm386, %v432, %v433
      %v435 = vrot.slane %v312, 1
      %v436 = vsel %vm386, %v433, %v435
      %v437 = vrot.slane %v313, 1
      %v438 = vrot.slane %v314, 1
      %v439 = vsel %vm386, %v437, %v438
      %v440 = vrot.slane %v315, 1
      %v441 = vsel %vm386, %v438, %v440
      %v442 = vrot.slane %v316, 1
      %v443 = vrot.slane %v317, 1
      %v444 = vsel %vm386, %v442, %v443
      %v445 = vrot.slane %v318, 1
      %v446 = vsel %vm386, %v443, %v445
      %v447 = vrot.slane %v319, 1
      %v448 = vrot.slane %v320, 1
      %v449 = vsel %vm386, %v447, %v448
      %v450 = vrot.slane %v321, 1
      %v451 = vsel %vm386, %v448, %v450
      %v452 = vrot.slane %v322, 1
      %v453 = vrot.slane %v323, 1
      %v454 = vsel %vm386, %v452, %v453
      %v455 = vrot.slane %v324, 1
      %v456 = vsel %vm386, %v453, %v455
      %v457 = vrot.slane %v325, 1
      %v458 = vrot.slane %v326, 1
      %v459 = vsel %vm386, %v457, %v458
      %v460 = vrot.slane %v327, 1
      %v461 = vsel %vm386, %v458, %v460
      %v462 = vrot.slane %v328, 1
      %v463 = vrot.slane %v329, 1
      %v464 = vsel %vm386, %v462, %v463
      %v465 = vrot.slane %v330, 1
      %v466 = vsel %vm386, %v463, %v465
      %s467 = scalar_lea.vmem %s1, 4
      %v468 = vld [vmem:[%s467] sm:$0xf]
      %vm469 = vcmask 31744
      %v470 = vsel %vm469, %v389, 0
      %v472 = vsel %vm469, %v391, 0
      %v474 = vsel %vm469, %v394, 0
      %v476 = vsel %vm469, %v396, 0
      %v478 = vsel %vm469, %v399, 0
      %v480 = vsel %vm469, %v401, 0
      %v482 = vsel %vm469, %v404, 0
      %v484 = vsel %vm469, %v406, 0
      %v486 = vsel %vm469, %v409, 0
      %v488 = vsel %vm469, %v411, 0
      %v490 = vsel %vm469, %v414, 0
      %v492 = vsel %vm469, %v416, 0
      %v494 = vsel %vm469, %v419, 0
      %v496 = vsel %vm469, %v421, 0
      %v498 = vsel %vm469, %v424, 0
      %v500 = vsel %vm469, %v426, 0
      %v502 = vsel %vm469, %v429, 0
      %v504 = vsel %vm469, %v431, 0
      %v506 = vsel %vm469, %v434, 0
      %v508 = vsel %vm469, %v436, 0
      %v510 = vsel %vm469, %v439, 0
      %v512 = vsel %vm469, %v441, 0
      %v514 = vsel %vm469, %v444, 0
      %v516 = vsel %vm469, %v446, 0
      %v518 = vsel %vm469, %v449, 0
      %v520 = vsel %vm469, %v451, 0
      %v522 = vsel %vm469, %v454, 0
      %v524 = vsel %vm469, %v456, 0
      %v526 = vsel %vm469, %v459, 0
      %v528 = vsel %vm469, %v461, 0
      %v530 = vsel %vm469, %v464, 0
      %v532 = vsel %vm469, %v466, 0
      %vm534 = vcmask 1043456
      %v536 = vsel %vm534, %v468, 0
      %538 = vmatpush.msra.mxu0 0.0
      %539 = vmatpush.msra.mxu0 0.0
      %540 = vmatpush.msra.mxu0 0.0
      %541 = vmatpush.msra.mxu0 0.0
      %542 = vmatpush.msra.mxu0 0.0
      %543 = vmatpush.msra.mxu0 0.0
      %544 = vmatpush.msra.mxu0 0.0
      %545 = vmatpush.msra.mxu0 0.0
      %546 = vmatpush.msra.mxu0 0.0
      %547 = vmatpush.msra.mxu0 0.0
      %548 = vmatpush.msra.mxu0 0.0
      %549 = vmatpush.msra.mxu0 0.0
      %550 = vmatpush.msra.mxu0 0.0
      %551 = vmatpush.msra.mxu0 0.0
      %552 = vmatpush.msra.mxu0 0.0
      %553 = vmatpush.msra.mxu0 %v536
      %554 = vmatmul.f32.gmra.mxu0 %v470
      %v555 = vpop.f32.mrf.mxu0
      %v556 = vadd.f32 0.0, %v555
      %557 = vmatmul.f32.gmra.mxu0 %v472
      %v558 = vpop.f32.mrf.mxu0
      %v559 = vadd.f32 0.0, %v558
      %560 = vmatmul.f32.gmra.mxu0 %v474
      %v561 = vpop.f32.mrf.mxu0
      %v562 = vadd.f32 0.0, %v561
      %563 = vmatmul.f32.gmra.mxu0 %v476
      %v564 = vpop.f32.mrf.mxu0
      %v565 = vadd.f32 0.0, %v564
      %566 = vmatmul.f32.gmra.mxu0 %v478
      %v567 = vpop.f32.mrf.mxu0
      %v568 = vadd.f32 0.0, %v567
      %569 = vmatmul.f32.gmra.mxu0 %v480
      %v570 = vpop.f32.mrf.mxu0
      %v571 = vadd.f32 0.0, %v570
      %572 = vmatmul.f32.gmra.mxu0 %v482
      %v573 = vpop.f32.mrf.mxu0
      %v574 = vadd.f32 0.0, %v573
      %575 = vmatmul.f32.gmra.mxu0 %v484
      %v576 = vpop.f32.mrf.mxu0
      %v577 = vadd.f32 0.0, %v576
      %578 = vmatmul.f32.gmra.mxu0 %v486
      %v579 = vpop.f32.mrf.mxu0
      %v580 = vadd.f32 0.0, %v579
      %581 = vmatmul.f32.gmra.mxu0 %v488
      %v582 = vpop.f32.mrf.mxu0
      %v583 = vadd.f32 0.0, %v582
      %584 = vmatmul.f32.gmra.mxu0 %v490
      %v585 = vpop.f32.mrf.mxu0
      %v586 = vadd.f32 0.0, %v585
      %587 = vmatmul.f32.gmra.mxu0 %v492
      %v588 = vpop.f32.mrf.mxu0
      %v589 = vadd.f32 0.0, %v588
      %590 = vmatmul.f32.gmra.mxu0 %v494
      %v591 = vpop.f32.mrf.mxu0
      %v592 = vadd.f32 0.0, %v591
      %593 = vmatmul.f32.gmra.mxu0 %v496
      %v594 = vpop.f32.mrf.mxu0
      %v595 = vadd.f32 0.0, %v594
      %596 = vmatmul.f32.gmra.mxu0 %v498
      %v597 = vpop.f32.mrf.mxu0
      %v598 = vadd.f32 0.0, %v597
      %599 = vmatmul.f32.gmra.mxu0 %v500
      %v600 = vpop.f32.mrf.mxu0
      %v601 = vadd.f32 0.0, %v600
      %602 = vmatmul.f32.gmra.mxu0 %v502
      %v603 = vpop.f32.mrf.mxu0
      %v604 = vadd.f32 0.0, %v603
      %605 = vmatmul.f32.gmra.mxu0 %v504
      %v606 = vpop.f32.mrf.mxu0
      %v607 = vadd.f32 0.0, %v606
      %608 = vmatmul.f32.gmra.mxu0 %v506
      %v609 = vpop.f32.mrf.mxu0
      %v610 = vadd.f32 0.0, %v609
      %611 = vmatmul.f32.gmra.mxu0 %v508
      %v612 = vpop.f32.mrf.mxu0
      %v613 = vadd.f32 0.0, %v612
      %614 = vmatmul.f32.gmra.mxu0 %v510
      %v615 = vpop.f32.mrf.mxu0
      %v616 = vadd.f32 0.0, %v615
      %617 = vmatmul.f32.gmra.mxu0 %v512
      %v618 = vpop.f32.mrf.mxu0
      %v619 = vadd.f32 0.0, %v618
      %620 = vmatmul.f32.gmra.mxu0 %v514
      %v621 = vpop.f32.mrf.mxu0
      %v622 = vadd.f32 0.0, %v621
      %623 = vmatmul.f32.gmra.mxu0 %v516
      %v624 = vpop.f32.mrf.mxu0
      %v625 = vadd.f32 0.0, %v624
      %626 = vmatmul.f32.gmra.mxu0 %v518
      %v627 = vpop.f32.mrf.mxu0
      %v628 = vadd.f32 0.0, %v627
      %629 = vmatmul.f32.gmra.mxu0 %v520
      %v630 = vpop.f32.mrf.mxu0
      %v631 = vadd.f32 0.0, %v630
      %632 = vmatmul.f32.gmra.mxu0 %v522
      %v633 = vpop.f32.mrf.mxu0
      %v634 = vadd.f32 0.0, %v633
      %635 = vmatmul.f32.gmra.mxu0 %v524
      %v636 = vpop.f32.mrf.mxu0
      %v637 = vadd.f32 0.0, %v636
      %638 = vmatmul.f32.gmra.mxu0 %v526
      %v639 = vpop.f32.mrf.mxu0
      %v640 = vadd.f32 0.0, %v639
      %641 = vmatmul.f32.gmra.mxu0 %v528
      %v642 = vpop.f32.mrf.mxu0
      %v643 = vadd.f32 0.0, %v642
      %644 = vmatmul.f32.gmra.mxu0 %v530
      %v645 = vpop.f32.mrf.mxu0
      %v646 = vadd.f32 0.0, %v645
      %647 = vmatmul.f32.gmra.mxu0 %v532
      %v648 = vpop.f32.mrf.mxu0
      %v649 = vadd.f32 0.0, %v648
      %650 = vdwg.mxu0
      %v651 = vsel %vm469, %v283, 0
      %v653 = vsel %vm469, %v284, 0
      %v655 = vsel %vm469, %v286, 0
      %v657 = vsel %vm469, %v287, 0
      %v659 = vsel %vm469, %v289, 0
      %v661 = vsel %vm469, %v290, 0
      %v663 = vsel %vm469, %v292, 0
      %v665 = vsel %vm469, %v293, 0
      %v667 = vsel %vm469, %v295, 0
      %v669 = vsel %vm469, %v296, 0
      %v671 = vsel %vm469, %v298, 0
      %v673 = vsel %vm469, %v299, 0
      %v675 = vsel %vm469, %v301, 0
      %v677 = vsel %vm469, %v302, 0
      %v679 = vsel %vm469, %v304, 0
      %v681 = vsel %vm469, %v305, 0
      %v683 = vsel %vm469, %v307, 0
      %v685 = vsel %vm469, %v308, 0
      %v687 = vsel %vm469, %v310, 0
      %v689 = vsel %vm469, %v311, 0
      %v691 = vsel %vm469, %v313, 0
      %v693 = vsel %vm469, %v314, 0
      %v695 = vsel %vm469, %v316, 0
      %v697 = vsel %vm469, %v317, 0
      %v699 = vsel %vm469, %v319, 0
      %v701 = vsel %vm469, %v320, 0
      %v703 = vsel %vm469, %v322, 0
      %v705 = vsel %vm469, %v323, 0
      %v707 = vsel %vm469, %v325, 0
      %v709 = vsel %vm469, %v326, 0
      %v711 = vsel %vm469, %v328, 0
      %v713 = vsel %vm469, %v329, 0
      %v716 = vsel %vm534, %v337, 0
      %718 = vmatpush.msra.mxu0 0.0
      %719 = vmatpush.msra.mxu0 0.0
      %720 = vmatpush.msra.mxu0 0.0
      %721 = vmatpush.msra.mxu0 0.0
      %722 = vmatpush.msra.mxu0 0.0
      %723 = vmatpush.msra.mxu0 0.0
      %724 = vmatpush.msra.mxu0 0.0
      %725 = vmatpush.msra.mxu0 0.0
      %726 = vmatpush.msra.mxu0 0.0
      %727 = vmatpush.msra.mxu0 0.0
      %728 = vmatpush.msra.mxu0 0.0
      %729 = vmatpush.msra.mxu0 0.0
      %730 = vmatpush.msra.mxu0 0.0
      %731 = vmatpush.msra.mxu0 0.0
      %732 = vmatpush.msra.mxu0 0.0
      %733 = vmatpush.msra.mxu0 %v716
      %734 = vmatmul.f32.gmra.mxu0 %v651
      %v735 = vpop.f32.mrf.mxu0
      %v736 = vadd.f32 %v556, %v735
      %737 = vmatmul.f32.gmra.mxu0 %v653
      %v738 = vpop.f32.mrf.mxu0
      %v739 = vadd.f32 %v559, %v738
      %740 = vmatmul.f32.gmra.mxu0 %v655
      %v741 = vpop.f32.mrf.mxu0
      %v742 = vadd.f32 %v562, %v741
      %743 = vmatmul.f32.gmra.mxu0 %v657
      %v744 = vpop.f32.mrf.mxu0
      %v745 = vadd.f32 %v565, %v744
      %746 = vmatmul.f32.gmra.mxu0 %v659
      %v747 = vpop.f32.mrf.mxu0
      %v748 = vadd.f32 %v568, %v747
      %749 = vmatmul.f32.gmra.mxu0 %v661
      %v750 = vpop.f32.mrf.mxu0
      %v751 = vadd.f32 %v571, %v750
      %752 = vmatmul.f32.gmra.mxu0 %v663
      %v753 = vpop.f32.mrf.mxu0
      %v754 = vadd.f32 %v574, %v753
      %755 = vmatmul.f32.gmra.mxu0 %v665
      %v756 = vpop.f32.mrf.mxu0
      %v757 = vadd.f32 %v577, %v756
      %758 = vmatmul.f32.gmra.mxu0 %v667
      %v759 = vpop.f32.mrf.mxu0
      %v760 = vadd.f32 %v580, %v759
      %761 = vmatmul.f32.gmra.mxu0 %v669
      %v762 = vpop.f32.mrf.mxu0
      %v763 = vadd.f32 %v583, %v762
      %764 = vmatmul.f32.gmra.mxu0 %v671
      %v765 = vpop.f32.mrf.mxu0
      %v766 = vadd.f32 %v586, %v765
      %767 = vmatmul.f32.gmra.mxu0 %v673
      %v768 = vpop.f32.mrf.mxu0
      %v769 = vadd.f32 %v589, %v768
      %770 = vmatmul.f32.gmra.mxu0 %v675
      %v771 = vpop.f32.mrf.mxu0
      %v772 = vadd.f32 %v592, %v771
      %773 = vmatmul.f32.gmra.mxu0 %v677
      %v774 = vpop.f32.mrf.mxu0
      %v775 = vadd.f32 %v595, %v774
      %776 = vmatmul.f32.gmra.mxu0 %v679
      %v777 = vpop.f32.mrf.mxu0
      %v778 = vadd.f32 %v598, %v777
      %779 = vmatmul.f32.gmra.mxu0 %v681
      %v780 = vpop.f32.mrf.mxu0
      %v781 = vadd.f32 %v601, %v780
      %782 = vmatmul.f32.gmra.mxu0 %v683
      %v783 = vpop.f32.mrf.mxu0
      %v784 = vadd.f32 %v604, %v783
      %785 = vmatmul.f32.gmra.mxu0 %v685
      %v786 = vpop.f32.mrf.mxu0
      %v787 = vadd.f32 %v607, %v786
      %788 = vmatmul.f32.gmra.mxu0 %v687
      %v789 = vpop.f32.mrf.mxu0
      %v790 = vadd.f32 %v610, %v789
      %791 = vmatmul.f32.gmra.mxu0 %v689
      %v792 = vpop.f32.mrf.mxu0
      %v793 = vadd.f32 %v613, %v792
      %794 = vmatmul.f32.gmra.mxu0 %v691
      %v795 = vpop.f32.mrf.mxu0
      %v796 = vadd.f32 %v616, %v795
      %797 = vmatmul.f32.gmra.mxu0 %v693
      %v798 = vpop.f32.mrf.mxu0
      %v799 = vadd.f32 %v619, %v798
      %800 = vmatmul.f32.gmra.mxu0 %v695
      %v801 = vpop.f32.mrf.mxu0
      %v802 = vadd.f32 %v622, %v801
      %803 = vmatmul.f32.gmra.mxu0 %v697
      %v804 = vpop.f32.mrf.mxu0
      %v805 = vadd.f32 %v625, %v804
      %806 = vmatmul.f32.gmra.mxu0 %v699
      %v807 = vpop.f32.mrf.mxu0
      %v808 = vadd.f32 %v628, %v807
      %809 = vmatmul.f32.gmra.mxu0 %v701
      %v810 = vpop.f32.mrf.mxu0
      %v811 = vadd.f32 %v631, %v810
      %812 = vmatmul.f32.gmra.mxu0 %v703
      %v813 = vpop.f32.mrf.mxu0
      %v814 = vadd.f32 %v634, %v813
      %815 = vmatmul.f32.gmra.mxu0 %v705
      %v816 = vpop.f32.mrf.mxu0
      %v817 = vadd.f32 %v637, %v816
      %818 = vmatmul.f32.gmra.mxu0 %v707
      %v819 = vpop.f32.mrf.mxu0
      %v820 = vadd.f32 %v640, %v819
      %821 = vmatmul.f32.gmra.mxu0 %v709
      %v822 = vpop.f32.mrf.mxu0
      %v823 = vadd.f32 %v643, %v822
      %824 = vmatmul.f32.gmra.mxu0 %v711
      %v825 = vpop.f32.mrf.mxu0
      %v826 = vadd.f32 %v646, %v825
      %827 = vmatmul.f32.gmra.mxu0 %v713
      %v828 = vpop.f32.mrf.mxu0
      %v829 = vadd.f32 %v649, %v828
      %830 = vdwg.mxu0
      %vm831 = vcmask 1045504
      %v832 = vrot.slane %v283, 2
      %v833 = vrot.slane %v284, 2
      %v834 = vsel %vm831, %v832, %v833
      %v835 = vrot.slane %v285, 2
      %v836 = vsel %vm831, %v833, %v835
      %v837 = vrot.slane %v286, 2
      %v838 = vrot.slane %v287, 2
      %v839 = vsel %vm831, %v837, %v838
      %v840 = vrot.slane %v288, 2
      %v841 = vsel %vm831, %v838, %v840
      %v842 = vrot.slane %v289, 2
      %v843 = vrot.slane %v290, 2
      %v844 = vsel %vm831, %v842, %v843
      %v845 = vrot.slane %v291, 2
      %v846 = vsel %vm831, %v843, %v845
      %v847 = vrot.slane %v292, 2
      %v848 = vrot.slane %v293, 2
      %v849 = vsel %vm831, %v847, %v848
      %v850 = vrot.slane %v294, 2
      %v851 = vsel %vm831, %v848, %v850
      %v852 = vrot.slane %v295, 2
      %v853 = vrot.slane %v296, 2
      %v854 = vsel %vm831, %v852, %v853
      %v855 = vrot.slane %v297, 2
      %v856 = vsel %vm831, %v853, %v855
      %v857 = vrot.slane %v298, 2
      %v858 = vrot.slane %v299, 2
      %v859 = vsel %vm831, %v857, %v858
      %v860 = vrot.slane %v300, 2
      %v861 = vsel %vm831, %v858, %v860
      %v862 = vrot.slane %v301, 2
      %v863 = vrot.slane %v302, 2
      %v864 = vsel %vm831, %v862, %v863
      %v865 = vrot.slane %v303, 2
      %v866 = vsel %vm831, %v863, %v865
      %v867 = vrot.slane %v304, 2
      %v868 = vrot.slane %v305, 2
      %v869 = vsel %vm831, %v867, %v868
      %v870 = vrot.slane %v306, 2
      %v871 = vsel %vm831, %v868, %v870
      %v872 = vrot.slane %v307, 2
      %v873 = vrot.slane %v308, 2
      %v874 = vsel %vm831, %v872, %v873
      %v875 = vrot.slane %v309, 2
      %v876 = vsel %vm831, %v873, %v875
      %v877 = vrot.slane %v310, 2
      %v878 = vrot.slane %v311, 2
      %v879 = vsel %vm831, %v877, %v878
      %v880 = vrot.slane %v312, 2
      %v881 = vsel %vm831, %v878, %v880
      %v882 = vrot.slane %v313, 2
      %v883 = vrot.slane %v314, 2
      %v884 = vsel %vm831, %v882, %v883
      %v885 = vrot.slane %v315, 2
      %v886 = vsel %vm831, %v883, %v885
      %v887 = vrot.slane %v316, 2
      %v888 = vrot.slane %v317, 2
      %v889 = vsel %vm831, %v887, %v888
      %v890 = vrot.slane %v318, 2
      %v891 = vsel %vm831, %v888, %v890
      %v892 = vrot.slane %v319, 2
      %v893 = vrot.slane %v320, 2
      %v894 = vsel %vm831, %v892, %v893
      %v895 = vrot.slane %v321, 2
      %v896 = vsel %vm831, %v893, %v895
      %v897 = vrot.slane %v322, 2
      %v898 = vrot.slane %v323, 2
      %v899 = vsel %vm831, %v897, %v898
      %v900 = vrot.slane %v324, 2
      %v901 = vsel %vm831, %v898, %v900
      %v902 = vrot.slane %v325, 2
      %v903 = vrot.slane %v326, 2
      %v904 = vsel %vm831, %v902, %v903
      %v905 = vrot.slane %v327, 2
      %v906 = vsel %vm831, %v903, %v905
      %v907 = vrot.slane %v328, 2
      %v908 = vrot.slane %v329, 2
      %v909 = vsel %vm831, %v907, %v908
      %v910 = vrot.slane %v330, 2
      %v911 = vsel %vm831, %v908, %v910
      %s912 = scalar_lea.vmem %s1, 8
      %v913 = vld [vmem:[%s912] sm:$0xf]
      %v914 = vsel %vm469, %v834, 0
      %v916 = vsel %vm469, %v836, 0
      %v918 = vsel %vm469, %v839, 0
      %v920 = vsel %vm469, %v841, 0
      %v922 = vsel %vm469, %v844, 0
      %v924 = vsel %vm469, %v846, 0
      %v926 = vsel %vm469, %v849, 0
      %v928 = vsel %vm469, %v851, 0
      %v930 = vsel %vm469, %v854, 0
      %v932 = vsel %vm469, %v856, 0
      %v934 = vsel %vm469, %v859, 0
      %v936 = vsel %vm469, %v861, 0
      %v938 = vsel %vm469, %v864, 0
      %v940 = vsel %vm469, %v866, 0
      %v942 = vsel %vm469, %v869, 0
      %v944 = vsel %vm469, %v871, 0
      %v946 = vsel %vm469, %v874, 0
      %v948 = vsel %vm469, %v876, 0
      %v950 = vsel %vm469, %v879, 0
      %v952 = vsel %vm469, %v881, 0
      %v954 = vsel %vm469, %v884, 0
      %v956 = vsel %vm469, %v886, 0
      %v958 = vsel %vm469, %v889, 0
      %v960 = vsel %vm469, %v891, 0
      %v962 = vsel %vm469, %v894, 0
      %v964 = vsel %vm469, %v896, 0
      %v966 = vsel %vm469, %v899, 0
      %v968 = vsel %vm469, %v901, 0
      %v970 = vsel %vm469, %v904, 0
      %v972 = vsel %vm469, %v906, 0
      %v974 = vsel %vm469, %v909, 0
      %v976 = vsel %vm469, %v911, 0
      %v979 = vsel %vm534, %v913, 0
      %981 = vmatpush.msra.mxu0 0.0
      %982 = vmatpush.msra.mxu0 0.0
      %983 = vmatpush.msra.mxu0 0.0
      %984 = vmatpush.msra.mxu0 0.0
      %985 = vmatpush.msra.mxu0 0.0
      %986 = vmatpush.msra.mxu0 0.0
      %987 = vmatpush.msra.mxu0 0.0
      %988 = vmatpush.msra.mxu0 0.0
      %989 = vmatpush.msra.mxu0 0.0
      %990 = vmatpush.msra.mxu0 0.0
      %991 = vmatpush.msra.mxu0 0.0
      %992 = vmatpush.msra.mxu0 0.0
      %993 = vmatpush.msra.mxu0 0.0
      %994 = vmatpush.msra.mxu0 0.0
      %995 = vmatpush.msra.mxu0 0.0
      %996 = vmatpush.msra.mxu0 %v979
      %997 = vmatmul.f32.gmra.mxu0 %v914
      %v998 = vpop.f32.mrf.mxu0
      %v999 = vadd.f32 0.0, %v998
      %1000 = vmatmul.f32.gmra.mxu0 %v916
      %v1001 = vpop.f32.mrf.mxu0
      %v1002 = vadd.f32 0.0, %v1001
      %1003 = vmatmul.f32.gmra.mxu0 %v918
      %v1004 = vpop.f32.mrf.mxu0
      %v1005 = vadd.f32 0.0, %v1004
      %1006 = vmatmul.f32.gmra.mxu0 %v920
      %v1007 = vpop.f32.mrf.mxu0
      %v1008 = vadd.f32 0.0, %v1007
      %1009 = vmatmul.f32.gmra.mxu0 %v922
      %v1010 = vpop.f32.mrf.mxu0
      %v1011 = vadd.f32 0.0, %v1010
      %1012 = vmatmul.f32.gmra.mxu0 %v924
      %v1013 = vpop.f32.mrf.mxu0
      %v1014 = vadd.f32 0.0, %v1013
      %1015 = vmatmul.f32.gmra.mxu0 %v926
      %v1016 = vpop.f32.mrf.mxu0
      %v1017 = vadd.f32 0.0, %v1016
      %1018 = vmatmul.f32.gmra.mxu0 %v928
      %v1019 = vpop.f32.mrf.mxu0
      %v1020 = vadd.f32 0.0, %v1019
      %1021 = vmatmul.f32.gmra.mxu0 %v930
      %v1022 = vpop.f32.mrf.mxu0
      %v1023 = vadd.f32 0.0, %v1022
      %1024 = vmatmul.f32.gmra.mxu0 %v932
      %v1025 = vpop.f32.mrf.mxu0
      %v1026 = vadd.f32 0.0, %v1025
      %1027 = vmatmul.f32.gmra.mxu0 %v934
      %v1028 = vpop.f32.mrf.mxu0
      %v1029 = vadd.f32 0.0, %v1028
      %1030 = vmatmul.f32.gmra.mxu0 %v936
      %v1031 = vpop.f32.mrf.mxu0
      %v1032 = vadd.f32 0.0, %v1031
      %1033 = vmatmul.f32.gmra.mxu0 %v938
      %v1034 = vpop.f32.mrf.mxu0
      %v1035 = vadd.f32 0.0, %v1034
      %1036 = vmatmul.f32.gmra.mxu0 %v940
      %v1037 = vpop.f32.mrf.mxu0
      %v1038 = vadd.f32 0.0, %v1037
      %1039 = vmatmul.f32.gmra.mxu0 %v942
      %v1040 = vpop.f32.mrf.mxu0
      %v1041 = vadd.f32 0.0, %v1040
      %1042 = vmatmul.f32.gmra.mxu0 %v944
      %v1043 = vpop.f32.mrf.mxu0
      %v1044 = vadd.f32 0.0, %v1043
      %1045 = vmatmul.f32.gmra.mxu0 %v946
      %v1046 = vpop.f32.mrf.mxu0
      %v1047 = vadd.f32 0.0, %v1046
      %1048 = vmatmul.f32.gmra.mxu0 %v948
      %v1049 = vpop.f32.mrf.mxu0
      %v1050 = vadd.f32 0.0, %v1049
      %1051 = vmatmul.f32.gmra.mxu0 %v950
      %v1052 = vpop.f32.mrf.mxu0
      %v1053 = vadd.f32 0.0, %v1052
      %1054 = vmatmul.f32.gmra.mxu0 %v952
      %v1055 = vpop.f32.mrf.mxu0
      %v1056 = vadd.f32 0.0, %v1055
      %1057 = vmatmul.f32.gmra.mxu0 %v954
      %v1058 = vpop.f32.mrf.mxu0
      %v1059 = vadd.f32 0.0, %v1058
      %1060 = vmatmul.f32.gmra.mxu0 %v956
      %v1061 = vpop.f32.mrf.mxu0
      %v1062 = vadd.f32 0.0, %v1061
      %1063 = vmatmul.f32.gmra.mxu0 %v958
      %v1064 = vpop.f32.mrf.mxu0
      %v1065 = vadd.f32 0.0, %v1064
      %1066 = vmatmul.f32.gmra.mxu0 %v960
      %v1067 = vpop.f32.mrf.mxu0
      %v1068 = vadd.f32 0.0, %v1067
      %1069 = vmatmul.f32.gmra.mxu0 %v962
      %v1070 = vpop.f32.mrf.mxu0
      %v1071 = vadd.f32 0.0, %v1070
      %1072 = vmatmul.f32.gmra.mxu0 %v964
      %v1073 = vpop.f32.mrf.mxu0
      %v1074 = vadd.f32 0.0, %v1073
      %1075 = vmatmul.f32.gmra.mxu0 %v966
      %v1076 = vpop.f32.mrf.mxu0
      %v1077 = vadd.f32 0.0, %v1076
      %1078 = vmatmul.f32.gmra.mxu0 %v968
      %v1079 = vpop.f32.mrf.mxu0
      %v1080 = vadd.f32 0.0, %v1079
      %1081 = vmatmul.f32.gmra.mxu0 %v970
      %v1082 = vpop.f32.mrf.mxu0
      %v1083 = vadd.f32 0.0, %v1082
      %1084 = vmatmul.f32.gmra.mxu0 %v972
      %v1085 = vpop.f32.mrf.mxu0
      %v1086 = vadd.f32 0.0, %v1085
      %1087 = vmatmul.f32.gmra.mxu0 %v974
      %v1088 = vpop.f32.mrf.mxu0
      %v1089 = vadd.f32 0.0, %v1088
      %1090 = vmatmul.f32.gmra.mxu0 %v976
      %v1091 = vpop.f32.mrf.mxu0
      %v1092 = vadd.f32 0.0, %v1091
      %1093 = vdwg.mxu0
      %v1094 = vadd.f32 %v736, %v999
      %v1095 = vadd.f32 %v739, %v1002
      %v1096 = vadd.f32 %v742, %v1005
      %v1097 = vadd.f32 %v745, %v1008
      %v1098 = vadd.f32 %v748, %v1011
      %v1099 = vadd.f32 %v751, %v1014
      %v1100 = vadd.f32 %v754, %v1017
      %v1101 = vadd.f32 %v757, %v1020
      %v1102 = vadd.f32 %v760, %v1023
      %v1103 = vadd.f32 %v763, %v1026
      %v1104 = vadd.f32 %v766, %v1029
      %v1105 = vadd.f32 %v769, %v1032
      %v1106 = vadd.f32 %v772, %v1035
      %v1107 = vadd.f32 %v775, %v1038
      %v1108 = vadd.f32 %v778, %v1041
      %v1109 = vadd.f32 %v781, %v1044
      %v1110 = vadd.f32 %v784, %v1047
      %v1111 = vadd.f32 %v787, %v1050
      %v1112 = vadd.f32 %v790, %v1053
      %v1113 = vadd.f32 %v793, %v1056
      %v1114 = vadd.f32 %v796, %v1059
      %v1115 = vadd.f32 %v799, %v1062
      %v1116 = vadd.f32 %v802, %v1065
      %v1117 = vadd.f32 %v805, %v1068
      %v1118 = vadd.f32 %v808, %v1071
      %v1119 = vadd.f32 %v811, %v1074
      %v1120 = vadd.f32 %v814, %v1077
      %v1121 = vadd.f32 %v817, %v1080
      %v1122 = vadd.f32 %v820, %v1083
      %v1123 = vadd.f32 %v823, %v1086
      %v1124 = vadd.f32 %v826, %v1089
      %v1125 = vadd.f32 %v829, %v1092
      %s1126 = scalar_lea.vmem %s1, 12
      %v1127 = vld [vmem:[%s1126] sm:$0xf]
      %v1129 = vsel %vm469, %v331, 0
      %v1132 = vsel %vm469, %v332, 0
      %v1135 = vsel %vm534, %v1127, 0
      %1137 = vmatpush.msra.mxu0 0.0
      %1138 = vmatpush.msra.mxu0 0.0
      %1139 = vmatpush.msra.mxu0 0.0
      %1140 = vmatpush.msra.mxu0 0.0
      %1141 = vmatpush.msra.mxu0 0.0
      %1142 = vmatpush.msra.mxu0 0.0
      %1143 = vmatpush.msra.mxu0 0.0
      %1144 = vmatpush.msra.mxu0 0.0
      %1145 = vmatpush.msra.mxu0 0.0
      %1146 = vmatpush.msra.mxu0 0.0
      %1147 = vmatpush.msra.mxu0 0.0
      %1148 = vmatpush.msra.mxu0 0.0
      %1149 = vmatpush.msra.mxu0 0.0
      %1150 = vmatpush.msra.mxu0 0.0
      %1151 = vmatpush.msra.mxu0 0.0
      %1152 = vmatpush.msra.mxu0 %v1135
      %1153 = vmatmul.f32.gmra.mxu0 %v655
      %v1154 = vpop.f32.mrf.mxu0
      %v1155 = vadd.f32 0.0, %v1154
      %1156 = vmatmul.f32.gmra.mxu0 %v657
      %v1157 = vpop.f32.mrf.mxu0
      %v1158 = vadd.f32 0.0, %v1157
      %1159 = vmatmul.f32.gmra.mxu0 %v659
      %v1160 = vpop.f32.mrf.mxu0
      %v1161 = vadd.f32 0.0, %v1160
      %1162 = vmatmul.f32.gmra.mxu0 %v661
      %v1163 = vpop.f32.mrf.mxu0
      %v1164 = vadd.f32 0.0, %v1163
      %1165 = vmatmul.f32.gmra.mxu0 %v663
      %v1166 = vpop.f32.mrf.mxu0
      %v1167 = vadd.f32 0.0, %v1166
      %1168 = vmatmul.f32.gmra.mxu0 %v665
      %v1169 = vpop.f32.mrf.mxu0
      %v1170 = vadd.f32 0.0, %v1169
      %1171 = vmatmul.f32.gmra.mxu0 %v667
      %v1172 = vpop.f32.mrf.mxu0
      %v1173 = vadd.f32 0.0, %v1172
      %1174 = vmatmul.f32.gmra.mxu0 %v669
      %v1175 = vpop.f32.mrf.mxu0
      %v1176 = vadd.f32 0.0, %v1175
      %1177 = vmatmul.f32.gmra.mxu0 %v671
      %v1178 = vpop.f32.mrf.mxu0
      %v1179 = vadd.f32 0.0, %v1178
      %1180 = vmatmul.f32.gmra.mxu0 %v673
      %v1181 = vpop.f32.mrf.mxu0
      %v1182 = vadd.f32 0.0, %v1181
      %1183 = vmatmul.f32.gmra.mxu0 %v675
      %v1184 = vpop.f32.mrf.mxu0
      %v1185 = vadd.f32 0.0, %v1184
      %1186 = vmatmul.f32.gmra.mxu0 %v677
      %v1187 = vpop.f32.mrf.mxu0
      %v1188 = vadd.f32 0.0, %v1187
      %1189 = vmatmul.f32.gmra.mxu0 %v679
      %v1190 = vpop.f32.mrf.mxu0
      %v1191 = vadd.f32 0.0, %v1190
      %1192 = vmatmul.f32.gmra.mxu0 %v681
      %v1193 = vpop.f32.mrf.mxu0
      %v1194 = vadd.f32 0.0, %v1193
      %1195 = vmatmul.f32.gmra.mxu0 %v683
      %v1196 = vpop.f32.mrf.mxu0
      %v1197 = vadd.f32 0.0, %v1196
      %1198 = vmatmul.f32.gmra.mxu0 %v685
      %v1199 = vpop.f32.mrf.mxu0
      %v1200 = vadd.f32 0.0, %v1199
      %1201 = vmatmul.f32.gmra.mxu0 %v687
      %v1202 = vpop.f32.mrf.mxu0
      %v1203 = vadd.f32 0.0, %v1202
      %1204 = vmatmul.f32.gmra.mxu0 %v689
      %v1205 = vpop.f32.mrf.mxu0
      %v1206 = vadd.f32 0.0, %v1205
      %1207 = vmatmul.f32.gmra.mxu0 %v691
      %v1208 = vpop.f32.mrf.mxu0
      %v1209 = vadd.f32 0.0, %v1208
      %1210 = vmatmul.f32.gmra.mxu0 %v693
      %v1211 = vpop.f32.mrf.mxu0
      %v1212 = vadd.f32 0.0, %v1211
      %1213 = vmatmul.f32.gmra.mxu0 %v695
      %v1214 = vpop.f32.mrf.mxu0
      %v1215 = vadd.f32 0.0, %v1214
      %1216 = vmatmul.f32.gmra.mxu0 %v697
      %v1217 = vpop.f32.mrf.mxu0
      %v1218 = vadd.f32 0.0, %v1217
      %1219 = vmatmul.f32.gmra.mxu0 %v699
      %v1220 = vpop.f32.mrf.mxu0
      %v1221 = vadd.f32 0.0, %v1220
      %1222 = vmatmul.f32.gmra.mxu0 %v701
      %v1223 = vpop.f32.mrf.mxu0
      %v1224 = vadd.f32 0.0, %v1223
      %1225 = vmatmul.f32.gmra.mxu0 %v703
      %v1226 = vpop.f32.mrf.mxu0
      %v1227 = vadd.f32 0.0, %v1226
      %1228 = vmatmul.f32.gmra.mxu0 %v705
      %v1229 = vpop.f32.mrf.mxu0
      %v1230 = vadd.f32 0.0, %v1229
      %1231 = vmatmul.f32.gmra.mxu0 %v707
      %v1232 = vpop.f32.mrf.mxu0
      %v1233 = vadd.f32 0.0, %v1232
      %1234 = vmatmul.f32.gmra.mxu0 %v709
      %v1235 = vpop.f32.mrf.mxu0
      %v1236 = vadd.f32 0.0, %v1235
      %1237 = vmatmul.f32.gmra.mxu0 %v711
      %v1238 = vpop.f32.mrf.mxu0
      %v1239 = vadd.f32 0.0, %v1238
      %1240 = vmatmul.f32.gmra.mxu0 %v713
      %v1241 = vpop.f32.mrf.mxu0
      %v1242 = vadd.f32 0.0, %v1241
      %1243 = vmatmul.f32.gmra.mxu0 %v1129
      %v1244 = vpop.f32.mrf.mxu0
      %v1245 = vadd.f32 0.0, %v1244
      %1246 = vmatmul.f32.gmra.mxu0 %v1132
      %v1247 = vpop.f32.mrf.mxu0
      %v1248 = vadd.f32 0.0, %v1247
      %1249 = vdwg.mxu0
      %v1250 = vadd.f32 %v1094, %v1155
      %v1251 = vadd.f32 %v1095, %v1158
      %v1252 = vadd.f32 %v1096, %v1161
      %v1253 = vadd.f32 %v1097, %v1164
      %v1254 = vadd.f32 %v1098, %v1167
      %v1255 = vadd.f32 %v1099, %v1170
      %v1256 = vadd.f32 %v1100, %v1173
      %v1257 = vadd.f32 %v1101, %v1176
      %v1258 = vadd.f32 %v1102, %v1179
      %v1259 = vadd.f32 %v1103, %v1182
      %v1260 = vadd.f32 %v1104, %v1185
      %v1261 = vadd.f32 %v1105, %v1188
      %v1262 = vadd.f32 %v1106, %v1191
      %v1263 = vadd.f32 %v1107, %v1194
      %v1264 = vadd.f32 %v1108, %v1197
      %v1265 = vadd.f32 %v1109, %v1200
      %v1266 = vadd.f32 %v1110, %v1203
      %v1267 = vadd.f32 %v1111, %v1206
      %v1268 = vadd.f32 %v1112, %v1209
      %v1269 = vadd.f32 %v1113, %v1212
      %v1270 = vadd.f32 %v1114, %v1215
      %v1271 = vadd.f32 %v1115, %v1218
      %v1272 = vadd.f32 %v1116, %v1221
      %v1273 = vadd.f32 %v1117, %v1224
      %v1274 = vadd.f32 %v1118, %v1227
      %v1275 = vadd.f32 %v1119, %v1230
      %v1276 = vadd.f32 %v1120, %v1233
      %v1277 = vadd.f32 %v1121, %v1236
      %v1278 = vadd.f32 %v1122, %v1239
      %v1279 = vadd.f32 %v1123, %v1242
      %v1280 = vadd.f32 %v1124, %v1245
      %v1281 = vadd.f32 %v1125, %v1248
      %v1283 = vrot.slane %v331, 1
      %v1284 = vrot.slane %v332, 1
      %v1285 = vsel %vm386, %v1283, %v1284
      %v1286 = vrot.slane %v333, 1
      %v1287 = vsel %vm386, %v1284, %v1286
      %s1288 = scalar_lea.vmem %s1, 16
      %v1289 = vld [vmem:[%s1288] sm:$0xf]
      %v1290 = vsel %vm469, %v1285, 0
      %v1292 = vsel %vm469, %v1287, 0
      %v1295 = vsel %vm534, %v1289, 0
      %1297 = vmatpush.msra.mxu0 0.0
      %1298 = vmatpush.msra.mxu0 0.0
      %1299 = vmatpush.msra.mxu0 0.0
      %1300 = vmatpush.msra.mxu0 0.0
      %1301 = vmatpush.msra.mxu0 0.0
      %1302 = vmatpush.msra.mxu0 0.0
      %1303 = vmatpush.msra.mxu0 0.0
      %1304 = vmatpush.msra.mxu0 0.0
      %1305 = vmatpush.msra.mxu0 0.0
      %1306 = vmatpush.msra.mxu0 0.0
      %1307 = vmatpush.msra.mxu0 0.0
      %1308 = vmatpush.msra.mxu0 0.0
      %1309 = vmatpush.msra.mxu0 0.0
      %1310 = vmatpush.msra.mxu0 0.0
      %1311 = vmatpush.msra.mxu0 0.0
      %1312 = vmatpush.msra.mxu0 %v1295
      %1313 = vmatmul.f32.gmra.mxu0 %v474
      %v1314 = vpop.f32.mrf.mxu0
      %v1315 = vadd.f32 0.0, %v1314
      %1316 = vmatmul.f32.gmra.mxu0 %v476
      %v1317 = vpop.f32.mrf.mxu0
      %v1318 = vadd.f32 0.0, %v1317
      %1319 = vmatmul.f32.gmra.mxu0 %v478
      %v1320 = vpop.f32.mrf.mxu0
      %v1321 = vadd.f32 0.0, %v1320
      %1322 = vmatmul.f32.gmra.mxu0 %v480
      %v1323 = vpop.f32.mrf.mxu0
      %v1324 = vadd.f32 0.0, %v1323
      %1325 = vmatmul.f32.gmra.mxu0 %v482
      %v1326 = vpop.f32.mrf.mxu0
      %v1327 = vadd.f32 0.0, %v1326
      %1328 = vmatmul.f32.gmra.mxu0 %v484
      %v1329 = vpop.f32.mrf.mxu0
      %v1330 = vadd.f32 0.0, %v1329
      %1331 = vmatmul.f32.gmra.mxu0 %v486
      %v1332 = vpop.f32.mrf.mxu0
      %v1333 = vadd.f32 0.0, %v1332
      %1334 = vmatmul.f32.gmra.mxu0 %v488
      %v1335 = vpop.f32.mrf.mxu0
      %v1336 = vadd.f32 0.0, %v1335
      %1337 = vmatmul.f32.gmra.mxu0 %v490
      %v1338 = vpop.f32.mrf.mxu0
      %v1339 = vadd.f32 0.0, %v1338
      %1340 = vmatmul.f32.gmra.mxu0 %v492
      %v1341 = vpop.f32.mrf.mxu0
      %v1342 = vadd.f32 0.0, %v1341
      %1343 = vmatmul.f32.gmra.mxu0 %v494
      %v1344 = vpop.f32.mrf.mxu0
      %v1345 = vadd.f32 0.0, %v1344
      %1346 = vmatmul.f32.gmra.mxu0 %v496
      %v1347 = vpop.f32.mrf.mxu0
      %v1348 = vadd.f32 0.0, %v1347
      %1349 = vmatmul.f32.gmra.mxu0 %v498
      %v1350 = vpop.f32.mrf.mxu0
      %v1351 = vadd.f32 0.0, %v1350
      %1352 = vmatmul.f32.gmra.mxu0 %v500
      %v1353 = vpop.f32.mrf.mxu0
      %v1354 = vadd.f32 0.0, %v1353
      %1355 = vmatmul.f32.gmra.mxu0 %v502
      %v1356 = vpop.f32.mrf.mxu0
      %v1357 = vadd.f32 0.0, %v1356
      %1358 = vmatmul.f32.gmra.mxu0 %v504
      %v1359 = vpop.f32.mrf.mxu0
      %v1360 = vadd.f32 0.0, %v1359
      %1361 = vmatmul.f32.gmra.mxu0 %v506
      %v1362 = vpop.f32.mrf.mxu0
      %v1363 = vadd.f32 0.0, %v1362
      %1364 = vmatmul.f32.gmra.mxu0 %v508
      %v1365 = vpop.f32.mrf.mxu0
      %v1366 = vadd.f32 0.0, %v1365
      %1367 = vmatmul.f32.gmra.mxu0 %v510
      %v1368 = vpop.f32.mrf.mxu0
      %v1369 = vadd.f32 0.0, %v1368
      %1370 = vmatmul.f32.gmra.mxu0 %v512
      %v1371 = vpop.f32.mrf.mxu0
      %v1372 = vadd.f32 0.0, %v1371
      %1373 = vmatmul.f32.gmra.mxu0 %v514
      %v1374 = vpop.f32.mrf.mxu0
      %v1375 = vadd.f32 0.0, %v1374
      %1376 = vmatmul.f32.gmra.mxu0 %v516
      %v1377 = vpop.f32.mrf.mxu0
      %v1378 = vadd.f32 0.0, %v1377
      %1379 = vmatmul.f32.gmra.mxu0 %v518
      %v1380 = vpop.f32.mrf.mxu0
      %v1381 = vadd.f32 0.0, %v1380
      %1382 = vmatmul.f32.gmra.mxu0 %v520
      %v1383 = vpop.f32.mrf.mxu0
      %v1384 = vadd.f32 0.0, %v1383
      %1385 = vmatmul.f32.gmra.mxu0 %v522
      %v1386 = vpop.f32.mrf.mxu0
      %v1387 = vadd.f32 0.0, %v1386
      %1388 = vmatmul.f32.gmra.mxu0 %v524
      %v1389 = vpop.f32.mrf.mxu0
      %v1390 = vadd.f32 0.0, %v1389
      %1391 = vmatmul.f32.gmra.mxu0 %v526
      %v1392 = vpop.f32.mrf.mxu0
      %v1393 = vadd.f32 0.0, %v1392
      %1394 = vmatmul.f32.gmra.mxu0 %v528
      %v1395 = vpop.f32.mrf.mxu0
      %v1396 = vadd.f32 0.0, %v1395
      %1397 = vmatmul.f32.gmra.mxu0 %v530
      %v1398 = vpop.f32.mrf.mxu0
      %v1399 = vadd.f32 0.0, %v1398
      %1400 = vmatmul.f32.gmra.mxu0 %v532
      %v1401 = vpop.f32.mrf.mxu0
      %v1402 = vadd.f32 0.0, %v1401
      %1403 = vmatmul.f32.gmra.mxu0 %v1290
      %v1404 = vpop.f32.mrf.mxu0
      %v1405 = vadd.f32 0.0, %v1404
      %1406 = vmatmul.f32.gmra.mxu0 %v1292
      %v1407 = vpop.f32.mrf.mxu0
      %v1408 = vadd.f32 0.0, %v1407
      %1409 = vdwg.mxu0
      %v1410 = vadd.f32 %v1250, %v1315
      %v1411 = vadd.f32 %v1251, %v1318
      %v1412 = vadd.f32 %v1252, %v1321
      %v1413 = vadd.f32 %v1253, %v1324
      %v1414 = vadd.f32 %v1254, %v1327
      %v1415 = vadd.f32 %v1255, %v1330
      %v1416 = vadd.f32 %v1256, %v1333
      %v1417 = vadd.f32 %v1257, %v1336
      %v1418 = vadd.f32 %v1258, %v1339
      %v1419 = vadd.f32 %v1259, %v1342
      %v1420 = vadd.f32 %v1260, %v1345
      %v1421 = vadd.f32 %v1261, %v1348
      %v1422 = vadd.f32 %v1262, %v1351
      %v1423 = vadd.f32 %v1263, %v1354
      %v1424 = vadd.f32 %v1264, %v1357
      %v1425 = vadd.f32 %v1265, %v1360
      %v1426 = vadd.f32 %v1266, %v1363
      %v1427 = vadd.f32 %v1267, %v1366
      %v1428 = vadd.f32 %v1268, %v1369
      %v1429 = vadd.f32 %v1269, %v1372
      %v1430 = vadd.f32 %v1270, %v1375
      %v1431 = vadd.f32 %v1271, %v1378
      %v1432 = vadd.f32 %v1272, %v1381
      %v1433 = vadd.f32 %v1273, %v1384
      %v1434 = vadd.f32 %v1274, %v1387
      %v1435 = vadd.f32 %v1275, %v1390
      %v1436 = vadd.f32 %v1276, %v1393
      %v1437 = vadd.f32 %v1277, %v1396
      %v1438 = vadd.f32 %v1278, %v1399
      %v1439 = vadd.f32 %v1279, %v1402
      %v1440 = vadd.f32 %v1280, %v1405
      %v1441 = vadd.f32 %v1281, %v1408
      %v1442 = vrot.slane %v331, 2
      %v1443 = vrot.slane %v332, 2
      %v1444 = vsel %vm831, %v1442, %v1443
      %v1445 = vrot.slane %v333, 2
      %v1446 = vsel %vm831, %v1443, %v1445
      %s1447 = scalar_lea.vmem %s1, 20
      %v1448 = vld [vmem:[%s1447] sm:$0xf]
      %v1449 = vsel %vm469, %v1444, 0
      %v1451 = vsel %vm469, %v1446, 0
      %v1454 = vsel %vm534, %v1448, 0
      %1456 = vmatpush.msra.mxu0 0.0
      %1457 = vmatpush.msra.mxu0 0.0
      %1458 = vmatpush.msra.mxu0 0.0
      %1459 = vmatpush.msra.mxu0 0.0
      %1460 = vmatpush.msra.mxu0 0.0
      %1461 = vmatpush.msra.mxu0 0.0
      %1462 = vmatpush.msra.mxu0 0.0
      %1463 = vmatpush.msra.mxu0 0.0
      %1464 = vmatpush.msra.mxu0 0.0
      %1465 = vmatpush.msra.mxu0 0.0
      %1466 = vmatpush.msra.mxu0 0.0
      %1467 = vmatpush.msra.mxu0 0.0
      %1468 = vmatpush.msra.mxu0 0.0
      %1469 = vmatpush.msra.mxu0 0.0
      %1470 = vmatpush.msra.mxu0 0.0
      %1471 = vmatpush.msra.mxu0 %v1454
      %1472 = vmatmul.f32.gmra.mxu0 %v918
      %v1473 = vpop.f32.mrf.mxu0
      %v1474 = vadd.f32 0.0, %v1473
      %1475 = vmatmul.f32.gmra.mxu0 %v920
      %v1476 = vpop.f32.mrf.mxu0
      %v1477 = vadd.f32 0.0, %v1476
      %1478 = vmatmul.f32.gmra.mxu0 %v922
      %v1479 = vpop.f32.mrf.mxu0
      %v1480 = vadd.f32 0.0, %v1479
      %1481 = vmatmul.f32.gmra.mxu0 %v924
      %v1482 = vpop.f32.mrf.mxu0
      %v1483 = vadd.f32 0.0, %v1482
      %1484 = vmatmul.f32.gmra.mxu0 %v926
      %v1485 = vpop.f32.mrf.mxu0
      %v1486 = vadd.f32 0.0, %v1485
      %1487 = vmatmul.f32.gmra.mxu0 %v928
      %v1488 = vpop.f32.mrf.mxu0
      %v1489 = vadd.f32 0.0, %v1488
      %1490 = vmatmul.f32.gmra.mxu0 %v930
      %v1491 = vpop.f32.mrf.mxu0
      %v1492 = vadd.f32 0.0, %v1491
      %1493 = vmatmul.f32.gmra.mxu0 %v932
      %v1494 = vpop.f32.mrf.mxu0
      %v1495 = vadd.f32 0.0, %v1494
      %1496 = vmatmul.f32.gmra.mxu0 %v934
      %v1497 = vpop.f32.mrf.mxu0
      %v1498 = vadd.f32 0.0, %v1497
      %1499 = vmatmul.f32.gmra.mxu0 %v936
      %v1500 = vpop.f32.mrf.mxu0
      %v1501 = vadd.f32 0.0, %v1500
      %1502 = vmatmul.f32.gmra.mxu0 %v938
      %v1503 = vpop.f32.mrf.mxu0
      %v1504 = vadd.f32 0.0, %v1503
      %1505 = vmatmul.f32.gmra.mxu0 %v940
      %v1506 = vpop.f32.mrf.mxu0
      %v1507 = vadd.f32 0.0, %v1506
      %1508 = vmatmul.f32.gmra.mxu0 %v942
      %v1509 = vpop.f32.mrf.mxu0
      %v1510 = vadd.f32 0.0, %v1509
      %1511 = vmatmul.f32.gmra.mxu0 %v944
      %v1512 = vpop.f32.mrf.mxu0
      %v1513 = vadd.f32 0.0, %v1512
      %1514 = vmatmul.f32.gmra.mxu0 %v946
      %v1515 = vpop.f32.mrf.mxu0
      %v1516 = vadd.f32 0.0, %v1515
      %1517 = vmatmul.f32.gmra.mxu0 %v948
      %v1518 = vpop.f32.mrf.mxu0
      %v1519 = vadd.f32 0.0, %v1518
      %1520 = vmatmul.f32.gmra.mxu0 %v950
      %v1521 = vpop.f32.mrf.mxu0
      %v1522 = vadd.f32 0.0, %v1521
      %1523 = vmatmul.f32.gmra.mxu0 %v952
      %v1524 = vpop.f32.mrf.mxu0
      %v1525 = vadd.f32 0.0, %v1524
      %1526 = vmatmul.f32.gmra.mxu0 %v954
      %v1527 = vpop.f32.mrf.mxu0
      %v1528 = vadd.f32 0.0, %v1527
      %1529 = vmatmul.f32.gmra.mxu0 %v956
      %v1530 = vpop.f32.mrf.mxu0
      %v1531 = vadd.f32 0.0, %v1530
      %1532 = vmatmul.f32.gmra.mxu0 %v958
      %v1533 = vpop.f32.mrf.mxu0
      %v1534 = vadd.f32 0.0, %v1533
      %1535 = vmatmul.f32.gmra.mxu0 %v960
      %v1536 = vpop.f32.mrf.mxu0
      %v1537 = vadd.f32 0.0, %v1536
      %1538 = vmatmul.f32.gmra.mxu0 %v962
      %v1539 = vpop.f32.mrf.mxu0
      %v1540 = vadd.f32 0.0, %v1539
      %1541 = vmatmul.f32.gmra.mxu0 %v964
      %v1542 = vpop.f32.mrf.mxu0
      %v1543 = vadd.f32 0.0, %v1542
      %1544 = vmatmul.f32.gmra.mxu0 %v966
      %v1545 = vpop.f32.mrf.mxu0
      %v1546 = vadd.f32 0.0, %v1545
      %1547 = vmatmul.f32.gmra.mxu0 %v968
      %v1548 = vpop.f32.mrf.mxu0
      %v1549 = vadd.f32 0.0, %v1548
      %1550 = vmatmul.f32.gmra.mxu0 %v970
      %v1551 = vpop.f32.mrf.mxu0
      %v1552 = vadd.f32 0.0, %v1551
      %1553 = vmatmul.f32.gmra.mxu0 %v972
      %v1554 = vpop.f32.mrf.mxu0
      %v1555 = vadd.f32 0.0, %v1554
      %1556 = vmatmul.f32.gmra.mxu0 %v974
      %v1557 = vpop.f32.mrf.mxu0
      %v1558 = vadd.f32 0.0, %v1557
      %1559 = vmatmul.f32.gmra.mxu0 %v976
      %v1560 = vpop.f32.mrf.mxu0
      %v1561 = vadd.f32 0.0, %v1560
      %1562 = vmatmul.f32.gmra.mxu0 %v1449
      %v1563 = vpop.f32.mrf.mxu0
      %v1564 = vadd.f32 0.0, %v1563
      %1565 = vmatmul.f32.gmra.mxu0 %v1451
      %v1566 = vpop.f32.mrf.mxu0
      %v1567 = vadd.f32 0.0, %v1566
      %1568 = vdwg.mxu0
      %v1569 = vadd.f32 %v1410, %v1474
      %v1570 = vadd.f32 %v1411, %v1477
      %v1571 = vadd.f32 %v1412, %v1480
      %v1572 = vadd.f32 %v1413, %v1483
      %v1573 = vadd.f32 %v1414, %v1486
      %v1574 = vadd.f32 %v1415, %v1489
      %v1575 = vadd.f32 %v1416, %v1492
      %v1576 = vadd.f32 %v1417, %v1495
      %v1577 = vadd.f32 %v1418, %v1498
      %v1578 = vadd.f32 %v1419, %v1501
      %v1579 = vadd.f32 %v1420, %v1504
      %v1580 = vadd.f32 %v1421, %v1507
      %v1581 = vadd.f32 %v1422, %v1510
      %v1582 = vadd.f32 %v1423, %v1513
      %v1583 = vadd.f32 %v1424, %v1516
      %v1584 = vadd.f32 %v1425, %v1519
      %v1585 = vadd.f32 %v1426, %v1522
      %v1586 = vadd.f32 %v1427, %v1525
      %v1587 = vadd.f32 %v1428, %v1528
      %v1588 = vadd.f32 %v1429, %v1531
      %v1589 = vadd.f32 %v1430, %v1534
      %v1590 = vadd.f32 %v1431, %v1537
      %v1591 = vadd.f32 %v1432, %v1540
      %v1592 = vadd.f32 %v1433, %v1543
      %v1593 = vadd.f32 %v1434, %v1546
      %v1594 = vadd.f32 %v1435, %v1549
      %v1595 = vadd.f32 %v1436, %v1552
      %v1596 = vadd.f32 %v1437, %v1555
      %v1597 = vadd.f32 %v1438, %v1558
      %v1598 = vadd.f32 %v1439, %v1561
      %v1599 = vadd.f32 %v1440, %v1564
      %v1600 = vadd.f32 %v1441, %v1567
      %s1601 = scalar_lea.vmem %s1, 24
      %v1602 = vld [vmem:[%s1601] sm:$0xf]
      %v1604 = vsel %vm469, %v334, 0
      %v1607 = vsel %vm469, %v335, 0
      %v1610 = vsel %vm534, %v1602, 0
      %1612 = vmatpush.msra.mxu0 0.0
      %1613 = vmatpush.msra.mxu0 0.0
      %1614 = vmatpush.msra.mxu0 0.0
      %1615 = vmatpush.msra.mxu0 0.0
      %1616 = vmatpush.msra.mxu0 0.0
      %1617 = vmatpush.msra.mxu0 0.0
      %1618 = vmatpush.msra.mxu0 0.0
      %1619 = vmatpush.msra.mxu0 0.0
      %1620 = vmatpush.msra.mxu0 0.0
      %1621 = vmatpush.msra.mxu0 0.0
      %1622 = vmatpush.msra.mxu0 0.0
      %1623 = vmatpush.msra.mxu0 0.0
      %1624 = vmatpush.msra.mxu0 0.0
      %1625 = vmatpush.msra.mxu0 0.0
      %1626 = vmatpush.msra.mxu0 0.0
      %1627 = vmatpush.msra.mxu0 %v1610
      %1628 = vmatmul.f32.gmra.mxu0 %v659
      %v1629 = vpop.f32.mrf.mxu0
      %v1630 = vadd.f32 0.0, %v1629
      %1631 = vmatmul.f32.gmra.mxu0 %v661
      %v1632 = vpop.f32.mrf.mxu0
      %v1633 = vadd.f32 0.0, %v1632
      %1634 = vmatmul.f32.gmra.mxu0 %v663
      %v1635 = vpop.f32.mrf.mxu0
      %v1636 = vadd.f32 0.0, %v1635
      %1637 = vmatmul.f32.gmra.mxu0 %v665
      %v1638 = vpop.f32.mrf.mxu0
      %v1639 = vadd.f32 0.0, %v1638
      %1640 = vmatmul.f32.gmra.mxu0 %v667
      %v1641 = vpop.f32.mrf.mxu0
      %v1642 = vadd.f32 0.0, %v1641
      %1643 = vmatmul.f32.gmra.mxu0 %v669
      %v1644 = vpop.f32.mrf.mxu0
      %v1645 = vadd.f32 0.0, %v1644
      %1646 = vmatmul.f32.gmra.mxu0 %v671
      %v1647 = vpop.f32.mrf.mxu0
      %v1648 = vadd.f32 0.0, %v1647
      %1649 = vmatmul.f32.gmra.mxu0 %v673
      %v1650 = vpop.f32.mrf.mxu0
      %v1651 = vadd.f32 0.0, %v1650
      %1652 = vmatmul.f32.gmra.mxu0 %v675
      %v1653 = vpop.f32.mrf.mxu0
      %v1654 = vadd.f32 0.0, %v1653
      %1655 = vmatmul.f32.gmra.mxu0 %v677
      %v1656 = vpop.f32.mrf.mxu0
      %v1657 = vadd.f32 0.0, %v1656
      %1658 = vmatmul.f32.gmra.mxu0 %v679
      %v1659 = vpop.f32.mrf.mxu0
      %v1660 = vadd.f32 0.0, %v1659
      %1661 = vmatmul.f32.gmra.mxu0 %v681
      %v1662 = vpop.f32.mrf.mxu0
      %v1663 = vadd.f32 0.0, %v1662
      %1664 = vmatmul.f32.gmra.mxu0 %v683
      %v1665 = vpop.f32.mrf.mxu0
      %v1666 = vadd.f32 0.0, %v1665
      %1667 = vmatmul.f32.gmra.mxu0 %v685
      %v1668 = vpop.f32.mrf.mxu0
      %v1669 = vadd.f32 0.0, %v1668
      %1670 = vmatmul.f32.gmra.mxu0 %v687
      %v1671 = vpop.f32.mrf.mxu0
      %v1672 = vadd.f32 0.0, %v1671
      %1673 = vmatmul.f32.gmra.mxu0 %v689
      %v1674 = vpop.f32.mrf.mxu0
      %v1675 = vadd.f32 0.0, %v1674
      %1676 = vmatmul.f32.gmra.mxu0 %v691
      %v1677 = vpop.f32.mrf.mxu0
      %v1678 = vadd.f32 0.0, %v1677
      %1679 = vmatmul.f32.gmra.mxu0 %v693
      %v1680 = vpop.f32.mrf.mxu0
      %v1681 = vadd.f32 0.0, %v1680
      %1682 = vmatmul.f32.gmra.mxu0 %v695
      %v1683 = vpop.f32.mrf.mxu0
      %v1684 = vadd.f32 0.0, %v1683
      %1685 = vmatmul.f32.gmra.mxu0 %v697
      %v1686 = vpop.f32.mrf.mxu0
      %v1687 = vadd.f32 0.0, %v1686
      %1688 = vmatmul.f32.gmra.mxu0 %v699
      %v1689 = vpop.f32.mrf.mxu0
      %v1690 = vadd.f32 0.0, %v1689
      %1691 = vmatmul.f32.gmra.mxu0 %v701
      %v1692 = vpop.f32.mrf.mxu0
      %v1693 = vadd.f32 0.0, %v1692
      %1694 = vmatmul.f32.gmra.mxu0 %v703
      %v1695 = vpop.f32.mrf.mxu0
      %v1696 = vadd.f32 0.0, %v1695
      %1697 = vmatmul.f32.gmra.mxu0 %v705
      %v1698 = vpop.f32.mrf.mxu0
      %v1699 = vadd.f32 0.0, %v1698
      %1700 = vmatmul.f32.gmra.mxu0 %v707
      %v1701 = vpop.f32.mrf.mxu0
      %v1702 = vadd.f32 0.0, %v1701
      %1703 = vmatmul.f32.gmra.mxu0 %v709
      %v1704 = vpop.f32.mrf.mxu0
      %v1705 = vadd.f32 0.0, %v1704
      %1706 = vmatmul.f32.gmra.mxu0 %v711
      %v1707 = vpop.f32.mrf.mxu0
      %v1708 = vadd.f32 0.0, %v1707
      %1709 = vmatmul.f32.gmra.mxu0 %v713
      %v1710 = vpop.f32.mrf.mxu0
      %v1711 = vadd.f32 0.0, %v1710
      %1712 = vmatmul.f32.gmra.mxu0 %v1129
      %v1713 = vpop.f32.mrf.mxu0
      %v1714 = vadd.f32 0.0, %v1713
      %1715 = vmatmul.f32.gmra.mxu0 %v1132
      %v1716 = vpop.f32.mrf.mxu0
      %v1717 = vadd.f32 0.0, %v1716
      %1718 = vmatmul.f32.gmra.mxu0 %v1604
      %v1719 = vpop.f32.mrf.mxu0
      %v1720 = vadd.f32 0.0, %v1719
      %1721 = vmatmul.f32.gmra.mxu0 %v1607
      %v1722 = vpop.f32.mrf.mxu0
      %v1723 = vadd.f32 0.0, %v1722
      %1724 = vdwg.mxu0
      %v1725 = vadd.f32 %v1569, %v1630
      %v1726 = vadd.f32 %v1570, %v1633
      %v1727 = vadd.f32 %v1571, %v1636
      %v1728 = vadd.f32 %v1572, %v1639
      %v1729 = vadd.f32 %v1573, %v1642
      %v1730 = vadd.f32 %v1574, %v1645
      %v1731 = vadd.f32 %v1575, %v1648
      %v1732 = vadd.f32 %v1576, %v1651
      %v1733 = vadd.f32 %v1577, %v1654
      %v1734 = vadd.f32 %v1578, %v1657
      %v1735 = vadd.f32 %v1579, %v1660
      %v1736 = vadd.f32 %v1580, %v1663
      %v1737 = vadd.f32 %v1581, %v1666
      %v1738 = vadd.f32 %v1582, %v1669
      %v1739 = vadd.f32 %v1583, %v1672
      %v1740 = vadd.f32 %v1584, %v1675
      %v1741 = vadd.f32 %v1585, %v1678
      %v1742 = vadd.f32 %v1586, %v1681
      %v1743 = vadd.f32 %v1587, %v1684
      %v1744 = vadd.f32 %v1588, %v1687
      %v1745 = vadd.f32 %v1589, %v1690
      %v1746 = vadd.f32 %v1590, %v1693
      %v1747 = vadd.f32 %v1591, %v1696
      %v1748 = vadd.f32 %v1592, %v1699
      %v1749 = vadd.f32 %v1593, %v1702
      %v1750 = vadd.f32 %v1594, %v1705
      %v1751 = vadd.f32 %v1595, %v1708
      %v1752 = vadd.f32 %v1596, %v1711
      %v1753 = vadd.f32 %v1597, %v1714
      %v1754 = vadd.f32 %v1598, %v1717
      %v1755 = vadd.f32 %v1599, %v1720
      %v1756 = vadd.f32 %v1600, %v1723
      %v1758 = vrot.slane %v334, 1
      %v1759 = vrot.slane %v335, 1
      %v1760 = vsel %vm386, %v1758, %v1759
      %v1761 = vrot.slane %v336, 1
      %v1762 = vsel %vm386, %v1759, %v1761
      %s1763 = scalar_lea.vmem %s1, 28
      %v1764 = vld [vmem:[%s1763] sm:$0xf]
      %v1765 = vsel %vm469, %v1760, 0
      %v1767 = vsel %vm469, %v1762, 0
      %v1770 = vsel %vm534, %v1764, 0
      %1772 = vmatpush.msra.mxu0 0.0
      %1773 = vmatpush.msra.mxu0 0.0
      %1774 = vmatpush.msra.mxu0 0.0
      %1775 = vmatpush.msra.mxu0 0.0
      %1776 = vmatpush.msra.mxu0 0.0
      %1777 = vmatpush.msra.mxu0 0.0
      %1778 = vmatpush.msra.mxu0 0.0
      %1779 = vmatpush.msra.mxu0 0.0
      %1780 = vmatpush.msra.mxu0 0.0
      %1781 = vmatpush.msra.mxu0 0.0
      %1782 = vmatpush.msra.mxu0 0.0
      %1783 = vmatpush.msra.mxu0 0.0
      %1784 = vmatpush.msra.mxu0 0.0
      %1785 = vmatpush.msra.mxu0 0.0
      %1786 = vmatpush.msra.mxu0 0.0
      %1787 = vmatpush.msra.mxu0 %v1770
      %1788 = vmatmul.f32.gmra.mxu0 %v478
      %v1789 = vpop.f32.mrf.mxu0
      %v1790 = vadd.f32 0.0, %v1789
      %1791 = vmatmul.f32.gmra.mxu0 %v480
      %v1792 = vpop.f32.mrf.mxu0
      %v1793 = vadd.f32 0.0, %v1792
      %1794 = vmatmul.f32.gmra.mxu0 %v482
      %v1795 = vpop.f32.mrf.mxu0
      %v1796 = vadd.f32 0.0, %v1795
      %1797 = vmatmul.f32.gmra.mxu0 %v484
      %v1798 = vpop.f32.mrf.mxu0
      %v1799 = vadd.f32 0.0, %v1798
      %1800 = vmatmul.f32.gmra.mxu0 %v486
      %v1801 = vpop.f32.mrf.mxu0
      %v1802 = vadd.f32 0.0, %v1801
      %1803 = vmatmul.f32.gmra.mxu0 %v488
      %v1804 = vpop.f32.mrf.mxu0
      %v1805 = vadd.f32 0.0, %v1804
      %1806 = vmatmul.f32.gmra.mxu0 %v490
      %v1807 = vpop.f32.mrf.mxu0
      %v1808 = vadd.f32 0.0, %v1807
      %1809 = vmatmul.f32.gmra.mxu0 %v492
      %v1810 = vpop.f32.mrf.mxu0
      %v1811 = vadd.f32 0.0, %v1810
      %1812 = vmatmul.f32.gmra.mxu0 %v494
      %v1813 = vpop.f32.mrf.mxu0
      %v1814 = vadd.f32 0.0, %v1813
      %1815 = vmatmul.f32.gmra.mxu0 %v496
      %v1816 = vpop.f32.mrf.mxu0
      %v1817 = vadd.f32 0.0, %v1816
      %1818 = vmatmul.f32.gmra.mxu0 %v498
      %v1819 = vpop.f32.mrf.mxu0
      %v1820 = vadd.f32 0.0, %v1819
      %1821 = vmatmul.f32.gmra.mxu0 %v500
      %v1822 = vpop.f32.mrf.mxu0
      %v1823 = vadd.f32 0.0, %v1822
      %1824 = vmatmul.f32.gmra.mxu0 %v502
      %v1825 = vpop.f32.mrf.mxu0
      %v1826 = vadd.f32 0.0, %v1825
      %1827 = vmatmul.f32.gmra.mxu0 %v504
      %v1828 = vpop.f32.mrf.mxu0
      %v1829 = vadd.f32 0.0, %v1828
      %1830 = vmatmul.f32.gmra.mxu0 %v506
      %v1831 = vpop.f32.mrf.mxu0
      %v1832 = vadd.f32 0.0, %v1831
      %1833 = vmatmul.f32.gmra.mxu0 %v508
      %v1834 = vpop.f32.mrf.mxu0
      %v1835 = vadd.f32 0.0, %v1834
      %1836 = vmatmul.f32.gmra.mxu0 %v510
      %v1837 = vpop.f32.mrf.mxu0
      %v1838 = vadd.f32 0.0, %v1837
      %1839 = vmatmul.f32.gmra.mxu0 %v512
      %v1840 = vpop.f32.mrf.mxu0
      %v1841 = vadd.f32 0.0, %v1840
      %1842 = vmatmul.f32.gmra.mxu0 %v514
      %v1843 = vpop.f32.mrf.mxu0
      %v1844 = vadd.f32 0.0, %v1843
      %1845 = vmatmul.f32.gmra.mxu0 %v516
      %v1846 = vpop.f32.mrf.mxu0
      %v1847 = vadd.f32 0.0, %v1846
      %1848 = vmatmul.f32.gmra.mxu0 %v518
      %v1849 = vpop.f32.mrf.mxu0
      %v1850 = vadd.f32 0.0, %v1849
      %1851 = vmatmul.f32.gmra.mxu0 %v520
      %v1852 = vpop.f32.mrf.mxu0
      %v1853 = vadd.f32 0.0, %v1852
      %1854 = vmatmul.f32.gmra.mxu0 %v522
      %v1855 = vpop.f32.mrf.mxu0
      %v1856 = vadd.f32 0.0, %v1855
      %1857 = vmatmul.f32.gmra.mxu0 %v524
      %v1858 = vpop.f32.mrf.mxu0
      %v1859 = vadd.f32 0.0, %v1858
      %1860 = vmatmul.f32.gmra.mxu0 %v526
      %v1861 = vpop.f32.mrf.mxu0
      %v1862 = vadd.f32 0.0, %v1861
      %1863 = vmatmul.f32.gmra.mxu0 %v528
      %v1864 = vpop.f32.mrf.mxu0
      %v1865 = vadd.f32 0.0, %v1864
      %1866 = vmatmul.f32.gmra.mxu0 %v530
      %v1867 = vpop.f32.mrf.mxu0
      %v1868 = vadd.f32 0.0, %v1867
      %1869 = vmatmul.f32.gmra.mxu0 %v532
      %v1870 = vpop.f32.mrf.mxu0
      %v1871 = vadd.f32 0.0, %v1870
      %1872 = vmatmul.f32.gmra.mxu0 %v1290
      %v1873 = vpop.f32.mrf.mxu0
      %v1874 = vadd.f32 0.0, %v1873
      %1875 = vmatmul.f32.gmra.mxu0 %v1292
      %v1876 = vpop.f32.mrf.mxu0
      %v1877 = vadd.f32 0.0, %v1876
      %1878 = vmatmul.f32.gmra.mxu0 %v1765
      %v1879 = vpop.f32.mrf.mxu0
      %v1880 = vadd.f32 0.0, %v1879
      %1881 = vmatmul.f32.gmra.mxu0 %v1767
      %v1882 = vpop.f32.mrf.mxu0
      %v1883 = vadd.f32 0.0, %v1882
      %1884 = vdwg.mxu0
      %v1885 = vadd.f32 %v1725, %v1790
      %v1886 = vadd.f32 %v1726, %v1793
      %v1887 = vadd.f32 %v1727, %v1796
      %v1888 = vadd.f32 %v1728, %v1799
      %v1889 = vadd.f32 %v1729, %v1802
      %v1890 = vadd.f32 %v1730, %v1805
      %v1891 = vadd.f32 %v1731, %v1808
      %v1892 = vadd.f32 %v1732, %v1811
      %v1893 = vadd.f32 %v1733, %v1814
      %v1894 = vadd.f32 %v1734, %v1817
      %v1895 = vadd.f32 %v1735, %v1820
      %v1896 = vadd.f32 %v1736, %v1823
      %v1897 = vadd.f32 %v1737, %v1826
      %v1898 = vadd.f32 %v1738, %v1829
      %v1899 = vadd.f32 %v1739, %v1832
      %v1900 = vadd.f32 %v1740, %v1835
      %v1901 = vadd.f32 %v1741, %v1838
      %v1902 = vadd.f32 %v1742, %v1841
      %v1903 = vadd.f32 %v1743, %v1844
      %v1904 = vadd.f32 %v1744, %v1847
      %v1905 = vadd.f32 %v1745, %v1850
      %v1906 = vadd.f32 %v1746, %v1853
      %v1907 = vadd.f32 %v1747, %v1856
      %v1908 = vadd.f32 %v1748, %v1859
      %v1909 = vadd.f32 %v1749, %v1862
      %v1910 = vadd.f32 %v1750, %v1865
      %v1911 = vadd.f32 %v1751, %v1868
      %v1912 = vadd.f32 %v1752, %v1871
      %v1913 = vadd.f32 %v1753, %v1874
      %v1914 = vadd.f32 %v1754, %v1877
      %v1915 = vadd.f32 %v1755, %v1880
      %v1916 = vadd.f32 %v1756, %v1883
      %v1917 = vrot.slane %v334, 2
      %v1918 = vrot.slane %v335, 2
      %v1919 = vsel %vm831, %v1917, %v1918
      %v1920 = vrot.slane %v336, 2
      %v1921 = vsel %vm831, %v1918, %v1920
      %s1922 = scalar_lea.vmem %s1, 32
      %v1923 = vld [vmem:[%s1922] sm:$0xf]
      %v1924 = vsel %vm469, %v1919, 0
      %v1926 = vsel %vm469, %v1921, 0
      %v1929 = vsel %vm534, %v1923, 0
      %1931 = vmatpush.msra.mxu0 0.0
      %1932 = vmatpush.msra.mxu0 0.0
      %1933 = vmatpush.msra.mxu0 0.0
      %1934 = vmatpush.msra.mxu0 0.0
      %1935 = vmatpush.msra.mxu0 0.0
      %1936 = vmatpush.msra.mxu0 0.0
      %1937 = vmatpush.msra.mxu0 0.0
      %1938 = vmatpush.msra.mxu0 0.0
      %1939 = vmatpush.msra.mxu0 0.0
      %1940 = vmatpush.msra.mxu0 0.0
      %1941 = vmatpush.msra.mxu0 0.0
      %1942 = vmatpush.msra.mxu0 0.0
      %1943 = vmatpush.msra.mxu0 0.0
      %1944 = vmatpush.msra.mxu0 0.0
      %1945 = vmatpush.msra.mxu0 0.0
      %1946 = vmatpush.msra.mxu0 %v1929
      %1947 = vmatmul.f32.gmra.mxu0 %v922
      %v1948 = vpop.f32.mrf.mxu0
      %v1949 = vadd.f32 0.0, %v1948
      %1950 = vmatmul.f32.gmra.mxu0 %v924
      %v1951 = vpop.f32.mrf.mxu0
      %v1952 = vadd.f32 0.0, %v1951
      %1953 = vmatmul.f32.gmra.mxu0 %v926
      %v1954 = vpop.f32.mrf.mxu0
      %v1955 = vadd.f32 0.0, %v1954
      %1956 = vmatmul.f32.gmra.mxu0 %v928
      %v1957 = vpop.f32.mrf.mxu0
      %v1958 = vadd.f32 0.0, %v1957
      %1959 = vmatmul.f32.gmra.mxu0 %v930
      %v1960 = vpop.f32.mrf.mxu0
      %v1961 = vadd.f32 0.0, %v1960
      %1962 = vmatmul.f32.gmra.mxu0 %v932
      %v1963 = vpop.f32.mrf.mxu0
      %v1964 = vadd.f32 0.0, %v1963
      %1965 = vmatmul.f32.gmra.mxu0 %v934
      %v1966 = vpop.f32.mrf.mxu0
      %v1967 = vadd.f32 0.0, %v1966
      %1968 = vmatmul.f32.gmra.mxu0 %v936
      %v1969 = vpop.f32.mrf.mxu0
      %v1970 = vadd.f32 0.0, %v1969
      %1971 = vmatmul.f32.gmra.mxu0 %v938
      %v1972 = vpop.f32.mrf.mxu0
      %v1973 = vadd.f32 0.0, %v1972
      %1974 = vmatmul.f32.gmra.mxu0 %v940
      %v1975 = vpop.f32.mrf.mxu0
      %v1976 = vadd.f32 0.0, %v1975
      %1977 = vmatmul.f32.gmra.mxu0 %v942
      %v1978 = vpop.f32.mrf.mxu0
      %v1979 = vadd.f32 0.0, %v1978
      %1980 = vmatmul.f32.gmra.mxu0 %v944
      %v1981 = vpop.f32.mrf.mxu0
      %v1982 = vadd.f32 0.0, %v1981
      %1983 = vmatmul.f32.gmra.mxu0 %v946
      %v1984 = vpop.f32.mrf.mxu0
      %v1985 = vadd.f32 0.0, %v1984
      %1986 = vmatmul.f32.gmra.mxu0 %v948
      %v1987 = vpop.f32.mrf.mxu0
      %v1988 = vadd.f32 0.0, %v1987
      %1989 = vmatmul.f32.gmra.mxu0 %v950
      %v1990 = vpop.f32.mrf.mxu0
      %v1991 = vadd.f32 0.0, %v1990
      %1992 = vmatmul.f32.gmra.mxu0 %v952
      %v1993 = vpop.f32.mrf.mxu0
      %v1994 = vadd.f32 0.0, %v1993
      %1995 = vmatmul.f32.gmra.mxu0 %v954
      %v1996 = vpop.f32.mrf.mxu0
      %v1997 = vadd.f32 0.0, %v1996
      %1998 = vmatmul.f32.gmra.mxu0 %v956
      %v1999 = vpop.f32.mrf.mxu0
      %v2000 = vadd.f32 0.0, %v1999
      %2001 = vmatmul.f32.gmra.mxu0 %v958
      %v2002 = vpop.f32.mrf.mxu0
      %v2003 = vadd.f32 0.0, %v2002
      %2004 = vmatmul.f32.gmra.mxu0 %v960
      %v2005 = vpop.f32.mrf.mxu0
      %v2006 = vadd.f32 0.0, %v2005
      %2007 = vmatmul.f32.gmra.mxu0 %v962
      %v2008 = vpop.f32.mrf.mxu0
      %v2009 = vadd.f32 0.0, %v2008
      %2010 = vmatmul.f32.gmra.mxu0 %v964
      %v2011 = vpop.f32.mrf.mxu0
      %v2012 = vadd.f32 0.0, %v2011
      %2013 = vmatmul.f32.gmra.mxu0 %v966
      %v2014 = vpop.f32.mrf.mxu0
      %v2015 = vadd.f32 0.0, %v2014
      %2016 = vmatmul.f32.gmra.mxu0 %v968
      %v2017 = vpop.f32.mrf.mxu0
      %v2018 = vadd.f32 0.0, %v2017
      %2019 = vmatmul.f32.gmra.mxu0 %v970
      %v2020 = vpop.f32.mrf.mxu0
      %v2021 = vadd.f32 0.0, %v2020
      %2022 = vmatmul.f32.gmra.mxu0 %v972
      %v2023 = vpop.f32.mrf.mxu0
      %v2024 = vadd.f32 0.0, %v2023
      %2025 = vmatmul.f32.gmra.mxu0 %v974
      %v2026 = vpop.f32.mrf.mxu0
      %v2027 = vadd.f32 0.0, %v2026
      %2028 = vmatmul.f32.gmra.mxu0 %v976
      %v2029 = vpop.f32.mrf.mxu0
      %v2030 = vadd.f32 0.0, %v2029
      %2031 = vmatmul.f32.gmra.mxu0 %v1449
      %v2032 = vpop.f32.mrf.mxu0
      %v2033 = vadd.f32 0.0, %v2032
      %2034 = vmatmul.f32.gmra.mxu0 %v1451
      %v2035 = vpop.f32.mrf.mxu0
      %v2036 = vadd.f32 0.0, %v2035
      %2037 = vmatmul.f32.gmra.mxu0 %v1924
      %v2038 = vpop.f32.mrf.mxu0
      %v2039 = vadd.f32 0.0, %v2038
      %2040 = vmatmul.f32.gmra.mxu0 %v1926
      %v2041 = vpop.f32.mrf.mxu0
      %v2042 = vadd.f32 0.0, %v2041
      %2043 = vdwg.mxu0
      %v2044 = vadd.f32 %v1885, %v1949
      %v2045 = vadd.f32 %v1886, %v1952
      %v2046 = vadd.f32 %v1887, %v1955
      %v2047 = vadd.f32 %v1888, %v1958
      %v2048 = vadd.f32 %v1889, %v1961
      %v2049 = vadd.f32 %v1890, %v1964
      %v2050 = vadd.f32 %v1891, %v1967
      %v2051 = vadd.f32 %v1892, %v1970
      %v2052 = vadd.f32 %v1893, %v1973
      %v2053 = vadd.f32 %v1894, %v1976
      %v2054 = vadd.f32 %v1895, %v1979
      %v2055 = vadd.f32 %v1896, %v1982
      %v2056 = vadd.f32 %v1897, %v1985
      %v2057 = vadd.f32 %v1898, %v1988
      %v2058 = vadd.f32 %v1899, %v1991
      %v2059 = vadd.f32 %v1900, %v1994
      %v2060 = vadd.f32 %v1901, %v1997
      %v2061 = vadd.f32 %v1902, %v2000
      %v2062 = vadd.f32 %v1903, %v2003
      %v2063 = vadd.f32 %v1904, %v2006
      %v2064 = vadd.f32 %v1905, %v2009
      %v2065 = vadd.f32 %v1906, %v2012
      %v2066 = vadd.f32 %v1907, %v2015
      %v2067 = vadd.f32 %v1908, %v2018
      %v2068 = vadd.f32 %v1909, %v2021
      %v2069 = vadd.f32 %v1910, %v2024
      %v2070 = vadd.f32 %v1911, %v2027
      %v2071 = vadd.f32 %v1912, %v2030
      %v2072 = vadd.f32 %v1913, %v2033
      %v2073 = vadd.f32 %v1914, %v2036
      %v2074 = vadd.f32 %v1915, %v2039
      %v2075 = vadd.f32 %v1916, %v2042
      %v2076 = vld [vmem:[%s2] sm:$0x1]
      %v2078 = vperm.slane %v2076, 0
      %v2080 = vmul.f32 %v2044, %v2078
      %v2081 = vmul.f32 %v2045, %v2078
      %v2082 = vmul.f32 %v2046, %v2078
      %v2083 = vmul.f32 %v2047, %v2078
      %v2084 = vmul.f32 %v2048, %v2078
      %v2085 = vmul.f32 %v2049, %v2078
      %v2086 = vmul.f32 %v2050, %v2078
      %v2087 = vmul.f32 %v2051, %v2078
      %v2088 = vmul.f32 %v2052, %v2078
      %v2089 = vmul.f32 %v2053, %v2078
      %v2090 = vmul.f32 %v2054, %v2078
      %v2091 = vmul.f32 %v2055, %v2078
      %v2092 = vmul.f32 %v2056, %v2078
      %v2093 = vmul.f32 %v2057, %v2078
      %v2094 = vmul.f32 %v2058, %v2078
      %v2095 = vmul.f32 %v2059, %v2078
      %v2096 = vmul.f32 %v2060, %v2078
      %v2097 = vmul.f32 %v2061, %v2078
      %v2098 = vmul.f32 %v2062, %v2078
      %v2099 = vmul.f32 %v2063, %v2078
      %v2100 = vmul.f32 %v2064, %v2078
      %v2101 = vmul.f32 %v2065, %v2078
      %v2102 = vmul.f32 %v2066, %v2078
      %v2103 = vmul.f32 %v2067, %v2078
      %v2104 = vmul.f32 %v2068, %v2078
      %v2105 = vmul.f32 %v2069, %v2078
      %v2106 = vmul.f32 %v2070, %v2078
      %v2107 = vmul.f32 %v2071, %v2078
      %v2108 = vmul.f32 %v2072, %v2078
      %v2109 = vmul.f32 %v2073, %v2078
      %v2110 = vmul.f32 %v2074, %v2078
      %v2111 = vmul.f32 %v2075, %v2078
      %v2112 = vld [vmem:[%s3] sm:$0x1]
      %v2114 = vperm.slane %v2112, 0
      %v2116 = vadd.f32 %v2080, %v2114
      %v2117 = vadd.f32 %v2081, %v2114
      %v2118 = vadd.f32 %v2082, %v2114
      %v2119 = vadd.f32 %v2083, %v2114
      %v2120 = vadd.f32 %v2084, %v2114
      %v2121 = vadd.f32 %v2085, %v2114
      %v2122 = vadd.f32 %v2086, %v2114
      %v2123 = vadd.f32 %v2087, %v2114
      %v2124 = vadd.f32 %v2088, %v2114
      %v2125 = vadd.f32 %v2089, %v2114
      %v2126 = vadd.f32 %v2090, %v2114
      %v2127 = vadd.f32 %v2091, %v2114
      %v2128 = vadd.f32 %v2092, %v2114
      %v2129 = vadd.f32 %v2093, %v2114
      %v2130 = vadd.f32 %v2094, %v2114
      %v2131 = vadd.f32 %v2095, %v2114
      %v2132 = vadd.f32 %v2096, %v2114
      %v2133 = vadd.f32 %v2097, %v2114
      %v2134 = vadd.f32 %v2098, %v2114
      %v2135 = vadd.f32 %v2099, %v2114
      %v2136 = vadd.f32 %v2100, %v2114
      %v2137 = vadd.f32 %v2101, %v2114
      %v2138 = vadd.f32 %v2102, %v2114
      %v2139 = vadd.f32 %v2103, %v2114
      %v2140 = vadd.f32 %v2104, %v2114
      %v2141 = vadd.f32 %v2105, %v2114
      %v2142 = vadd.f32 %v2106, %v2114
      %v2143 = vadd.f32 %v2107, %v2114
      %v2144 = vadd.f32 %v2108, %v2114
      %v2145 = vadd.f32 %v2109, %v2114
      %v2146 = vadd.f32 %v2110, %v2114
      %v2147 = vadd.f32 %v2111, %v2114
      %2148 = vxpose.xlu0.b32.start [1/16] %v2116, 128
      %2149 = vxpose.xlu0.b32.cont [2/16] %v2117, 128
      %2150 = vxpose.xlu0.b32.cont [3/16] %v2118, 128
      %2151 = vxpose.xlu0.b32.cont [4/16] %v2119, 128
      %2152 = vxpose.xlu0.b32.cont [5/16] %v2120, 128
      %2153 = vxpose.xlu0.b32.cont [6/16] %v2121, 128
      %2154 = vxpose.xlu0.b32.cont [7/16] %v2122, 128
      %2155 = vxpose.xlu0.b32.cont [8/16] %v2123, 128
      %2156 = vxpose.xlu0.b32.cont [9/16] %v2124, 128
      %2157 = vxpose.xlu0.b32.cont [10/16] %v2125, 128
      %2158 = vxpose.xlu0.b32.cont [11/16] %v2126, 128
      %2159 = vxpose.xlu0.b32.cont [12/16] %v2127, 128
      %2160 = vxpose.xlu0.b32.cont [13/16] %v2128, 128
      %2161 = vxpose.xlu0.b32.cont [14/16] %v2129, 128
      %2162 = vxpose.xlu0.b32.cont [15/16] %v2130, 128
      %2163 = vxpose.xlu0.b32.end [16/16] %v2131, 128
      %v2164 = vpop.trf.xlu0
      %v2165 = vpop.trf.xlu0
      %v2166 = vpop.trf.xlu0
      %v2167 = vpop.trf.xlu0
      %v2168 = vpop.trf.xlu0
      %v2169 = vpop.trf.xlu0
      %v2170 = vpop.trf.xlu0
      %v2171 = vpop.trf.xlu0
      %v2172 = vpop.trf.xlu0
      %v2173 = vpop.trf.xlu0
      %v2174 = vpop.trf.xlu0
      %v2175 = vpop.trf.xlu0
      %v2176 = vpop.trf.xlu0
      %v2177 = vpop.trf.xlu0
      %v2178 = vpop.trf.xlu0
      %v2179 = vpop.trf.xlu0
      %2180 = vxpose.xlu0.b32.start [1/16] %v2132, 128
      %2181 = vxpose.xlu0.b32.cont [2/16] %v2133, 128
      %2182 = vxpose.xlu0.b32.cont [3/16] %v2134, 128
      %2183 = vxpose.xlu0.b32.cont [4/16] %v2135, 128
      %2184 = vxpose.xlu0.b32.cont [5/16] %v2136, 128
      %2185 = vxpose.xlu0.b32.cont [6/16] %v2137, 128
      %2186 = vxpose.xlu0.b32.cont [7/16] %v2138, 128
      %2187 = vxpose.xlu0.b32.cont [8/16] %v2139, 128
      %2188 = vxpose.xlu0.b32.cont [9/16] %v2140, 128
      %2189 = vxpose.xlu0.b32.cont [10/16] %v2141, 128
      %2190 = vxpose.xlu0.b32.cont [11/16] %v2142, 128
      %2191 = vxpose.xlu0.b32.cont [12/16] %v2143, 128
      %2192 = vxpose.xlu0.b32.cont [13/16] %v2144, 128
      %2193 = vxpose.xlu0.b32.cont [14/16] %v2145, 128
      %2194 = vxpose.xlu0.b32.cont [15/16] %v2146, 128
      %2195 = vxpose.xlu0.b32.end [16/16] %v2147, 128
      %v2196 = vpop.trf.xlu0
      %v2197 = vpop.trf.xlu0
      %v2198 = vpop.trf.xlu0
      %v2199 = vpop.trf.xlu0
      %v2200 = vpop.trf.xlu0
      %v2201 = vpop.trf.xlu0
      %v2202 = vpop.trf.xlu0
      %v2203 = vpop.trf.xlu0
      %v2204 = vpop.trf.xlu0
      %v2205 = vpop.trf.xlu0
      %v2206 = vpop.trf.xlu0
      %v2207 = vpop.trf.xlu0
      %v2208 = vpop.trf.xlu0
      %v2209 = vpop.trf.xlu0
      %v2210 = vpop.trf.xlu0
      %v2211 = vpop.trf.xlu0
      %2212 = vst [vmem:[%s224] sm:$0xff] %v2164
      %2213 = vst [vmem:[%s224 + $0x8] sm:$0xff] %v2196
      %s2214 = smul.u32 2, %s20
      %p2215 = scmp.lt.s32.totalorder %s19, 1
      %s2216 = scalar_select %p2215, %s19, 1
      %p2217 = scmp.lt.s32.totalorder %s2214, 1
      %s2218 = scalar_select %p2217, %s2214, 1
      %s2219 = smul.addr %s2216, 2
      %s2220 = sadd.s32 %s2218, %s2219
      %s2221 = smul.addr %s2220, 8
      %s2222 = scalar_lea.vmem %s4, %s2221
      // Predicated region
      $region37: #{relu_conv_bn.3} parent=35 // pred_check
        %p2223 = pneg %p136
      $region38: #{relu_conv_bn.3} parent=35 // pred_check_branch
        %2225 = sbr.rel (%p2223) target = $region40
      $region39: #{relu_conv_bn.3} parent=35 // pred_region
        %s2226 = smul.u32 2, %s20
      $region40: #{relu_conv_bn.3} parent=35 // pred_fallthru
        _
    $region36: #{relu_conv_bn.3} parent=5 // pred_fallthru
      _
    %p2227 = scmp.le.s32.totalorder 2, %s10
    // Predicated region
    $region41: #{relu_conv_bn.3} parent=5 // pred_check
      %p2228 = pneg %p2227
    $region42: #{relu_conv_bn.3} parent=5 // pred_check_branch
      %2230 = sbr.rel (%p2228) target = $region44
    $region43: #{relu_conv_bn.3} parent=5 // pred_region
      %s2231 = ssub.s32 %s10, 2
      // Predicated region
      $region45: #{relu_conv_bn.3} parent=43 // pred_check
        %p2232 = pneg %p142
      $region46: #{relu_conv_bn.3} parent=43 // pred_check_branch
        %2234 = sbr.rel (%p2232) target = $region48
      $region47: #{relu_conv_bn.3} parent=43 // pred_region
        %s2235 = smul.u32 2, %s22
        %p2236 = scmp.lt.s32.totalorder %s21, 1
        %s2237 = scalar_select %p2236, %s21, 1
        %p2238 = scmp.lt.s32.totalorder %s2235, 1
        %s2239 = scalar_select %p2238, %s2235, 1
        %s2240 = smul.addr %s2237, 2
        %s2241 = sadd.s32 %s2239, %s2240
        %s2242 = smul.addr %s2241, 8
        %s2243 = scalar_lea.vmem %s4, %s2242
      $region48: #{relu_conv_bn.3} parent=43 // pred_fallthru
        _
    $region44: #{relu_conv_bn.3} parent=5 // pred_fallthru
      _
  $region6: #{relu_conv_bn.3} parent=0 // loop_footer
    %s14 = sadd.s32 1, %s10
  $region7: #{relu_conv_bn.3} parent=0 // loop_footer_branch
    %9 = sbr.rel target = $region3
  $region8: #{relu_conv_bn.3} parent=0 // loop_exit
    _

</llo_original>
